<compile_context>
chip_gen: v6e
topology: v6e:2x2x1
jax: 0.10.0
libtpu: 0.0.40
codegen_flags: <defaults>
</compile_context>

<pallas_src>
import functools

import jax
import jax.numpy as jnp
from jax import lax
from jax.experimental import pallas as pl
from jax.experimental.pallas import tpu as pltpu


def attention_kernel(x_ref, wqkv_ref, bqkv_ref, wproj_ref, bproj_ref, o_ref, kv_ref,
                     *, n_heads, head_dim, q_tile, n_real, scale):
    """One grid step = (one sample, one tile of query rows).

    x_ref:     (N_pad, D)   bf16 activations (full sample; K/V need every token)
    wqkv_ref:  (D, 3D)      bf16
    bqkv_ref:  (1, 3D)      f32
    wproj_ref: (D, D)       bf16
    bproj_ref: (1, D)       f32
    o_ref:     (tq, D)      output rows for this query tile
    kv_ref:    (N_pad, 2D)  bf16 VMEM scratch: K | V, cached across query tiles
    """
    D = n_heads * head_dim
    qi = pl.program_id(1)
    n_pad = x_ref.shape[0]

    # K/V projection only once per sample: qi is the innermost "arbitrary" grid axis, so
    # the scratch written at qi == 0 is reused by every subsequent query tile of this b.
    @pl.when(qi == 0)
    def _():
        kv = lax.dot_general(x_ref[...], wqkv_ref[:, D:3 * D],
                             (((1,), (0,)), ((), ())),
                             preferred_element_type=jnp.float32)       # (N_pad, 2D)
        kv_ref[...] = (kv + bqkv_ref[:, D:3 * D]).astype(jnp.bfloat16)

    # Q projection for this query tile only (x is already bf16 from the wrapper).
    q_start = pl.multiple_of(qi * q_tile, q_tile)
    x_q = x_ref[pl.ds(q_start, q_tile), :]                             # (tq, D) bf16
    q = lax.dot_general(x_q, wqkv_ref[:, 0:D],
                        (((1,), (0,)), ((), ())),
                        preferred_element_type=jnp.float32)
    q = (q + bqkv_ref[:, 0:D]) * scale                                 # (tq, D) f32, pre-scaled
    q16 = q.astype(jnp.bfloat16)

    kv16 = kv_ref[...]                                                 # (N_pad, 2D) bf16
    k16 = kv16[:, 0:D]
    v16 = kv16[:, D:2 * D]

    # Mask padded key tokens (only materialized when the wrapper actually padded N).
    if n_pad != n_real:
        key_valid = lax.broadcasted_iota(jnp.int32, (1, n_pad), 1) < n_real
        key_bias = jnp.where(key_valid, 0.0, -1e30).astype(jnp.float32)
        key_bias = jnp.broadcast_to(key_bias, (q_tile, n_pad))         # hoisted once
    else:
        key_bias = None

    # Per-head attention; head outputs gathered into one (tq, D) bf16 slab so the output
    # projection is a single full-K matmul after the loop.
    heads = []
    for h in range(n_heads):
        lo = h * head_dim
        q_h = q16[:, lo:lo + head_dim]                                 # (tq, hd)
        k_h = k16[:, lo:lo + head_dim]                                 # (N_pad, hd)
        v_h = v16[:, lo:lo + head_dim]                                 # (N_pad, hd)

        # scores = (q * scale) @ k^T -- contraction on last dims, no transpose materialized.
        s = lax.dot_general(q_h, k_h, (((1,), (1,)), ((), ())),
                            preferred_element_type=jnp.float32)        # (tq, N_pad)
        if key_bias is not None:
            s = s + key_bias

        # Numerically stable softmax along keys (f32 math, EUP reciprocal).
        m = jnp.max(s, axis=-1, keepdims=True)
        e = jnp.exp(s - m)
        p = e * pl.reciprocal(jnp.sum(e, axis=-1, keepdims=True), approx=True)

        wa_h = lax.dot_general(p.astype(jnp.bfloat16), v_h,
                               (((1,), (0,)), ((), ())),
                               preferred_element_type=jnp.float32)     # (tq, hd)
        heads.append(wa_h.astype(jnp.bfloat16))

    wa = jnp.concatenate(heads, axis=-1)                               # (tq, D) bf16
    out = lax.dot_general(wa, wproj_ref[...],
                          (((1,), (0,)), ((), ())),
                          preferred_element_type=jnp.float32)          # (tq, D) f32

    # Single full-width (lane-dense) store.
    o_ref[...] = (out + bproj_ref[...]).astype(o_ref.dtype)


def attention_inf21(x, w_qkv, b_qkv, w_proj, b_proj, *, n_heads):
    """x: (B, N, D). w_qkv: (D, 3D), b_qkv: (3D,), w_proj: (D, D), b_proj: (D,)
    (weights stored (in, out), i.e. transposed vs. nn.Linear.weight).
    Dropout probabilities are 0 in the module, so dropout is the identity."""
    B, N, D = x.shape
    assert D % n_heads == 0
    head_dim = D // n_heads
    scale = float(head_dim) ** -0.5

    # Per-generation tuning: VMEM capacity drives the query tile and the VMEM budget.
    try:
        vmem_cap = int(pltpu.get_tpu_info().vmem_capacity_bytes)
    except Exception:
        vmem_cap = 64 * 1024 * 1024                    # conservative (v7x-sized) fallback
    if vmem_cap >= 100 * 1024 * 1024:                  # v5e / v6e: 128 MiB VMEM
        q_target, vmem_limit = 256, 100 * 1024 * 1024
    else:                                              # v7x: 64 MiB physical -> leave headroom
        q_target, vmem_limit = 128, 48 * 1024 * 1024

    # Pad the token axis so query tiling never degenerates to one giant step per sample.
    def _round_up(v, m):
        return -(-v // m) * m

    if N > q_target:
        n_pad, q_tile = _round_up(N, q_target), q_target
    else:
        n_pad = _round_up(N, 8)
        q_tile = n_pad
    num_q_tiles = n_pad // q_tile

    # bf16 activations/weights on the wire (halves DMA bytes); biases stay f32.
    x16 = x.astype(jnp.bfloat16)
    if n_pad != N:
        x16 = jnp.pad(x16, ((0, 0), (0, n_pad - N), (0, 0)))
    w_qkv16 = w_qkv.astype(jnp.bfloat16)
    w_proj16 = w_proj.astype(jnp.bfloat16)
    b_qkv2 = b_qkv.reshape(1, 3 * D).astype(jnp.float32)
    b_proj2 = b_proj.reshape(1, D).astype(jnp.float32)

    kernel = functools.partial(attention_kernel, n_heads=n_heads, head_dim=head_dim,
                               q_tile=q_tile, n_real=N, scale=scale)

    out_itemsize = jnp.dtype(x.dtype).itemsize
    cost = pl.CostEstimate(
        flops=int(8 * B * n_pad * D * D + 4 * B * n_pad * n_pad * D),
        transcendentals=int(B * n_heads * n_pad * n_pad),
        bytes_accessed=int(x16.size * 2 + B * n_pad * D * out_itemsize
                           + (w_qkv16.size + w_proj16.size) * 2
                           + (b_qkv2.size + b_proj2.size) * 4),
    )

    def _build(single_buffer_weights):
        def w_spec(shape):
            kwargs = {"pipeline_mode": pl.Buffered(1)} if single_buffer_weights else {}
            return pl.BlockSpec(shape, lambda b, qi: (0,) * len(shape), **kwargs)

        grid_spec = pltpu.PrefetchScalarGridSpec(
            num_scalar_prefetch=0,
            grid=(B, num_q_tiles),
            in_specs=[
                # Full (padded) sample of activations; block index only changes with b,
                # so Pallas DMAs x once per sample even though every qi step sees it.
                pl.BlockSpec((None, n_pad, D), lambda b, qi: (b, 0, 0)),
                # Grid-invariant weights / biases.
                w_spec((D, 3 * D)),
                w_spec((1, 3 * D)),
                w_spec((D, D)),
                w_spec((1, D)),
            ],
            out_specs=pl.BlockSpec((None, q_tile, D), lambda b, qi: (b, qi, 0)),
            # K|V cache for the current sample, reused across its query tiles.
            scratch_shapes=[pltpu.VMEM((n_pad, 2 * D), jnp.bfloat16)],
        )
        return pl.pallas_call(
            kernel,
            out_shape=jax.ShapeDtypeStruct((B, n_pad, D), x.dtype),
            grid_spec=grid_spec,
            compiler_params=pltpu.CompilerParams(
                # b parallel (megacore sharding), qi sequential so the K/V scratch is valid.
                dimension_semantics=("parallel", "arbitrary"),
                vmem_limit_bytes=vmem_limit,
            ),
            cost_estimate=cost,
        )

    args = (x16, w_qkv16, b_qkv2, w_proj16, b_proj2)
    try:
        # Preferred: single-buffered grid-invariant weights (halves their VMEM footprint).
        out = _build(True)(*args)
    except Exception:
        # Fallback for JAX versions where pipeline_mode=pl.Buffered(1) is not supported.
        out = _build(False)(*args)

    return out[:, :N, :] if n_pad != N else out


def attention_inf21_ref(x, w_qkv, b_qkv, w_proj, b_proj, *, n_heads):
    """Pure-JAX f32 reference mirroring the PyTorch forward (dropout p=0)."""
    B, N, D = x.shape
    hd = D // n_heads
    scale = float(hd) ** -0.5
    qkv = x @ w_qkv + b_qkv                                   # (B, N, 3D)
    qkv = qkv.reshape(B, N, 3, n_heads, hd)
    qkv = jnp.transpose(qkv, (2, 0, 3, 1, 4))                 # (3, B, H, N, hd)
    q, k, v = qkv[0], qkv[1], qkv[2]
    dp = jnp.einsum('bhnd,bhmd->bhnm', q, k) * scale
    attn = jax.nn.softmax(dp, axis=-1)
    wa = jnp.einsum('bhnm,bhmd->bhnd', attn, v)               # (B, H, N, hd)
    wa = jnp.transpose(wa, (0, 2, 1, 3)).reshape(B, N, D)
    return wa @ w_proj + b_proj


if __name__ == "__main__":
    B, N, D, H = 2, 8, 32, 8
    key = jax.random.PRNGKey(0)
    kx, k1, k2, k3, k4 = jax.random.split(key, 5)

    x = jax.random.normal(kx, (B, N, D), dtype=jnp.float32)
    # Deterministic parameter init (shapes follow nn.Linear(dim, 3*dim) etc.,
    # stored transposed as (in, out)).
    w_qkv = jax.random.normal(k1, (D, 3 * D), dtype=jnp.float32) * 0.02
    b_qkv = jax.random.normal(k2, (3 * D,), dtype=jnp.float32) * 0.02
    w_proj = jax.random.normal(k3, (D, D), dtype=jnp.float32) * 0.02
    b_proj = jax.random.normal(k4, (D,), dtype=jnp.float32) * 0.02

    out = attention_inf21(x, w_qkv, b_qkv, w_proj, b_proj, n_heads=H)
    out = jax.block_until_ready(out)

    ref = attention_inf21_ref(x, w_qkv, b_qkv, w_proj, b_proj, n_heads=H)
    assert out.shape == (B, N, D)
    # bf16 MXU operands (f32 accumulation) + approx reciprocal -> relaxed tolerance.
    assert jnp.allclose(out, ref, atol=2e-2, rtol=2e-2), "mismatch vs reference"

    print("KERNEL_OK")
</pallas_src>

<mosaic_0001>
module attributes {stable_mosaic.version = 11 : i64} {
  func.func @attention_kernel(%arg0: i32, %arg1: i32, %arg2: memref<1x8x32xbf16, #tpu.memory_space<vmem>>, %arg3: memref<32x96xbf16, #tpu.memory_space<vmem>>, %arg4: memref<1x96xf32, #tpu.memory_space<vmem>>, %arg5: memref<32x32xbf16, #tpu.memory_space<vmem>>, %arg6: memref<1x32xf32, #tpu.memory_space<vmem>>, %arg7: memref<1x8x32xf32, #tpu.memory_space<vmem>>, %arg8: memref<8x64xbf16, #tpu.memory_space<vmem>>) attributes {dimension_semantics = [#tpu.dimension_semantics<parallel>, #tpu.dimension_semantics<arbitrary>], iteration_bounds = array<i64: 2, 1>, scalar_prefetch = 0 : i64, scratch_operands = 1 : i64, tpu.core_type = #tpu.core_type<tc>, window_params = [{transform_indices = @transform_0, window_bounds = array<i64: 1, 8, 32>}, {pipeline_mode = #tpu.pipeline_mode<synchronous>, transform_indices = @transform_1, window_bounds = array<i64: 32, 96>}, {pipeline_mode = #tpu.pipeline_mode<synchronous>, transform_indices = @transform_2, window_bounds = array<i64: 1, 96>}, {pipeline_mode = #tpu.pipeline_mode<synchronous>, transform_indices = @transform_3, window_bounds = array<i64: 32, 32>}, {pipeline_mode = #tpu.pipeline_mode<synchronous>, transform_indices = @transform_4, window_bounds = array<i64: 1, 32>}, {transform_indices = @transform_5, window_bounds = array<i64: 1, 8, 32>}]} {
    %c0_i32 = arith.constant 0 : i32
    %0 = arith.cmpi eq, %arg1, %c0_i32 : i32
    %1 = arith.extui %0 : i1 to i32
    %c0_i32_0 = arith.constant 0 : i32
    %2 = arith.cmpi ne, %1, %c0_i32_0 : i32
    scf.if %2 {
      %c0_49 = arith.constant 0 : index
      %c0_50 = arith.constant 0 : index
      %c0_51 = arith.constant 0 : index
      %164 = vector.load %arg2[%c0_49, %c0_50, %c0_51] : memref<1x8x32xbf16, #tpu.memory_space<vmem>>, vector<1x8x32xbf16>
      %165 = vector.shape_cast %164 : vector<1x8x32xbf16> to vector<8x32xbf16>
      %c0_52 = arith.constant 0 : index
      %c32 = arith.constant 32 : index
      %166 = vector.load %arg3[%c0_52, %c32] : memref<32x96xbf16, #tpu.memory_space<vmem>>, vector<32x64xbf16>
      %cst_53 = arith.constant dense<0.000000e+00> : vector<8x64xf32>
      %167 = tpu.matmul %165, %166, %cst_53 {dimension_numbers = #tpu.dot_dimension_numbers<[1], [0], [0], [1], [0, 0, 1, 1], [], []>} : vector<8x32xbf16>, vector<32x64xbf16>, vector<8x64xf32> -> vector<8x64xf32>
      %c0_54 = arith.constant 0 : index
      %c32_55 = arith.constant 32 : index
      %168 = vector.load %arg4[%c0_54, %c32_55] : memref<1x96xf32, #tpu.memory_space<vmem>>, vector<1x64xf32>
      %169 = vector.broadcast %168 : vector<1x64xf32> to vector<8x64xf32>
      %170 = arith.addf %167, %169 : vector<8x64xf32>
      %171 = arith.truncf %170 : vector<8x64xf32> to vector<8x64xbf16>
      %c0_56 = arith.constant 0 : index
      %c0_57 = arith.constant 0 : index
      %172 = vector.load %arg8[%c0_56, %c0_57] : memref<8x64xbf16, #tpu.memory_space<vmem>>, vector<8x64xbf16>
      tpu.vector_store %arg8[%c0_56, %c0_57], %171 {strides = array<i32>} : memref<8x64xbf16, #tpu.memory_space<vmem>>, vector<8x64xbf16>,
    } else {
    }
    %c8_i32 = arith.constant 8 : i32
    %3 = arith.muli %arg1, %c8_i32 : i32
    %4 = tpu.assume_multiple %3, 8 : i32
    %c0 = arith.constant 0 : index
    %5 = arith.index_cast %4 : i32 to index
    %c0_1 = arith.constant 0 : index
    %6 = vector.load %arg2[%c0, %5, %c0_1] : memref<1x8x32xbf16, #tpu.memory_space<vmem>>, vector<1x8x32xbf16>
    %7 = vector.shape_cast %6 : vector<1x8x32xbf16> to vector<8x32xbf16>
    %c0_2 = arith.constant 0 : index
    %c0_3 = arith.constant 0 : index
    %8 = vector.load %arg3[%c0_2, %c0_3] : memref<32x96xbf16, #tpu.memory_space<vmem>>, vector<32x32xbf16>
    %cst = arith.constant dense<0.000000e+00> : vector<8x32xf32>
    %9 = tpu.matmul %7, %8, %cst {dimension_numbers = #tpu.dot_dimension_numbers<[1], [0], [0], [1], [0, 0, 1, 1], [], []>} : vector<8x32xbf16>, vector<32x32xbf16>, vector<8x32xf32> -> vector<8x32xf32>
    %c0_4 = arith.constant 0 : index
    %c0_5 = arith.constant 0 : index
    %10 = vector.load %arg4[%c0_4, %c0_5] : memref<1x96xf32, #tpu.memory_space<vmem>>, vector<1x32xf32>
    %11 = vector.broadcast %10 : vector<1x32xf32> to vector<8x32xf32>
    %12 = arith.addf %9, %11 : vector<8x32xf32>
    %cst_6 = arith.constant 5.000000e-01 : f32
    %13 = vector.broadcast %cst_6 : f32 to vector<8x32xf32>
    %14 = arith.mulf %12, %13 : vector<8x32xf32>
    %15 = arith.truncf %14 : vector<8x32xf32> to vector<8x32xbf16>
    %c0_7 = arith.constant 0 : index
    %c0_8 = arith.constant 0 : index
    %16 = vector.load %arg8[%c0_7, %c0_8] : memref<8x64xbf16, #tpu.memory_space<vmem>>, vector<8x64xbf16>
    %17 = vector.extract_strided_slice %16 {offsets = [0, 0], sizes = [8, 32], strides = [1, 1]} : vector<8x64xbf16> to vector<8x32xbf16>
    %18 = vector.extract_strided_slice %16 {offsets = [0, 32], sizes = [8, 32], strides = [1, 1]} : vector<8x64xbf16> to vector<8x32xbf16>
    %19 = vector.extract_strided_slice %15 {offsets = [0, 0], sizes = [8, 4], strides = [1, 1]} : vector<8x32xbf16> to vector<8x4xbf16>
    %20 = vector.extract_strided_slice %17 {offsets = [0, 0], sizes = [8, 4], strides = [1, 1]} : vector<8x32xbf16> to vector<8x4xbf16>
    %21 = vector.extract_strided_slice %18 {offsets = [0, 0], sizes = [8, 4], strides = [1, 1]} : vector<8x32xbf16> to vector<8x4xbf16>
    %cst_9 = arith.constant dense<0.000000e+00> : vector<8x8xf32>
    %22 = tpu.matmul %19, %20, %cst_9 {dimension_numbers = #tpu.dot_dimension_numbers<[1], [1], [0], [0], [0, 0, 1, 0], [], []>} : vector<8x4xbf16>, vector<8x4xbf16>, vector<8x8xf32> -> vector<8x8xf32>
    %cst_10 = arith.constant dense<0xFF800000> : vector<8xf32>
    %23 = vector.multi_reduction <maximumf>, %22, %cst_10 [1] : vector<8x8xf32> to vector<8xf32>
    %24 = vector.shape_cast %23 : vector<8xf32> to vector<8x1xf32>
    %25 = vector.broadcast %24 : vector<8x1xf32> to vector<8x8xf32>
    %26 = arith.subf %22, %25 : vector<8x8xf32>
    %27 = math.exp %26 : vector<8x8xf32>
    %cst_11 = arith.constant dense<0.000000e+00> : vector<8xf32>
    %28 = vector.multi_reduction <add>, %27, %cst_11 [1] : vector<8x8xf32> to vector<8xf32>
    %29 = vector.shape_cast %28 : vector<8xf32> to vector<8x1xf32>
    %30 = tpu.reciprocal %29 {approx = true} : vector<8x1xf32> -> vector<8x1xf32>
    %31 = vector.broadcast %30 : vector<8x1xf32> to vector<8x8xf32>
    %32 = arith.mulf %27, %31 : vector<8x8xf32>
    %33 = arith.truncf %32 : vector<8x8xf32> to vector<8x8xbf16>
    %cst_12 = arith.constant dense<0.000000e+00> : vector<8x4xf32>
    %34 = tpu.matmul %33, %21, %cst_12 {dimension_numbers = #tpu.dot_dimension_numbers<[1], [0], [0], [1], [0, 0, 1, 1], [], []>} : vector<8x8xbf16>, vector<8x4xbf16>, vector<8x4xf32> -> vector<8x4xf32>
    %35 = arith.truncf %34 : vector<8x4xf32> to vector<8x4xbf16>
    %36 = vector.extract_strided_slice %15 {offsets = [0, 4], sizes = [8, 4], strides = [1, 1]} : vector<8x32xbf16> to vector<8x4xbf16>
    %37 = vector.extract_strided_slice %17 {offsets = [0, 4], sizes = [8, 4], strides = [1, 1]} : vector<8x32xbf16> to vector<8x4xbf16>
    %38 = vector.extract_strided_slice %18 {offsets = [0, 4], sizes = [8, 4], strides = [1, 1]} : vector<8x32xbf16> to vector<8x4xbf16>
    %cst_13 = arith.constant dense<0.000000e+00> : vector<8x8xf32>
    %39 = tpu.matmul %36, %37, %cst_13 {dimension_numbers = #tpu.dot_dimension_numbers<[1], [1], [0], [0], [0, 0, 1, 0], [], []>} : vector<8x4xbf16>, vector<8x4xbf16>, vector<8x8xf32> -> vector<8x8xf32>
    %cst_14 = arith.constant dense<0xFF800000> : vector<8xf32>
    %40 = vector.multi_reduction <maximumf>, %39, %cst_14 [1] : vector<8x8xf32> to vector<8xf32>
    %41 = vector.shape_cast %40 : vector<8xf32> to vector<8x1xf32>
    %42 = vector.broadcast %41 : vector<8x1xf32> to vector<8x8xf32>
    %43 = arith.subf %39, %42 : vector<8x8xf32>
    %44 = math.exp %43 : vector<8x8xf32>
    %cst_15 = arith.constant dense<0.000000e+00> : vector<8xf32>
    %45 = vector.multi_reduction <add>, %44, %cst_15 [1] : vector<8x8xf32> to vector<8xf32>
    %46 = vector.shape_cast %45 : vector<8xf32> to vector<8x1xf32>
    %47 = tpu.reciprocal %46 {approx = true} : vector<8x1xf32> -> vector<8x1xf32>
    %48 = vector.broadcast %47 : vector<8x1xf32> to vector<8x8xf32>
    %49 = arith.mulf %44, %48 : vector<8x8xf32>
    %50 = arith.truncf %49 : vector<8x8xf32> to vector<8x8xbf16>
    %cst_16 = arith.constant dense<0.000000e+00> : vector<8x4xf32>
    %51 = tpu.matmul %50, %38, %cst_16 {dimension_numbers = #tpu.dot_dimension_numbers<[1], [0], [0], [1], [0, 0, 1, 1], [], []>} : vector<8x8xbf16>, vector<8x4xbf16>, vector<8x4xf32> -> vector<8x4xf32>
    %52 = arith.truncf %51 : vector<8x4xf32> to vector<8x4xbf16>
    %53 = vector.extract_strided_slice %15 {offsets = [0, 8], sizes = [8, 4], strides = [1, 1]} : vector<8x32xbf16> to vector<8x4xbf16>
    %54 = vector.extract_strided_slice %17 {offsets = [0, 8], sizes = [8, 4], strides = [1, 1]} : vector<8x32xbf16> to vector<8x4xbf16>
    %55 = vector.extract_strided_slice %18 {offsets = [0, 8], sizes = [8, 4], strides = [1, 1]} : vector<8x32xbf16> to vector<8x4xbf16>
    %cst_17 = arith.constant dense<0.000000e+00> : vector<8x8xf32>
    %56 = tpu.matmul %53, %54, %cst_17 {dimension_numbers = #tpu.dot_dimension_numbers<[1], [1], [0], [0], [0, 0, 1, 0], [], []>} : vector<8x4xbf16>, vector<8x4xbf16>, vector<8x8xf32> -> vector<8x8xf32>
    %cst_18 = arith.constant dense<0xFF800000> : vector<8xf32>
    %57 = vector.multi_reduction <maximumf>, %56, %cst_18 [1] : vector<8x8xf32> to vector<8xf32>
    %58 = vector.shape_cast %57 : vector<8xf32> to vector<8x1xf32>
    %59 = vector.broadcast %58 : vector<8x1xf32> to vector<8x8xf32>
    %60 = arith.subf %56, %59 : vector<8x8xf32>
    %61 = math.exp %60 : vector<8x8xf32>
    %cst_19 = arith.constant dense<0.000000e+00> : vector<8xf32>
    %62 = vector.multi_reduction <add>, %61, %cst_19 [1] : vector<8x8xf32> to vector<8xf32>
    %63 = vector.shape_cast %62 : vector<8xf32> to vector<8x1xf32>
    %64 = tpu.reciprocal %63 {approx = true} : vector<8x1xf32> -> vector<8x1xf32>
    %65 = vector.broadcast %64 : vector<8x1xf32> to vector<8x8xf32>
    %66 = arith.mulf %61, %65 : vector<8x8xf32>
    %67 = arith.truncf %66 : vector<8x8xf32> to vector<8x8xbf16>
    %cst_20 = arith.constant dense<0.000000e+00> : vector<8x4xf32>
    %68 = tpu.matmul %67, %55, %cst_20 {dimension_numbers = #tpu.dot_dimension_numbers<[1], [0], [0], [1], [0, 0, 1, 1], [], []>} : vector<8x8xbf16>, vector<8x4xbf16>, vector<8x4xf32> -> vector<8x4xf32>
    %69 = arith.truncf %68 : vector<8x4xf32> to vector<8x4xbf16>
    %70 = vector.extract_strided_slice %15 {offsets = [0, 12], sizes = [8, 4], strides = [1, 1]} : vector<8x32xbf16> to vector<8x4xbf16>
    %71 = vector.extract_strided_slice %17 {offsets = [0, 12], sizes = [8, 4], strides = [1, 1]} : vector<8x32xbf16> to vector<8x4xbf16>
    %72 = vector.extract_strided_slice %18 {offsets = [0, 12], sizes = [8, 4], strides = [1, 1]} : vector<8x32xbf16> to vector<8x4xbf16>
    %cst_21 = arith.constant dense<0.000000e+00> : vector<8x8xf32>
    %73 = tpu.matmul %70, %71, %cst_21 {dimension_numbers = #tpu.dot_dimension_numbers<[1], [1], [0], [0], [0, 0, 1, 0], [], []>} : vector<8x4xbf16>, vector<8x4xbf16>, vector<8x8xf32> -> vector<8x8xf32>
    %cst_22 = arith.constant dense<0xFF800000> : vector<8xf32>
    %74 = vector.multi_reduction <maximumf>, %73, %cst_22 [1] : vector<8x8xf32> to vector<8xf32>
    %75 = vector.shape_cast %74 : vector<8xf32> to vector<8x1xf32>
    %76 = vector.broadcast %75 : vector<8x1xf32> to vector<8x8xf32>
    %77 = arith.subf %73, %76 : vector<8x8xf32>
    %78 = math.exp %77 : vector<8x8xf32>
    %cst_23 = arith.constant dense<0.000000e+00> : vector<8xf32>
    %79 = vector.multi_reduction <add>, %78, %cst_23 [1] : vector<8x8xf32> to vector<8xf32>
    %80 = vector.shape_cast %79 : vector<8xf32> to vector<8x1xf32>
    %81 = tpu.reciprocal %80 {approx = true} : vector<8x1xf32> -> vector<8x1xf32>
    %82 = vector.broadcast %81 : vector<8x1xf32> to vector<8x8xf32>
    %83 = arith.mulf %78, %82 : vector<8x8xf32>
    %84 = arith.truncf %83 : vector<8x8xf32> to vector<8x8xbf16>
    %cst_24 = arith.constant dense<0.000000e+00> : vector<8x4xf32>
    %85 = tpu.matmul %84, %72, %cst_24 {dimension_numbers = #tpu.dot_dimension_numbers<[1], [0], [0], [1], [0, 0, 1, 1], [], []>} : vector<8x8xbf16>, vector<8x4xbf16>, vector<8x4xf32> -> vector<8x4xf32>
    %86 = arith.truncf %85 : vector<8x4xf32> to vector<8x4xbf16>
    %87 = vector.extract_strided_slice %15 {offsets = [0, 16], sizes = [8, 4], strides = [1, 1]} : vector<8x32xbf16> to vector<8x4xbf16>
    %88 = vector.extract_strided_slice %17 {offsets = [0, 16], sizes = [8, 4], strides = [1, 1]} : vector<8x32xbf16> to vector<8x4xbf16>
    %89 = vector.extract_strided_slice %18 {offsets = [0, 16], sizes = [8, 4], strides = [1, 1]} : vector<8x32xbf16> to vector<8x4xbf16>
    %cst_25 = arith.constant dense<0.000000e+00> : vector<8x8xf32>
    %90 = tpu.matmul %87, %88, %cst_25 {dimension_numbers = #tpu.dot_dimension_numbers<[1], [1], [0], [0], [0, 0, 1, 0], [], []>} : vector<8x4xbf16>, vector<8x4xbf16>, vector<8x8xf32> -> vector<8x8xf32>
    %cst_26 = arith.constant dense<0xFF800000> : vector<8xf32>
    %91 = vector.multi_reduction <maximumf>, %90, %cst_26 [1] : vector<8x8xf32> to vector<8xf32>
    %92 = vector.shape_cast %91 : vector<8xf32> to vector<8x1xf32>
    %93 = vector.broadcast %92 : vector<8x1xf32> to vector<8x8xf32>
    %94 = arith.subf %90, %93 : vector<8x8xf32>
    %95 = math.exp %94 : vector<8x8xf32>
    %cst_27 = arith.constant dense<0.000000e+00> : vector<8xf32>
    %96 = vector.multi_reduction <add>, %95, %cst_27 [1] : vector<8x8xf32> to vector<8xf32>
    %97 = vector.shape_cast %96 : vector<8xf32> to vector<8x1xf32>
    %98 = tpu.reciprocal %97 {approx = true} : vector<8x1xf32> -> vector<8x1xf32>
    %99 = vector.broadcast %98 : vector<8x1xf32> to vector<8x8xf32>
    %100 = arith.mulf %95, %99 : vector<8x8xf32>
    %101 = arith.truncf %100 : vector<8x8xf32> to vector<8x8xbf16>
    %cst_28 = arith.constant dense<0.000000e+00> : vector<8x4xf32>
    %102 = tpu.matmul %101, %89, %cst_28 {dimension_numbers = #tpu.dot_dimension_numbers<[1], [0], [0], [1], [0, 0, 1, 1], [], []>} : vector<8x8xbf16>, vector<8x4xbf16>, vector<8x4xf32> -> vector<8x4xf32>
    %103 = arith.truncf %102 : vector<8x4xf32> to vector<8x4xbf16>
    %104 = vector.extract_strided_slice %15 {offsets = [0, 20], sizes = [8, 4], strides = [1, 1]} : vector<8x32xbf16> to vector<8x4xbf16>
    %105 = vector.extract_strided_slice %17 {offsets = [0, 20], sizes = [8, 4], strides = [1, 1]} : vector<8x32xbf16> to vector<8x4xbf16>
    %106 = vector.extract_strided_slice %18 {offsets = [0, 20], sizes = [8, 4], strides = [1, 1]} : vector<8x32xbf16> to vector<8x4xbf16>
    %cst_29 = arith.constant dense<0.000000e+00> : vector<8x8xf32>
    %107 = tpu.matmul %104, %105, %cst_29 {dimension_numbers = #tpu.dot_dimension_numbers<[1], [1], [0], [0], [0, 0, 1, 0], [], []>} : vector<8x4xbf16>, vector<8x4xbf16>, vector<8x8xf32> -> vector<8x8xf32>
    %cst_30 = arith.constant dense<0xFF800000> : vector<8xf32>
    %108 = vector.multi_reduction <maximumf>, %107, %cst_30 [1] : vector<8x8xf32> to vector<8xf32>
    %109 = vector.shape_cast %108 : vector<8xf32> to vector<8x1xf32>
    %110 = vector.broadcast %109 : vector<8x1xf32> to vector<8x8xf32>
    %111 = arith.subf %107, %110 : vector<8x8xf32>
    %112 = math.exp %111 : vector<8x8xf32>
    %cst_31 = arith.constant dense<0.000000e+00> : vector<8xf32>
    %113 = vector.multi_reduction <add>, %112, %cst_31 [1] : vector<8x8xf32> to vector<8xf32>
    %114 = vector.shape_cast %113 : vector<8xf32> to vector<8x1xf32>
    %115 = tpu.reciprocal %114 {approx = true} : vector<8x1xf32> -> vector<8x1xf32>
    %116 = vector.broadcast %115 : vector<8x1xf32> to vector<8x8xf32>
    %117 = arith.mulf %112, %116 : vector<8x8xf32>
    %118 = arith.truncf %117 : vector<8x8xf32> to vector<8x8xbf16>
    %cst_32 = arith.constant dense<0.000000e+00> : vector<8x4xf32>
    %119 = tpu.matmul %118, %106, %cst_32 {dimension_numbers = #tpu.dot_dimension_numbers<[1], [0], [0], [1], [0, 0, 1, 1], [], []>} : vector<8x8xbf16>, vector<8x4xbf16>, vector<8x4xf32> -> vector<8x4xf32>
    %120 = arith.truncf %119 : vector<8x4xf32> to vector<8x4xbf16>
    %121 = vector.extract_strided_slice %15 {offsets = [0, 24], sizes = [8, 4], strides = [1, 1]} : vector<8x32xbf16> to vector<8x4xbf16>
    %122 = vector.extract_strided_slice %17 {offsets = [0, 24], sizes = [8, 4], strides = [1, 1]} : vector<8x32xbf16> to vector<8x4xbf16>
    %123 = vector.extract_strided_slice %18 {offsets = [0, 24], sizes = [8, 4], strides = [1, 1]} : vector<8x32xbf16> to vector<8x4xbf16>
    %cst_33 = arith.constant dense<0.000000e+00> : vector<8x8xf32>
    %124 = tpu.matmul %121, %122, %cst_33 {dimension_numbers = #tpu.dot_dimension_numbers<[1], [1], [0], [0], [0, 0, 1, 0], [], []>} : vector<8x4xbf16>, vector<8x4xbf16>, vector<8x8xf32> -> vector<8x8xf32>
    %cst_34 = arith.constant dense<0xFF800000> : vector<8xf32>
    %125 = vector.multi_reduction <maximumf>, %124, %cst_34 [1] : vector<8x8xf32> to vector<8xf32>
    %126 = vector.shape_cast %125 : vector<8xf32> to vector<8x1xf32>
    %127 = vector.broadcast %126 : vector<8x1xf32> to vector<8x8xf32>
    %128 = arith.subf %124, %127 : vector<8x8xf32>
    %129 = math.exp %128 : vector<8x8xf32>
    %cst_35 = arith.constant dense<0.000000e+00> : vector<8xf32>
    %130 = vector.multi_reduction <add>, %129, %cst_35 [1] : vector<8x8xf32> to vector<8xf32>
    %131 = vector.shape_cast %130 : vector<8xf32> to vector<8x1xf32>
    %132 = tpu.reciprocal %131 {approx = true} : vector<8x1xf32> -> vector<8x1xf32>
    %133 = vector.broadcast %132 : vector<8x1xf32> to vector<8x8xf32>
    %134 = arith.mulf %129, %133 : vector<8x8xf32>
    %135 = arith.truncf %134 : vector<8x8xf32> to vector<8x8xbf16>
    %cst_36 = arith.constant dense<0.000000e+00> : vector<8x4xf32>
    %136 = tpu.matmul %135, %123, %cst_36 {dimension_numbers = #tpu.dot_dimension_numbers<[1], [0], [0], [1], [0, 0, 1, 1], [], []>} : vector<8x8xbf16>, vector<8x4xbf16>, vector<8x4xf32> -> vector<8x4xf32>
    %137 = arith.truncf %136 : vector<8x4xf32> to vector<8x4xbf16>
    %138 = vector.extract_strided_slice %15 {offsets = [0, 28], sizes = [8, 4], strides = [1, 1]} : vector<8x32xbf16> to vector<8x4xbf16>
    %139 = vector.extract_strided_slice %17 {offsets = [0, 28], sizes = [8, 4], strides = [1, 1]} : vector<8x32xbf16> to vector<8x4xbf16>
    %140 = vector.extract_strided_slice %18 {offsets = [0, 28], sizes = [8, 4], strides = [1, 1]} : vector<8x32xbf16> to vector<8x4xbf16>
    %cst_37 = arith.constant dense<0.000000e+00> : vector<8x8xf32>
    %141 = tpu.matmul %138, %139, %cst_37 {dimension_numbers = #tpu.dot_dimension_numbers<[1], [1], [0], [0], [0, 0, 1, 0], [], []>} : vector<8x4xbf16>, vector<8x4xbf16>, vector<8x8xf32> -> vector<8x8xf32>
    %cst_38 = arith.constant dense<0xFF800000> : vector<8xf32>
    %142 = vector.multi_reduction <maximumf>, %141, %cst_38 [1] : vector<8x8xf32> to vector<8xf32>
    %143 = vector.shape_cast %142 : vector<8xf32> to vector<8x1xf32>
    %144 = vector.broadcast %143 : vector<8x1xf32> to vector<8x8xf32>
    %145 = arith.subf %141, %144 : vector<8x8xf32>
    %146 = math.exp %145 : vector<8x8xf32>
    %cst_39 = arith.constant dense<0.000000e+00> : vector<8xf32>
    %147 = vector.multi_reduction <add>, %146, %cst_39 [1] : vector<8x8xf32> to vector<8xf32>
    %148 = vector.shape_cast %147 : vector<8xf32> to vector<8x1xf32>
    %149 = tpu.reciprocal %148 {approx = true} : vector<8x1xf32> -> vector<8x1xf32>
    %150 = vector.broadcast %149 : vector<8x1xf32> to vector<8x8xf32>
    %151 = arith.mulf %146, %150 : vector<8x8xf32>
    %152 = arith.truncf %151 : vector<8x8xf32> to vector<8x8xbf16>
    %cst_40 = arith.constant dense<0.000000e+00> : vector<8x4xf32>
    %153 = tpu.matmul %152, %140, %cst_40 {dimension_numbers = #tpu.dot_dimension_numbers<[1], [0], [0], [1], [0, 0, 1, 1], [], []>} : vector<8x8xbf16>, vector<8x4xbf16>, vector<8x4xf32> -> vector<8x4xf32>
    %154 = arith.truncf %153 : vector<8x4xf32> to vector<8x4xbf16>
    %155 = tpu.concatenate %35, %52, %69, %86, %103, %120, %137, %154 in 1 : vector<8x4xbf16>, vector<8x4xbf16>, vector<8x4xbf16>, vector<8x4xbf16>, vector<8x4xbf16>, vector<8x4xbf16>, vector<8x4xbf16>, vector<8x4xbf16> -> vector<8x32xbf16>
    %c0_41 = arith.constant 0 : index
    %c0_42 = arith.constant 0 : index
    %156 = vector.load %arg5[%c0_41, %c0_42] : memref<32x32xbf16, #tpu.memory_space<vmem>>, vector<32x32xbf16>
    %cst_43 = arith.constant dense<0.000000e+00> : vector<8x32xf32>
    %157 = tpu.matmul %155, %156, %cst_43 {dimension_numbers = #tpu.dot_dimension_numbers<[1], [0], [0], [1], [0, 0, 1, 1], [], []>} : vector<8x32xbf16>, vector<32x32xbf16>, vector<8x32xf32> -> vector<8x32xf32>
    %c0_44 = arith.constant 0 : index
    %c0_45 = arith.constant 0 : index
    %158 = vector.load %arg6[%c0_44, %c0_45] : memref<1x32xf32, #tpu.memory_space<vmem>>, vector<1x32xf32>
    %159 = vector.broadcast %158 : vector<1x32xf32> to vector<8x32xf32>
    %160 = arith.addf %157, %159 : vector<8x32xf32>
    %c0_46 = arith.constant 0 : index
    %c0_47 = arith.constant 0 : index
    %c0_48 = arith.constant 0 : index
    %161 = vector.load %arg7[%c0_46, %c0_47, %c0_48] : memref<1x8x32xf32, #tpu.memory_space<vmem>>, vector<1x8x32xf32>
    %162 = vector.shape_cast %161 : vector<1x8x32xf32> to vector<8x32xf32>
    %163 = vector.shape_cast %160 : vector<8x32xf32> to vector<1x8x32xf32>
    tpu.vector_store %arg7[%c0_46, %c0_47, %c0_48], %163 {strides = array<i32>} : memref<1x8x32xf32, #tpu.memory_space<vmem>>, vector<1x8x32xf32>,
    return
  }
  func.func @transform_0(%arg0: i32, %arg1: i32) -> (i32, i32, i32) {
    %c0_i32 = arith.constant 0 : i32
    %c0_i32_0 = arith.constant 0 : i32
    %c0_i32_1 = arith.constant 0 : i32
    return %arg0, %c0_i32, %c0_i32_0 : i32, i32, i32
  }
  func.func @transform_1(%arg0: i32, %arg1: i32) -> (i32, i32) {
    %c0_i32 = arith.constant 0 : i32
    %c0_i32_0 = arith.constant 0 : i32
    %c0_i32_1 = arith.constant 0 : i32
    return %c0_i32, %c0_i32_0 : i32, i32
  }
  func.func @transform_2(%arg0: i32, %arg1: i32) -> (i32, i32) {
    %c0_i32 = arith.constant 0 : i32
    %c0_i32_0 = arith.constant 0 : i32
    %c0_i32_1 = arith.constant 0 : i32
    return %c0_i32, %c0_i32_0 : i32, i32
  }
  func.func @transform_3(%arg0: i32, %arg1: i32) -> (i32, i32) {
    %c0_i32 = arith.constant 0 : i32
    %c0_i32_0 = arith.constant 0 : i32
    %c0_i32_1 = arith.constant 0 : i32
    return %c0_i32, %c0_i32_0 : i32, i32
  }
  func.func @transform_4(%arg0: i32, %arg1: i32) -> (i32, i32) {
    %c0_i32 = arith.constant 0 : i32
    %c0_i32_0 = arith.constant 0 : i32
    %c0_i32_1 = arith.constant 0 : i32
    return %c0_i32, %c0_i32_0 : i32, i32
  }
  func.func @transform_5(%arg0: i32, %arg1: i32) -> (i32, i32, i32) {
    %c0_i32 = arith.constant 0 : i32
    %c0_i32_0 = arith.constant 0 : i32
    return %arg0, %arg1, %c0_i32 : i32, i32, i32
  }
}

module attributes {stable_mosaic.version = 11 : i64} {
  func.func @attention_kernel(%arg0: i32, %arg1: i32, %arg2: memref<1x8x32xbf16, #tpu.memory_space<vmem>>, %arg3: memref<32x96xbf16, #tpu.memory_space<vmem>>, %arg4: memref<1x96xf32, #tpu.memory_space<vmem>>, %arg5: memref<32x32xbf16, #tpu.memory_space<vmem>>, %arg6: memref<1x32xf32, #tpu.memory_space<vmem>>, %arg7: memref<1x8x32xf32, #tpu.memory_space<vmem>>, %arg8: memref<8x64xbf16, #tpu.memory_space<vmem>>) attributes {dimension_semantics = [#tpu.dimension_semantics<parallel>, #tpu.dimension_semantics<arbitrary>], iteration_bounds = array<i64: 2, 1>, scalar_prefetch = 0 : i64, scratch_operands = 1 : i64, tpu.core_type = #tpu.core_type<tc>, window_params = [{transform_indices = @transform_0, window_bounds = array<i64: 1, 8, 32>}, {pipeline_mode = #tpu.pipeline_mode<synchronous>, transform_indices = @transform_1, window_bounds = array<i64: 32, 96>}, {pipeline_mode = #tpu.pipeline_mode<synchronous>, transform_indices = @transform_2, window_bounds = array<i64: 1, 96>}, {pipeline_mode = #tpu.pipeline_mode<synchronous>, transform_indices = @transform_3, window_bounds = array<i64: 32, 32>}, {pipeline_mode = #tpu.pipeline_mode<synchronous>, transform_indices = @transform_4, window_bounds = array<i64: 1, 32>}, {transform_indices = @transform_5, window_bounds = array<i64: 1, 8, 32>}]} {
    %c0_i32 = arith.constant 0 : i32
    %0 = arith.cmpi eq, %arg1, %c0_i32 : i32
    %1 = arith.extui %0 : i1 to i32
    %c0_i32_0 = arith.constant 0 : i32
    %2 = arith.cmpi ne, %1, %c0_i32_0 : i32
    scf.if %2 {
      %c0_49 = arith.constant 0 : index
      %c0_50 = arith.constant 0 : index
      %c0_51 = arith.constant 0 : index
      %164 = vector.load %arg2[%c0_49, %c0_50, %c0_51] : memref<1x8x32xbf16, #tpu.memory_space<vmem>>, vector<1x8x32xbf16>
      %165 = vector.shape_cast %164 : vector<1x8x32xbf16> to vector<8x32xbf16>
      %c0_52 = arith.constant 0 : index
      %c32 = arith.constant 32 : index
      %166 = vector.load %arg3[%c0_52, %c32] : memref<32x96xbf16, #tpu.memory_space<vmem>>, vector<32x64xbf16>
      %cst_53 = arith.constant dense<0.000000e+00> : vector<8x64xf32>
      %167 = tpu.matmul %165, %166, %cst_53 {dimension_numbers = #tpu.dot_dimension_numbers<[1], [0], [0], [1], [0, 0, 1, 1], [], []>} : vector<8x32xbf16>, vector<32x64xbf16>, vector<8x64xf32> -> vector<8x64xf32>
      %c0_54 = arith.constant 0 : index
      %c32_55 = arith.constant 32 : index
      %168 = vector.load %arg4[%c0_54, %c32_55] : memref<1x96xf32, #tpu.memory_space<vmem>>, vector<1x64xf32>
      %169 = vector.broadcast %168 : vector<1x64xf32> to vector<8x64xf32>
      %170 = arith.addf %167, %169 : vector<8x64xf32>
      %171 = arith.truncf %170 : vector<8x64xf32> to vector<8x64xbf16>
      %c0_56 = arith.constant 0 : index
      %c0_57 = arith.constant 0 : index
      %172 = vector.load %arg8[%c0_56, %c0_57] : memref<8x64xbf16, #tpu.memory_space<vmem>>, vector<8x64xbf16>
      tpu.vector_store %arg8[%c0_56, %c0_57], %171 {strides = array<i32>} : memref<8x64xbf16, #tpu.memory_space<vmem>>, vector<8x64xbf16>,
    } else {
    }
    %c8_i32 = arith.constant 8 : i32
    %3 = arith.muli %arg1, %c8_i32 : i32
    %4 = tpu.assume_multiple %3, 8 : i32
    %c0 = arith.constant 0 : index
    %5 = arith.index_cast %4 : i32 to index
    %c0_1 = arith.constant 0 : index
    %6 = vector.load %arg2[%c0, %5, %c0_1] : memref<1x8x32xbf16, #tpu.memory_space<vmem>>, vector<1x8x32xbf16>
    %7 = vector.shape_cast %6 : vector<1x8x32xbf16> to vector<8x32xbf16>
    %c0_2 = arith.constant 0 : index
    %c0_3 = arith.constant 0 : index
    %8 = vector.load %arg3[%c0_2, %c0_3] : memref<32x96xbf16, #tpu.memory_space<vmem>>, vector<32x32xbf16>
    %cst = arith.constant dense<0.000000e+00> : vector<8x32xf32>
    %9 = tpu.matmul %7, %8, %cst {dimension_numbers = #tpu.dot_dimension_numbers<[1], [0], [0], [1], [0, 0, 1, 1], [], []>} : vector<8x32xbf16>, vector<32x32xbf16>, vector<8x32xf32> -> vector<8x32xf32>
    %c0_4 = arith.constant 0 : index
    %c0_5 = arith.constant 0 : index
    %10 = vector.load %arg4[%c0_4, %c0_5] : memref<1x96xf32, #tpu.memory_space<vmem>>, vector<1x32xf32>
    %11 = vector.broadcast %10 : vector<1x32xf32> to vector<8x32xf32>
    %12 = arith.addf %9, %11 : vector<8x32xf32>
    %cst_6 = arith.constant 5.000000e-01 : f32
    %13 = vector.broadcast %cst_6 : f32 to vector<8x32xf32>
    %14 = arith.mulf %12, %13 : vector<8x32xf32>
    %15 = arith.truncf %14 : vector<8x32xf32> to vector<8x32xbf16>
    %c0_7 = arith.constant 0 : index
    %c0_8 = arith.constant 0 : index
    %16 = vector.load %arg8[%c0_7, %c0_8] : memref<8x64xbf16, #tpu.memory_space<vmem>>, vector<8x64xbf16>
    %17 = vector.extract_strided_slice %16 {offsets = [0, 0], sizes = [8, 32], strides = [1, 1]} : vector<8x64xbf16> to vector<8x32xbf16>
    %18 = vector.extract_strided_slice %16 {offsets = [0, 32], sizes = [8, 32], strides = [1, 1]} : vector<8x64xbf16> to vector<8x32xbf16>
    %19 = vector.extract_strided_slice %15 {offsets = [0, 0], sizes = [8, 4], strides = [1, 1]} : vector<8x32xbf16> to vector<8x4xbf16>
    %20 = vector.extract_strided_slice %17 {offsets = [0, 0], sizes = [8, 4], strides = [1, 1]} : vector<8x32xbf16> to vector<8x4xbf16>
    %21 = vector.extract_strided_slice %18 {offsets = [0, 0], sizes = [8, 4], strides = [1, 1]} : vector<8x32xbf16> to vector<8x4xbf16>
    %cst_9 = arith.constant dense<0.000000e+00> : vector<8x8xf32>
    %22 = tpu.matmul %19, %20, %cst_9 {dimension_numbers = #tpu.dot_dimension_numbers<[1], [1], [0], [0], [0, 0, 1, 0], [], []>} : vector<8x4xbf16>, vector<8x4xbf16>, vector<8x8xf32> -> vector<8x8xf32>
    %cst_10 = arith.constant dense<0xFF800000> : vector<8xf32>
    %23 = vector.multi_reduction <maximumf>, %22, %cst_10 [1] : vector<8x8xf32> to vector<8xf32>
    %24 = vector.shape_cast %23 : vector<8xf32> to vector<8x1xf32>
    %25 = vector.broadcast %24 : vector<8x1xf32> to vector<8x8xf32>
    %26 = arith.subf %22, %25 : vector<8x8xf32>
    %27 = math.exp %26 : vector<8x8xf32>
    %cst_11 = arith.constant dense<0.000000e+00> : vector<8xf32>
    %28 = vector.multi_reduction <add>, %27, %cst_11 [1] : vector<8x8xf32> to vector<8xf32>
    %29 = vector.shape_cast %28 : vector<8xf32> to vector<8x1xf32>
    %30 = tpu.reciprocal %29 {approx = true} : vector<8x1xf32> -> vector<8x1xf32>
    %31 = vector.broadcast %30 : vector<8x1xf32> to vector<8x8xf32>
    %32 = arith.mulf %27, %31 : vector<8x8xf32>
    %33 = arith.truncf %32 : vector<8x8xf32> to vector<8x8xbf16>
    %cst_12 = arith.constant dense<0.000000e+00> : vector<8x4xf32>
    %34 = tpu.matmul %33, %21, %cst_12 {dimension_numbers = #tpu.dot_dimension_numbers<[1], [0], [0], [1], [0, 0, 1, 1], [], []>} : vector<8x8xbf16>, vector<8x4xbf16>, vector<8x4xf32> -> vector<8x4xf32>
    %35 = arith.truncf %34 : vector<8x4xf32> to vector<8x4xbf16>
    %36 = vector.extract_strided_slice %15 {offsets = [0, 4], sizes = [8, 4], strides = [1, 1]} : vector<8x32xbf16> to vector<8x4xbf16>
    %37 = vector.extract_strided_slice %17 {offsets = [0, 4], sizes = [8, 4], strides = [1, 1]} : vector<8x32xbf16> to vector<8x4xbf16>
    %38 = vector.extract_strided_slice %18 {offsets = [0, 4], sizes = [8, 4], strides = [1, 1]} : vector<8x32xbf16> to vector<8x4xbf16>
    %cst_13 = arith.constant dense<0.000000e+00> : vector<8x8xf32>
    %39 = tpu.matmul %36, %37, %cst_13 {dimension_numbers = #tpu.dot_dimension_numbers<[1], [1], [0], [0], [0, 0, 1, 0], [], []>} : vector<8x4xbf16>, vector<8x4xbf16>, vector<8x8xf32> -> vector<8x8xf32>
    %cst_14 = arith.constant dense<0xFF800000> : vector<8xf32>
    %40 = vector.multi_reduction <maximumf>, %39, %cst_14 [1] : vector<8x8xf32> to vector<8xf32>
    %41 = vector.shape_cast %40 : vector<8xf32> to vector<8x1xf32>
    %42 = vector.broadcast %41 : vector<8x1xf32> to vector<8x8xf32>
    %43 = arith.subf %39, %42 : vector<8x8xf32>
    %44 = math.exp %43 : vector<8x8xf32>
    %cst_15 = arith.constant dense<0.000000e+00> : vector<8xf32>
    %45 = vector.multi_reduction <add>, %44, %cst_15 [1] : vector<8x8xf32> to vector<8xf32>
    %46 = vector.shape_cast %45 : vector<8xf32> to vector<8x1xf32>
    %47 = tpu.reciprocal %46 {approx = true} : vector<8x1xf32> -> vector<8x1xf32>
    %48 = vector.broadcast %47 : vector<8x1xf32> to vector<8x8xf32>
    %49 = arith.mulf %44, %48 : vector<8x8xf32>
    %50 = arith.truncf %49 : vector<8x8xf32> to vector<8x8xbf16>
    %cst_16 = arith.constant dense<0.000000e+00> : vector<8x4xf32>
    %51 = tpu.matmul %50, %38, %cst_16 {dimension_numbers = #tpu.dot_dimension_numbers<[1], [0], [0], [1], [0, 0, 1, 1], [], []>} : vector<8x8xbf16>, vector<8x4xbf16>, vector<8x4xf32> -> vector<8x4xf32>
    %52 = arith.truncf %51 : vector<8x4xf32> to vector<8x4xbf16>
    %53 = vector.extract_strided_slice %15 {offsets = [0, 8], sizes = [8, 4], strides = [1, 1]} : vector<8x32xbf16> to vector<8x4xbf16>
    %54 = vector.extract_strided_slice %17 {offsets = [0, 8], sizes = [8, 4], strides = [1, 1]} : vector<8x32xbf16> to vector<8x4xbf16>
    %55 = vector.extract_strided_slice %18 {offsets = [0, 8], sizes = [8, 4], strides = [1, 1]} : vector<8x32xbf16> to vector<8x4xbf16>
    %cst_17 = arith.constant dense<0.000000e+00> : vector<8x8xf32>
    %56 = tpu.matmul %53, %54, %cst_17 {dimension_numbers = #tpu.dot_dimension_numbers<[1], [1], [0], [0], [0, 0, 1, 0], [], []>} : vector<8x4xbf16>, vector<8x4xbf16>, vector<8x8xf32> -> vector<8x8xf32>
    %cst_18 = arith.constant dense<0xFF800000> : vector<8xf32>
    %57 = vector.multi_reduction <maximumf>, %56, %cst_18 [1] : vector<8x8xf32> to vector<8xf32>
    %58 = vector.shape_cast %57 : vector<8xf32> to vector<8x1xf32>
    %59 = vector.broadcast %58 : vector<8x1xf32> to vector<8x8xf32>
    %60 = arith.subf %56, %59 : vector<8x8xf32>
    %61 = math.exp %60 : vector<8x8xf32>
    %cst_19 = arith.constant dense<0.000000e+00> : vector<8xf32>
    %62 = vector.multi_reduction <add>, %61, %cst_19 [1] : vector<8x8xf32> to vector<8xf32>
    %63 = vector.shape_cast %62 : vector<8xf32> to vector<8x1xf32>
    %64 = tpu.reciprocal %63 {approx = true} : vector<8x1xf32> -> vector<8x1xf32>
    %65 = vector.broadcast %64 : vector<8x1xf32> to vector<8x8xf32>
    %66 = arith.mulf %61, %65 : vector<8x8xf32>
    %67 = arith.truncf %66 : vector<8x8xf32> to vector<8x8xbf16>
    %cst_20 = arith.constant dense<0.000000e+00> : vector<8x4xf32>
    %68 = tpu.matmul %67, %55, %cst_20 {dimension_numbers = #tpu.dot_dimension_numbers<[1], [0], [0], [1], [0, 0, 1, 1], [], []>} : vector<8x8xbf16>, vector<8x4xbf16>, vector<8x4xf32> -> vector<8x4xf32>
    %69 = arith.truncf %68 : vector<8x4xf32> to vector<8x4xbf16>
    %70 = vector.extract_strided_slice %15 {offsets = [0, 12], sizes = [8, 4], strides = [1, 1]} : vector<8x32xbf16> to vector<8x4xbf16>
    %71 = vector.extract_strided_slice %17 {offsets = [0, 12], sizes = [8, 4], strides = [1, 1]} : vector<8x32xbf16> to vector<8x4xbf16>
    %72 = vector.extract_strided_slice %18 {offsets = [0, 12], sizes = [8, 4], strides = [1, 1]} : vector<8x32xbf16> to vector<8x4xbf16>
    %cst_21 = arith.constant dense<0.000000e+00> : vector<8x8xf32>
    %73 = tpu.matmul %70, %71, %cst_21 {dimension_numbers = #tpu.dot_dimension_numbers<[1], [1], [0], [0], [0, 0, 1, 0], [], []>} : vector<8x4xbf16>, vector<8x4xbf16>, vector<8x8xf32> -> vector<8x8xf32>
    %cst_22 = arith.constant dense<0xFF800000> : vector<8xf32>
    %74 = vector.multi_reduction <maximumf>, %73, %cst_22 [1] : vector<8x8xf32> to vector<8xf32>
    %75 = vector.shape_cast %74 : vector<8xf32> to vector<8x1xf32>
    %76 = vector.broadcast %75 : vector<8x1xf32> to vector<8x8xf32>
    %77 = arith.subf %73, %76 : vector<8x8xf32>
    %78 = math.exp %77 : vector<8x8xf32>
    %cst_23 = arith.constant dense<0.000000e+00> : vector<8xf32>
    %79 = vector.multi_reduction <add>, %78, %cst_23 [1] : vector<8x8xf32> to vector<8xf32>
    %80 = vector.shape_cast %79 : vector<8xf32> to vector<8x1xf32>
    %81 = tpu.reciprocal %80 {approx = true} : vector<8x1xf32> -> vector<8x1xf32>
    %82 = vector.broadcast %81 : vector<8x1xf32> to vector<8x8xf32>
    %83 = arith.mulf %78, %82 : vector<8x8xf32>
    %84 = arith.truncf %83 : vector<8x8xf32> to vector<8x8xbf16>
    %cst_24 = arith.constant dense<0.000000e+00> : vector<8x4xf32>
    %85 = tpu.matmul %84, %72, %cst_24 {dimension_numbers = #tpu.dot_dimension_numbers<[1], [0], [0], [1], [0, 0, 1, 1], [], []>} : vector<8x8xbf16>, vector<8x4xbf16>, vector<8x4xf32> -> vector<8x4xf32>
    %86 = arith.truncf %85 : vector<8x4xf32> to vector<8x4xbf16>
    %87 = vector.extract_strided_slice %15 {offsets = [0, 16], sizes = [8, 4], strides = [1, 1]} : vector<8x32xbf16> to vector<8x4xbf16>
    %88 = vector.extract_strided_slice %17 {offsets = [0, 16], sizes = [8, 4], strides = [1, 1]} : vector<8x32xbf16> to vector<8x4xbf16>
    %89 = vector.extract_strided_slice %18 {offsets = [0, 16], sizes = [8, 4], strides = [1, 1]} : vector<8x32xbf16> to vector<8x4xbf16>
    %cst_25 = arith.constant dense<0.000000e+00> : vector<8x8xf32>
    %90 = tpu.matmul %87, %88, %cst_25 {dimension_numbers = #tpu.dot_dimension_numbers<[1], [1], [0], [0], [0, 0, 1, 0], [], []>} : vector<8x4xbf16>, vector<8x4xbf16>, vector<8x8xf32> -> vector<8x8xf32>
    %cst_26 = arith.constant dense<0xFF800000> : vector<8xf32>
    %91 = vector.multi_reduction <maximumf>, %90, %cst_26 [1] : vector<8x8xf32> to vector<8xf32>
    %92 = vector.shape_cast %91 : vector<8xf32> to vector<8x1xf32>
    %93 = vector.broadcast %92 : vector<8x1xf32> to vector<8x8xf32>
    %94 = arith.subf %90, %93 : vector<8x8xf32>
    %95 = math.exp %94 : vector<8x8xf32>
    %cst_27 = arith.constant dense<0.000000e+00> : vector<8xf32>
    %96 = vector.multi_reduction <add>, %95, %cst_27 [1] : vector<8x8xf32> to vector<8xf32>
    %97 = vector.shape_cast %96 : vector<8xf32> to vector<8x1xf32>
    %98 = tpu.reciprocal %97 {approx = true} : vector<8x1xf32> -> vector<8x1xf32>
    %99 = vector.broadcast %98 : vector<8x1xf32> to vector<8x8xf32>
    %100 = arith.mulf %95, %99 : vector<8x8xf32>
    %101 = arith.truncf %100 : vector<8x8xf32> to vector<8x8xbf16>
    %cst_28 = arith.constant dense<0.000000e+00> : vector<8x4xf32>
    %102 = tpu.matmul %101, %89, %cst_28 {dimension_numbers = #tpu.dot_dimension_numbers<[1], [0], [0], [1], [0, 0, 1, 1], [], []>} : vector<8x8xbf16>, vector<8x4xbf16>, vector<8x4xf32> -> vector<8x4xf32>
    %103 = arith.truncf %102 : vector<8x4xf32> to vector<8x4xbf16>
    %104 = vector.extract_strided_slice %15 {offsets = [0, 20], sizes = [8, 4], strides = [1, 1]} : vector<8x32xbf16> to vector<8x4xbf16>
    %105 = vector.extract_strided_slice %17 {offsets = [0, 20], sizes = [8, 4], strides = [1, 1]} : vector<8x32xbf16> to vector<8x4xbf16>
    %106 = vector.extract_strided_slice %18 {offsets = [0, 20], sizes = [8, 4], strides = [1, 1]} : vector<8x32xbf16> to vector<8x4xbf16>
    %cst_29 = arith.constant dense<0.000000e+00> : vector<8x8xf32>
    %107 = tpu.matmul %104, %105, %cst_29 {dimension_numbers = #tpu.dot_dimension_numbers<[1], [1], [0], [0], [0, 0, 1, 0], [], []>} : vector<8x4xbf16>, vector<8x4xbf16>, vector<8x8xf32> -> vector<8x8xf32>
    %cst_30 = arith.constant dense<0xFF800000> : vector<8xf32>
    %108 = vector.multi_reduction <maximumf>, %107, %cst_30 [1] : vector<8x8xf32> to vector<8xf32>
    %109 = vector.shape_cast %108 : vector<8xf32> to vector<8x1xf32>
    %110 = vector.broadcast %109 : vector<8x1xf32> to vector<8x8xf32>
    %111 = arith.subf %107, %110 : vector<8x8xf32>
    %112 = math.exp %111 : vector<8x8xf32>
    %cst_31 = arith.constant dense<0.000000e+00> : vector<8xf32>
    %113 = vector.multi_reduction <add>, %112, %cst_31 [1] : vector<8x8xf32> to vector<8xf32>
    %114 = vector.shape_cast %113 : vector<8xf32> to vector<8x1xf32>
    %115 = tpu.reciprocal %114 {approx = true} : vector<8x1xf32> -> vector<8x1xf32>
    %116 = vector.broadcast %115 : vector<8x1xf32> to vector<8x8xf32>
    %117 = arith.mulf %112, %116 : vector<8x8xf32>
    %118 = arith.truncf %117 : vector<8x8xf32> to vector<8x8xbf16>
    %cst_32 = arith.constant dense<0.000000e+00> : vector<8x4xf32>
    %119 = tpu.matmul %118, %106, %cst_32 {dimension_numbers = #tpu.dot_dimension_numbers<[1], [0], [0], [1], [0, 0, 1, 1], [], []>} : vector<8x8xbf16>, vector<8x4xbf16>, vector<8x4xf32> -> vector<8x4xf32>
    %120 = arith.truncf %119 : vector<8x4xf32> to vector<8x4xbf16>
    %121 = vector.extract_strided_slice %15 {offsets = [0, 24], sizes = [8, 4], strides = [1, 1]} : vector<8x32xbf16> to vector<8x4xbf16>
    %122 = vector.extract_strided_slice %17 {offsets = [0, 24], sizes = [8, 4], strides = [1, 1]} : vector<8x32xbf16> to vector<8x4xbf16>
    %123 = vector.extract_strided_slice %18 {offsets = [0, 24], sizes = [8, 4], strides = [1, 1]} : vector<8x32xbf16> to vector<8x4xbf16>
    %cst_33 = arith.constant dense<0.000000e+00> : vector<8x8xf32>
    %124 = tpu.matmul %121, %122, %cst_33 {dimension_numbers = #tpu.dot_dimension_numbers<[1], [1], [0], [0], [0, 0, 1, 0], [], []>} : vector<8x4xbf16>, vector<8x4xbf16>, vector<8x8xf32> -> vector<8x8xf32>
    %cst_34 = arith.constant dense<0xFF800000> : vector<8xf32>
    %125 = vector.multi_reduction <maximumf>, %124, %cst_34 [1] : vector<8x8xf32> to vector<8xf32>
    %126 = vector.shape_cast %125 : vector<8xf32> to vector<8x1xf32>
    %127 = vector.broadcast %126 : vector<8x1xf32> to vector<8x8xf32>
    %128 = arith.subf %124, %127 : vector<8x8xf32>
    %129 = math.exp %128 : vector<8x8xf32>
    %cst_35 = arith.constant dense<0.000000e+00> : vector<8xf32>
    %130 = vector.multi_reduction <add>, %129, %cst_35 [1] : vector<8x8xf32> to vector<8xf32>
    %131 = vector.shape_cast %130 : vector<8xf32> to vector<8x1xf32>
    %132 = tpu.reciprocal %131 {approx = true} : vector<8x1xf32> -> vector<8x1xf32>
    %133 = vector.broadcast %132 : vector<8x1xf32> to vector<8x8xf32>
    %134 = arith.mulf %129, %133 : vector<8x8xf32>
    %135 = arith.truncf %134 : vector<8x8xf32> to vector<8x8xbf16>
    %cst_36 = arith.constant dense<0.000000e+00> : vector<8x4xf32>
    %136 = tpu.matmul %135, %123, %cst_36 {dimension_numbers = #tpu.dot_dimension_numbers<[1], [0], [0], [1], [0, 0, 1, 1], [], []>} : vector<8x8xbf16>, vector<8x4xbf16>, vector<8x4xf32> -> vector<8x4xf32>
    %137 = arith.truncf %136 : vector<8x4xf32> to vector<8x4xbf16>
    %138 = vector.extract_strided_slice %15 {offsets = [0, 28], sizes = [8, 4], strides = [1, 1]} : vector<8x32xbf16> to vector<8x4xbf16>
    %139 = vector.extract_strided_slice %17 {offsets = [0, 28], sizes = [8, 4], strides = [1, 1]} : vector<8x32xbf16> to vector<8x4xbf16>
    %140 = vector.extract_strided_slice %18 {offsets = [0, 28], sizes = [8, 4], strides = [1, 1]} : vector<8x32xbf16> to vector<8x4xbf16>
    %cst_37 = arith.constant dense<0.000000e+00> : vector<8x8xf32>
    %141 = tpu.matmul %138, %139, %cst_37 {dimension_numbers = #tpu.dot_dimension_numbers<[1], [1], [0], [0], [0, 0, 1, 0], [], []>} : vector<8x4xbf16>, vector<8x4xbf16>, vector<8x8xf32> -> vector<8x8xf32>
    %cst_38 = arith.constant dense<0xFF800000> : vector<8xf32>
    %142 = vector.multi_reduction <maximumf>, %141, %cst_38 [1] : vector<8x8xf32> to vector<8xf32>
    %143 = vector.shape_cast %142 : vector<8xf32> to vector<8x1xf32>
    %144 = vector.broadcast %143 : vector<8x1xf32> to vector<8x8xf32>
    %145 = arith.subf %141, %144 : vector<8x8xf32>
    %146 = math.exp %145 : vector<8x8xf32>
    %cst_39 = arith.constant dense<0.000000e+00> : vector<8xf32>
    %147 = vector.multi_reduction <add>, %146, %cst_39 [1] : vector<8x8xf32> to vector<8xf32>
    %148 = vector.shape_cast %147 : vector<8xf32> to vector<8x1xf32>
    %149 = tpu.reciprocal %148 {approx = true} : vector<8x1xf32> -> vector<8x1xf32>
    %150 = vector.broadcast %149 : vector<8x1xf32> to vector<8x8xf32>
    %151 = arith.mulf %146, %150 : vector<8x8xf32>
    %152 = arith.truncf %151 : vector<8x8xf32> to vector<8x8xbf16>
    %cst_40 = arith.constant dense<0.000000e+00> : vector<8x4xf32>
    %153 = tpu.matmul %152, %140, %cst_40 {dimension_numbers = #tpu.dot_dimension_numbers<[1], [0], [0], [1], [0, 0, 1, 1], [], []>} : vector<8x8xbf16>, vector<8x4xbf16>, vector<8x4xf32> -> vector<8x4xf32>
    %154 = arith.truncf %153 : vector<8x4xf32> to vector<8x4xbf16>
    %155 = tpu.concatenate %35, %52, %69, %86, %103, %120, %137, %154 in 1 : vector<8x4xbf16>, vector<8x4xbf16>, vector<8x4xbf16>, vector<8x4xbf16>, vector<8x4xbf16>, vector<8x4xbf16>, vector<8x4xbf16>, vector<8x4xbf16> -> vector<8x32xbf16>
    %c0_41 = arith.constant 0 : index
    %c0_42 = arith.constant 0 : index
    %156 = vector.load %arg5[%c0_41, %c0_42] : memref<32x32xbf16, #tpu.memory_space<vmem>>, vector<32x32xbf16>
    %cst_43 = arith.constant dense<0.000000e+00> : vector<8x32xf32>
    %157 = tpu.matmul %155, %156, %cst_43 {dimension_numbers = #tpu.dot_dimension_numbers<[1], [0], [0], [1], [0, 0, 1, 1], [], []>} : vector<8x32xbf16>, vector<32x32xbf16>, vector<8x32xf32> -> vector<8x32xf32>
    %c0_44 = arith.constant 0 : index
    %c0_45 = arith.constant 0 : index
    %158 = vector.load %arg6[%c0_44, %c0_45] : memref<1x32xf32, #tpu.memory_space<vmem>>, vector<1x32xf32>
    %159 = vector.broadcast %158 : vector<1x32xf32> to vector<8x32xf32>
    %160 = arith.addf %157, %159 : vector<8x32xf32>
    %c0_46 = arith.constant 0 : index
    %c0_47 = arith.constant 0 : index
    %c0_48 = arith.constant 0 : index
    %161 = vector.load %arg7[%c0_46, %c0_47, %c0_48] : memref<1x8x32xf32, #tpu.memory_space<vmem>>, vector<1x8x32xf32>
    %162 = vector.shape_cast %161 : vector<1x8x32xf32> to vector<8x32xf32>
    %163 = vector.shape_cast %160 : vector<8x32xf32> to vector<1x8x32xf32>
    tpu.vector_store %arg7[%c0_46, %c0_47, %c0_48], %163 {strides = array<i32>} : memref<1x8x32xf32, #tpu.memory_space<vmem>>, vector<1x8x32xf32>,
    return
  }
  func.func @transform_0(%arg0: i32, %arg1: i32) -> (i32, i32, i32) {
    %c0_i32 = arith.constant 0 : i32
    %c0_i32_0 = arith.constant 0 : i32
    %c0_i32_1 = arith.constant 0 : i32
    return %arg0, %c0_i32, %c0_i32_0 : i32, i32, i32
  }
  func.func @transform_1(%arg0: i32, %arg1: i32) -> (i32, i32) {
    %c0_i32 = arith.constant 0 : i32
    %c0_i32_0 = arith.constant 0 : i32
    %c0_i32_1 = arith.constant 0 : i32
    return %c0_i32, %c0_i32_0 : i32, i32
  }
  func.func @transform_2(%arg0: i32, %arg1: i32) -> (i32, i32) {
    %c0_i32 = arith.constant 0 : i32
    %c0_i32_0 = arith.constant 0 : i32
    %c0_i32_1 = arith.constant 0 : i32
    return %c0_i32, %c0_i32_0 : i32, i32
  }
  func.func @transform_3(%arg0: i32, %arg1: i32) -> (i32, i32) {
    %c0_i32 = arith.constant 0 : i32
    %c0_i32_0 = arith.constant 0 : i32
    %c0_i32_1 = arith.constant 0 : i32
    return %c0_i32, %c0_i32_0 : i32, i32
  }
  func.func @transform_4(%arg0: i32, %arg1: i32) -> (i32, i32) {
    %c0_i32 = arith.constant 0 : i32
    %c0_i32_0 = arith.constant 0 : i32
    %c0_i32_1 = arith.constant 0 : i32
    return %c0_i32, %c0_i32_0 : i32, i32
  }
  func.func @transform_5(%arg0: i32, %arg1: i32) -> (i32, i32, i32) {
    %c0_i32 = arith.constant 0 : i32
    %c0_i32_0 = arith.constant 0 : i32
    return %arg0, %arg1, %c0_i32 : i32, i32, i32
  }
}

</mosaic_0001>

<llo_original>
// kernel: tpu_custom_call.1
$region0: #{tpu_custom_call.1}
  #allocation0 [shape = 'u32[]', space=smem, size = 0x4, offset = 0x4, fixed_abs, tag = 'smem constant byte address 0x4 - core index']
  #allocation1 [shape = 'u32[144,128]{1,0:T(1,128)}', space=vmem, size = 0x12000, scoped, tag = 'internal scratch']
  #allocation2 [shape = 'bf16[8,64]{1,0:T(8,128)(2,1)}', space=vmem, size = 0x800, scoped, tag = 'scratch operand']
  %s0 = inlined_call_operand.hbm [shape: bf16[2,8,32], index: 0, kind: input, shape index: {}]
  %s1 = inlined_call_operand.hbm [shape: bf16[32,96], index: 1, kind: input, shape index: {}]
  %s2 = inlined_call_operand.vmem [shape: f32[1,96], index: 2, kind: input, shape index: {}]
  %s3 = inlined_call_operand.hbm [shape: bf16[32,32], index: 3, kind: input, shape index: {}]
  %s4 = inlined_call_operand.vmem [shape: f32[1,32], index: 4, kind: input, shape index: {}]
  %s5 = inlined_call_operand.hbm [shape: f32[2,8,32], index: 5, kind: output, shape index: {}]
  %s6 = sld [smem:[#allocation0]]
  $region69: #{tpu_custom_call.1} parent=0
    _
  %s8 = ssub.s32 1, %s6
  %s9 = scalar_select 0, %s8, %s6
  $region1: #{tpu_custom_call.1} parent=0
    #allocation3 [shape = 'u8[4096]{0}', space=vmem, size = 0x1000, scoped, tag = 'input window, operand 0']
    #allocation4 [shape = 's32[2]{0}', space=sflag, size = 0x8, scoped, tag = 'scoped memory for tpu_custom_call.1']
    #allocation5 [shape = 's32[2]{0}', space=sflag, size = 0x8, scoped, tag = 'scoped memory for tpu_custom_call.1']
    #allocation6 [shape = 'u8[8192]{0}', space=vmem, size = 0x2000, scoped, tag = 'input window, operand 1, single buffered']
    #allocation7 [shape = 's32[1]{0}', space=sflag, size = 0x4, scoped, tag = 'scoped memory for tpu_custom_call.1']
    #allocation8 [shape = 'u8[8192]{0}', space=vmem, size = 0x2000, scoped, tag = 'input window, operand 3, single buffered']
    #allocation9 [shape = 'u8[8192]{0}', space=vmem, size = 0x2000, scoped, tag = 'output window, operand 0']
    %10 = vsyncpa [#allocation4], 0
    %s11 = scalar_lea.sflag [#allocation4], 1
    %12 = vsyncpa %s11, 0
    %13 = vsyncpa [#allocation7], 0
    %14 = vsyncpa [#allocation5], 0
    %s15 = scalar_lea.sflag [#allocation5], 1
    %16 = vsyncpa %s15, 0
    loop: start=0, step=1, limit=4
    $region2: #{tpu_custom_call.1} parent=1 // loop_pre_header
      _
    $region3: #{tpu_custom_call.1} parent=1 // loop_header
      %s18 = sphi 0, %s22
      %p19 = scmp.ge.s32.totalorder %s18, 4
      %s25 = sphi 0, %s37
      %s26 = sphi 0, %s33
      %s27 = sphi 0, %s25
      %s28 = sphi 0, %s26
      %s29 = sphi 0, %s27
      %s30 = sphi 0, %s28
      %s40 = sphi 0, %s42
      %s43 = sphi 0, %s40
      %s44 = sphi 0, %s43
      %s60 = sphi 0, %s44
      %s64 = sphi 0, %s64
      %s66 = sphi 0, %s64
      %s67 = sphi 0, %s66
      %s81 = sphi 0, %s67
      %s85 = sphi 0, %s85
      %s87 = sphi 0, %s85
      %s88 = sphi 0, %s87
      %s102 = sphi 0, %s88
      %s106 = sphi 0, %s106
      %s108 = sphi 0, %s106
      %s109 = sphi 0, %s108
      %s123 = sphi 0, %s109
      %s127 = sphi 0, %s127
      %s129 = sphi 0, %s127
      %s130 = sphi 0, %s129
      %s144 = sphi 0, %s130
      %s152 = sphi 0, %s154
      %s155 = sphi 0, %s152
      %s156 = sphi 0, %s155
      %s172 = sphi 0, %s156
    $region4: #{tpu_custom_call.1} parent=1 // loop_header_branch
      %21 = sbr.rel (%p19) target = $region8
    $region5: #{tpu_custom_call.1} parent=1 // loop_body
      %s23 = ssub.s32 %s18, 1
      %s24 = ssub.s32 %s18, 2
      %s31 = sadd.s32 1, %s26
      %p32 = scmp.ge.s32.totalorder %s31, 1
      %s33 = scalar_select %p32, 0, %s31
      %s34 = sadd.s32 1, %s25
      %s35 = scalar_select %p32, %s34, %s25
      %p36 = scmp.ge.s32.totalorder %s35, 2
      %s37 = scalar_select %p36, 0, %s35
      %s38 = ssub.s32 %s25, %s37
      %p39 = scmp.eq.s32.totalorder %s38, 0
      %s41 = sadd.s32 %s40, 1
      %s42 = scalar_select %p39, %s40, %s41
      %p45 = pneg %p39
      %p46 = scmp.eq.s32.totalorder %s18, 1
      %p47 = por %p45, %p46
      %p48 = scmp.ne.s32.totalorder %s40, %s43
      %p49 = scmp.eq.s32.totalorder %s18, 0
      %p50 = por %p48, %p49
      %p51 = scmp.ne.s32.totalorder %s40, %s43
      %p52 = scmp.eq.s32.totalorder %s23, 1
      %p53 = por %p51, %p52
      %p54 = scmp.ne.s32.totalorder %s43, %s44
      %p55 = scmp.eq.s32.totalorder %s23, 0
      %p56 = por %p54, %p55
      %p57 = scmp.ne.s32.totalorder %s43, %s44
      %p58 = scmp.eq.s32.totalorder %s24, 1
      %p59 = por %p57, %p58
      %p61 = scmp.ne.s32.totalorder %s44, %s60
      %p62 = scmp.eq.s32.totalorder %s24, 0
      %p63 = por %p61, %p62
      %s65 = sadd.s32 %s64, 1
      %p68 = scmp.eq.s32.totalorder %s18, 1
      %p69 = scmp.ne.s32.totalorder %s64, %s66
      %p70 = scmp.eq.s32.totalorder %s18, 0
      %p71 = por %p69, %p70
      %p72 = scmp.ne.s32.totalorder %s64, %s66
      %p73 = scmp.eq.s32.totalorder %s23, 1
      %p74 = por %p72, %p73
      %p75 = scmp.ne.s32.totalorder %s66, %s67
      %p76 = scmp.eq.s32.totalorder %s23, 0
      %p77 = por %p75, %p76
      %p78 = scmp.ne.s32.totalorder %s66, %s67
      %p79 = scmp.eq.s32.totalorder %s24, 1
      %p80 = por %p78, %p79
      %p82 = scmp.ne.s32.totalorder %s67, %s81
      %p83 = scmp.eq.s32.totalorder %s24, 0
      %p84 = por %p82, %p83
      %s86 = sadd.s32 %s85, 1
      %p89 = scmp.eq.s32.totalorder %s18, 1
      %p90 = scmp.ne.s32.totalorder %s85, %s87
      %p91 = scmp.eq.s32.totalorder %s18, 0
      %p92 = por %p90, %p91
      %p93 = scmp.ne.s32.totalorder %s85, %s87
      %p94 = scmp.eq.s32.totalorder %s23, 1
      %p95 = por %p93, %p94
      %p96 = scmp.ne.s32.totalorder %s87, %s88
      %p97 = scmp.eq.s32.totalorder %s23, 0
      %p98 = por %p96, %p97
      %p99 = scmp.ne.s32.totalorder %s87, %s88
      %p100 = scmp.eq.s32.totalorder %s24, 1
      %p101 = por %p99, %p100
      %p103 = scmp.ne.s32.totalorder %s88, %s102
      %p104 = scmp.eq.s32.totalorder %s24, 0
      %p105 = por %p103, %p104
      %s107 = sadd.s32 %s106, 1
      %p110 = scmp.eq.s32.totalorder %s18, 1
      %p111 = scmp.ne.s32.totalorder %s106, %s108
      %p112 = scmp.eq.s32.totalorder %s18, 0
      %p113 = por %p111, %p112
      %p114 = scmp.ne.s32.totalorder %s106, %s108
      %p115 = scmp.eq.s32.totalorder %s23, 1
      %p116 = por %p114, %p115
      %p117 = scmp.ne.s32.totalorder %s108, %s109
      %p118 = scmp.eq.s32.totalorder %s23, 0
      %p119 = por %p117, %p118
      %p120 = scmp.ne.s32.totalorder %s108, %s109
      %p121 = scmp.eq.s32.totalorder %s24, 1
      %p122 = por %p120, %p121
      %p124 = scmp.ne.s32.totalorder %s109, %s123
      %p125 = scmp.eq.s32.totalorder %s24, 0
      %p126 = por %p124, %p125
      %s128 = sadd.s32 %s127, 1
      %p131 = scmp.eq.s32.totalorder %s18, 1
      %p132 = scmp.ne.s32.totalorder %s127, %s129
      %p133 = scmp.eq.s32.totalorder %s18, 0
      %p134 = por %p132, %p133
      %p135 = scmp.ne.s32.totalorder %s127, %s129
      %p136 = scmp.eq.s32.totalorder %s23, 1
      %p137 = por %p135, %p136
      %p138 = scmp.ne.s32.totalorder %s129, %s130
      %p139 = scmp.eq.s32.totalorder %s23, 0
      %p140 = por %p138, %p139
      %p141 = scmp.ne.s32.totalorder %s129, %s130
      %p142 = scmp.eq.s32.totalorder %s24, 1
      %p143 = por %p141, %p142
      %p145 = scmp.ne.s32.totalorder %s130, %s144
      %p146 = scmp.eq.s32.totalorder %s24, 0
      %p147 = por %p145, %p146
      %s148 = ssub.s32 %s25, %s37
      %s149 = ssub.s32 %s26, %s33
      %s150 = sor.u32 %s148, %s149
      %p151 = scmp.eq.s32.totalorder %s150, 0
      %s153 = sadd.s32 %s152, 1
      %s154 = scalar_select %p151, %s152, %s153
      %p157 = pneg %p151
      %p158 = scmp.eq.s32.totalorder %s18, 1
      %p159 = por %p157, %p158
      %p160 = scmp.ne.s32.totalorder %s152, %s155
      %p161 = scmp.eq.s32.totalorder %s18, 0
      %p162 = por %p160, %p161
      %p163 = scmp.ne.s32.totalorder %s152, %s155
      %p164 = scmp.eq.s32.totalorder %s23, 1
      %p165 = por %p163, %p164
      %p166 = scmp.ne.s32.totalorder %s155, %s156
      %p167 = scmp.eq.s32.totalorder %s23, 0
      %p168 = por %p166, %p167
      %p169 = scmp.ne.s32.totalorder %s155, %s156
      %p170 = scmp.eq.s32.totalorder %s24, 1
      %p171 = por %p169, %p170
      %p173 = scmp.ne.s32.totalorder %s156, %s172
      %p174 = scmp.eq.s32.totalorder %s24, 0
      %p175 = por %p173, %p174
      %p176 = scmp.le.s32.totalorder 1, %s18
      %p177 = scmp.lt.s32.totalorder %s18, 3
      %p178 = pnand %p176, %p177
      %p179 = pneg %p178
      // Predicated region
      $region9: #{tpu_custom_call.1} parent=5 // pred_check
        _
      $region10: #{tpu_custom_call.1} parent=5 // pred_check_branch
        %181 = sbr.rel (%p178) target = $region12
      $region11: #{tpu_custom_call.1} parent=5 // pred_region
        %s182 = ssub.s32 %s18, 1
        // Predicated region
        $region13: #{tpu_custom_call.1} parent=11 // pred_check
          %p183 = pneg %p77
        $region14: #{tpu_custom_call.1} parent=11 // pred_check_branch
          %185 = sbr.rel (%p183) target = $region16
        $region15: #{tpu_custom_call.1} parent=11 // pred_region
          %s187 = ssub.s32 256, 256
          %188 = vsyncadd [#allocation7], %s187
          %s189 = sshll.u32 [#allocation6], 4
          %s190 = int_to_ptr.vmem [resolvable:$true] %s189
          %195 = dma.hbm_to_vmem [thread:$0]  %s1, 256, %s190, [#allocation7], 64, 64, 4
        $region16: #{tpu_custom_call.1} parent=11 // pred_fallthru
          _
        // Predicated region
        $region17: #{tpu_custom_call.1} parent=11 // pred_check
          %p196 = pneg %p98
        $region18: #{tpu_custom_call.1} parent=11 // pred_check_branch
          %198 = sbr.rel (%p196) target = $region20
        $region19: #{tpu_custom_call.1} parent=11 // pred_region
          _
        $region20: #{tpu_custom_call.1} parent=11 // pred_fallthru
          _
        // Predicated region
        $region21: #{tpu_custom_call.1} parent=11 // pred_check
          %p199 = pneg %p119
        $region22: #{tpu_custom_call.1} parent=11 // pred_check_branch
          %201 = sbr.rel (%p199) target = $region24
        $region23: #{tpu_custom_call.1} parent=11 // pred_region
          %s203 = ssub.s32 256, 256
          %204 = vsyncadd [#allocation7], %s203
          %s205 = sshll.u32 [#allocation8], 4
          %s206 = int_to_ptr.vmem [resolvable:$true] %s205
          %211 = dma.hbm_to_vmem [thread:$0]  %s3, 256, %s206, [#allocation7], 64, 64, 4
        $region24: #{tpu_custom_call.1} parent=11 // pred_fallthru
          _
        // Predicated region
        $region25: #{tpu_custom_call.1} parent=11 // pred_check
          %p212 = pneg %p140
        $region26: #{tpu_custom_call.1} parent=11 // pred_check_branch
          %214 = sbr.rel (%p212) target = $region28
        $region27: #{tpu_custom_call.1} parent=11 // pred_region
          _
        $region28: #{tpu_custom_call.1} parent=11 // pred_fallthru
          _
      $region12: #{tpu_custom_call.1} parent=5 // pred_fallthru
        _
      %p215 = scmp.lt.s32.totalorder %s18, 2
      // Predicated region
      $region29: #{tpu_custom_call.1} parent=5 // pred_check
        %p216 = pneg %p215
      $region30: #{tpu_custom_call.1} parent=5 // pred_check_branch
        %218 = sbr.rel (%p216) target = $region32
      $region31: #{tpu_custom_call.1} parent=5 // pred_region
        // Predicated region
        $region33: #{tpu_custom_call.1} parent=31 // pred_check
          %p219 = pneg %p50
        $region34: #{tpu_custom_call.1} parent=31 // pred_check_branch
          %221 = sbr.rel (%p219) target = $region36
        $region35: #{tpu_custom_call.1} parent=31 // pred_region
          %s222 = sand.u32 %s40, 1
          %s223 = scalar_lea.sflag [#allocation4], %s222
          %s224 = sand.u32 %s40, 1
          %s225 = smul.addr %s224, 4
          %s226 = scalar_lea.vmem [#allocation3], %s225
          %s228 = ssub.s32 64, 64
          %229 = vsyncadd %s223, %s228
          %s230 = smul.addr %s25, 64
          %s231 = scalar_lea.hbm %s0, %s230
          %s233 = sshll.u32 %s226, 4
          %s234 = int_to_ptr.vmem [resolvable:$true] %s233
          %236 = dma.hbm_to_vmem [thread:$0]  %s231, 64, %s234, %s223
        $region36: #{tpu_custom_call.1} parent=31 // pred_fallthru
          _
      $region32: #{tpu_custom_call.1} parent=5 // pred_fallthru
        _
      %p237 = scmp.le.s32.totalorder 1, %s18
      %p238 = scmp.lt.s32.totalorder %s18, 3
      %p239 = pnand %p237, %p238
      %p240 = pneg %p239
      // Predicated region
      $region37: #{tpu_custom_call.1} parent=5 // pred_check
        _
      $region38: #{tpu_custom_call.1} parent=5 // pred_check_branch
        %242 = sbr.rel (%p239) target = $region40
      $region39: #{tpu_custom_call.1} parent=5 // pred_region
        %s243 = ssub.s32 %s18, 1
        %s244 = sand.u32 %s43, 1
        %s245 = scalar_lea.sflag [#allocation4], %s244
        %s246 = sand.u32 %s43, 1
        %s247 = smul.addr %s246, 4
        %s248 = scalar_lea.vmem [#allocation3], %s247
        // Predicated region
        $region41: #{tpu_custom_call.1} parent=39 // pred_check
          %p249 = pneg %p56
        $region42: #{tpu_custom_call.1} parent=39 // pred_check_branch
          %251 = sbr.rel (%p249) target = $region44
        $region43: #{tpu_custom_call.1} parent=39 // pred_region
          %252 = dma.done %s245, 64
        $region44: #{tpu_custom_call.1} parent=39 // pred_fallthru
          _
        // Predicated region
        $region45: #{tpu_custom_call.1} parent=39 // pred_check
          %p253 = pneg %p77
        $region46: #{tpu_custom_call.1} parent=39 // pred_check_branch
          %255 = sbr.rel (%p253) target = $region48
        $region47: #{tpu_custom_call.1} parent=39 // pred_region
          %256 = dma.done [#allocation7], 256
        $region48: #{tpu_custom_call.1} parent=39 // pred_fallthru
          _
        // Predicated region
        $region49: #{tpu_custom_call.1} parent=39 // pred_check
          %p257 = pneg %p119
        $region50: #{tpu_custom_call.1} parent=39 // pred_check_branch
          %259 = sbr.rel (%p257) target = $region52
        $region51: #{tpu_custom_call.1} parent=39 // pred_region
          %260 = dma.done [#allocation7], 256
        $region52: #{tpu_custom_call.1} parent=39 // pred_fallthru
          _
        %s261 = sand.u32 %s43, 1
        %s262 = scalar_lea.sflag [#allocation4], %s261
        %s263 = sand.u32 %s43, 1
        %s264 = smul.addr %s263, 4
        %s265 = scalar_lea.vmem [#allocation3], %s264
        %p266 = pneg %p56
        %p267 = pneg %p53
        %p268 = pneg %p77
        %p269 = pneg %p74
        %p270 = pneg %p98
        %p271 = pneg %p95
        %p272 = pneg %p119
        %p273 = pneg %p116
        %p274 = pneg %p140
        %p275 = pneg %p137
        %p276 = pneg %p168
        %p277 = pneg %p165
        %s278 = sand.u32 %s155, 1
        %s279 = scalar_lea.sflag [#allocation5], %s278
        %s280 = sand.u32 %s155, 1
        %s281 = smul.addr %s280, 8
        %s282 = scalar_lea.vmem [#allocation9], %s281
        %p284 = scmp.eq.s32.totalorder %s28, 0
        // Predicated region
        $region53: #{tpu_custom_call.1} parent=39 // pred_check
          %p285 = pneg %p284
        $region54: #{tpu_custom_call.1} parent=39 // pred_check_branch
          %287 = sbr.rel (%p285) target = $region56
        $region55: #{tpu_custom_call.1} parent=39 // pred_region
          %v288 = vld [vmem:[%s248] sm:$0xf]
          %v289 = vld [vmem:[#allocation6] sm:$0xf]
          %v290 = vld [vmem:[#allocation6 + $0x4] sm:$0xf]
          %v291 = vld [vmem:[#allocation6 + $0x8] sm:$0xf]
          %v292 = vld [vmem:[#allocation6 + $0xc] sm:$0xf]
          %v293 = vld [vmem:[%s2] sm:$0x1]
          %v295 = vlaneseq
          %v296 = vshrl.u32 %v295, 7
          %v297 = vsub.s32 0, %v296
          %v298 = vrot.slane %v293, %v297
          %v303 = vunpack.c.l.b16 %v289
          %v304 = vunpack.c.l.b16 %v290
          %v305 = vunpack.c.l.b16 %v291
          %v306 = vunpack.c.l.b16 %v292
          %v307 = vpack.c.b16 %v304, %v303
          %v308 = vpack.c.b16 %v306, %v305
          %309 = vrot.lane.b32.xlu0 %v307, 96
          %v310 = vpop.permute.xlu0 %309
          %311 = vrot.lane.b32.xlu0 %v308, 96
          %v312 = vpop.permute.xlu0 %311
          %315 = vrot.lane.b32.xlu0 %v298, 96
          %v316 = vpop.permute.xlu0 %315
          %vm318 = vcmask 261120
          %v320 = vsel %vm318, %v288, 0
          %322 = vmatprep.subr.bf16.mxu0 0
          %323 = vmatpush1.bf16.msra.mxu0 0
          %324 = vmatprep.subr.bf16.mxu0 0
          %325 = vmatpush1.bf16.msra.mxu0 0
          %326 = vmatprep.subr.bf16.mxu0 0
          %327 = vmatpush1.bf16.msra.mxu0 0
          %328 = vmatprep.subr.bf16.mxu0 0
          %329 = vmatpush1.bf16.msra.mxu0 0
          %330 = vmatprep.subr.bf16.mxu0 0
          %331 = vmatpush1.bf16.msra.mxu0 0
          %332 = vmatprep.subr.bf16.mxu0 0
          %333 = vmatpush1.bf16.msra.mxu0 0
          %334 = vmatprep.subr.bf16.mxu0 0
          %335 = vmatpush1.bf16.msra.mxu0 %v312
          %336 = vmatprep.subr.bf16.mxu0 0
          %337 = vmatpush1.bf16.msra.mxu0 %v310
          %338 = vmatprep.subr.bf16.mxu0 0
          %339 = vmatpush2.bf16.msra.mxu0 0
          %340 = vmatprep.subr.bf16.mxu0 0
          %341 = vmatpush2.bf16.msra.mxu0 0
          %342 = vmatprep.subr.bf16.mxu0 0
          %343 = vmatpush2.bf16.msra.mxu0 0
          %344 = vmatprep.subr.bf16.mxu0 0
          %345 = vmatpush2.bf16.msra.mxu0 0
          %346 = vmatprep.subr.bf16.mxu0 0
          %347 = vmatpush2.bf16.msra.mxu0 0
          %348 = vmatprep.subr.bf16.mxu0 0
          %349 = vmatpush2.bf16.msra.mxu0 0
          %350 = vmatprep.subr.bf16.mxu0 0
          %351 = vmatpush2.bf16.msra.mxu0 0
          %352 = vmatprep.subr.bf16.mxu0 0
          %353 = vmatpush2.bf16.msra.mxu0 0
          %354 = vmatprep.mubr.bf16.mxu0 0
          %355 = vmatmul.mubr.bf16.gmra.mxu0 %v320
          %v356 = vpop.f32.mrf.mxu0
          %v357 = vadd.f32 %v316, %v356
          %v358 = vpop.f32.mrf.mxu0
          %v359 = vpop.f32.mrf.mxu0
          %v360 = vpop.f32.mrf.mxu0
          %361 = vdwg.mxu0
          %v362 = vpack.c.bf16 %v357, %v357
          %vm363 = vcmask 519168
          %364 = vst.msk [vmem:[#allocation2] sm:$0xf] %vm363, %v362
        $region56: #{tpu_custom_call.1} parent=39 // pred_fallthru
          _
        %s365 = smul.u32 %s28, 8
        %s366 = sshra.s32 %s365, 3
        %s367 = sand.u32 %s365, 7
        %s368 = smul.addr %s366, 4
        %s369 = scalar_lea.vmem %s248, %s368 [#allocation3]
        %v370 = vld [vmem:[%s369] sm:$0xf]
        %v371 = vld [vmem:[#allocation6] sm:$0xf]
        %v372 = vld [vmem:[#allocation6 + $0x4] sm:$0xf]
        %v373 = vld [vmem:[#allocation6 + $0x8] sm:$0xf]
        %v374 = vld [vmem:[#allocation6 + $0xc] sm:$0xf]
        %v375 = vld [vmem:[%s2] sm:$0x1]
        %v377 = vlaneseq
        %v378 = vshrl.u32 %v377, 7
        %v379 = vsub.s32 0, %v378
        %v380 = vrot.slane %v375, %v379
        %v386 = vunpack.c.l.b16 %v371
        %v387 = vunpack.c.l.b16 %v372
        %v388 = vunpack.c.l.b16 %v373
        %v389 = vunpack.c.l.b16 %v374
        %v390 = vpack.c.b16 %v387, %v386
        %v391 = vpack.c.b16 %v389, %v388
        %vm394 = vcmask 261120
        %v396 = vsel %vm394, %v370, 0
        %398 = vmatprep.subr.bf16.mxu0 0
        %399 = vmatpush1.bf16.msra.mxu0 0
        %400 = vmatprep.subr.bf16.mxu0 0
        %401 = vmatpush1.bf16.msra.mxu0 0
        %402 = vmatprep.subr.bf16.mxu0 0
        %403 = vmatpush1.bf16.msra.mxu0 0
        %404 = vmatprep.subr.bf16.mxu0 0
        %405 = vmatpush1.bf16.msra.mxu0 0
        %406 = vmatprep.subr.bf16.mxu0 0
        %407 = vmatpush1.bf16.msra.mxu0 0
        %408 = vmatprep.subr.bf16.mxu0 0
        %409 = vmatpush1.bf16.msra.mxu0 0
        %410 = vmatprep.subr.bf16.mxu0 0
        %411 = vmatpush1.bf16.msra.mxu0 %v391
        %412 = vmatprep.subr.bf16.mxu0 0
        %413 = vmatpush1.bf16.msra.mxu0 %v390
        %414 = vmatprep.subr.bf16.mxu0 0
        %415 = vmatpush2.bf16.msra.mxu0 0
        %416 = vmatprep.subr.bf16.mxu0 0
        %417 = vmatpush2.bf16.msra.mxu0 0
        %418 = vmatprep.subr.bf16.mxu0 0
        %419 = vmatpush2.bf16.msra.mxu0 0
        %420 = vmatprep.subr.bf16.mxu0 0
        %421 = vmatpush2.bf16.msra.mxu0 0
        %422 = vmatprep.subr.bf16.mxu0 0
        %423 = vmatpush2.bf16.msra.mxu0 0
        %424 = vmatprep.subr.bf16.mxu0 0
        %425 = vmatpush2.bf16.msra.mxu0 0
        %426 = vmatprep.subr.bf16.mxu0 0
        %427 = vmatpush2.bf16.msra.mxu0 0
        %428 = vmatprep.subr.bf16.mxu0 0
        %429 = vmatpush2.bf16.msra.mxu0 0
        %430 = vmatprep.mubr.bf16.mxu0 0
        %431 = vmatmul.mubr.bf16.gmra.mxu0 %v396
        %v432 = vpop.f32.mrf.mxu0
        %v433 = vadd.f32 %v380, %v432
        %v434 = vpop.f32.mrf.mxu0
        %v435 = vpop.f32.mrf.mxu0
        %v436 = vpop.f32.mrf.mxu0
        %437 = vdwg.mxu0
        %v438 = vmul.f32 %v433, 0.5
        %v439 = vpack.c.bf16 %v438, %v438
        %v440 = vld [vmem:[#allocation2] sm:$0xf]
        %vm441 = vcmask 31744
        %v443 = vsel %vm441, %v439, 0
        %v446 = vsel %vm441, %v440, 0
        %448 = vmatprep.subr.bf16.mxu0 0
        %449 = vmatpush1.bf16.xpose.msra.mxu0 0
        %450 = vmatprep.subr.bf16.mxu0 0
        %451 = vmatpush1.bf16.xpose.msra.mxu0 0
        %452 = vmatprep.subr.bf16.mxu0 0
        %453 = vmatpush1.bf16.xpose.msra.mxu0 0
        %454 = vmatprep.subr.bf16.mxu0 0
        %455 = vmatpush1.bf16.xpose.msra.mxu0 0
        %456 = vmatprep.subr.bf16.mxu0 0
        %457 = vmatpush1.bf16.xpose.msra.mxu0 0
        %458 = vmatprep.subr.bf16.mxu0 0
        %459 = vmatpush1.bf16.xpose.msra.mxu0 0
        %460 = vmatprep.subr.bf16.mxu0 0
        %461 = vmatpush1.bf16.xpose.msra.mxu0 0
        %462 = vmatprep.subr.bf16.mxu0 0
        %463 = vmatpush1.bf16.xpose.msra.mxu0 %v446
        %464 = vmatprep.subr.bf16.mxu0 0
        %465 = vmatpush2.bf16.xpose.msra.mxu0 0
        %466 = vmatprep.subr.bf16.mxu0 0
        %467 = vmatpush2.bf16.xpose.msra.mxu0 0
        %468 = vmatprep.subr.bf16.mxu0 0
        %469 = vmatpush2.bf16.xpose.msra.mxu0 0
        %470 = vmatprep.subr.bf16.mxu0 0
        %471 = vmatpush2.bf16.xpose.msra.mxu0 0
        %472 = vmatprep.subr.bf16.mxu0 0
        %473 = vmatpush2.bf16.xpose.msra.mxu0 0
        %474 = vmatprep.subr.bf16.mxu0 0
        %475 = vmatpush2.bf16.xpose.msra.mxu0 0
        %476 = vmatprep.subr.bf16.mxu0 0
        %477 = vmatpush2.bf16.xpose.msra.mxu0 0
        %478 = vmatprep.subr.bf16.mxu0 0
        %479 = vmatpush2.bf16.xpose.msra.mxu0 0
        %480 = vmatprep.mubr.bf16.mxu0 0
        %481 = vmatmul.mubr.bf16.gmra.mxu0 %v443
        %v482 = vpop.f32.mrf.mxu0
        %v483 = vadd.f32 0.0, %v482
        %v484 = vpop.f32.mrf.mxu0
        %v485 = vpop.f32.mrf.mxu0
        %v486 = vpop.f32.mrf.mxu0
        %487 = vdwg.mxu0
        %vm488 = vcmask 64512
        %v489 = vsel %vm488, %v483, -inf
        %490 = vmax.xlane.f32.xlu0 %v489
        %v491 = vpop.xlane.xlu0 %490
        %v492 = vsub.f32 %v483, %v491
        %v493 = vmul.f32 %v492, 1.442695
        %v494 = vpow.pop %v493
        %v495 = vsel %vm488, %v494, 0.0
        %496 = vadd.xlane.f32.xlu0 %v495
        %v497 = vpop.xlane.xlu0 %496
        %v498 = vrcp.pop %v497
        %v499 = vmul.f32 %v494, %v498
        %v500 = vpack.c.bf16 %v499, %v499
        %v502 = vunpack.c.l.b16 %v440
        %v503 = vpack.c.b16 %v502, %v502
        %504 = vrot.lane.b32.xlu0 %v503, 96
        %v505 = vpop.permute.xlu0 %504
        %v507 = vsel %vm488, %v500, 0
        %vm509 = vcmask 1043456
        %v511 = vsel %vm509, %v505, 0
        %513 = vmatprep.subr.bf16.mxu0 0
        %514 = vmatpush1.bf16.msra.mxu0 0
        %515 = vmatprep.subr.bf16.mxu0 0
        %516 = vmatpush1.bf16.msra.mxu0 0
        %517 = vmatprep.subr.bf16.mxu0 0
        %518 = vmatpush1.bf16.msra.mxu0 0
        %519 = vmatprep.subr.bf16.mxu0 0
        %520 = vmatpush1.bf16.msra.mxu0 0
        %521 = vmatprep.subr.bf16.mxu0 0
        %522 = vmatpush1.bf16.msra.mxu0 0
        %523 = vmatprep.subr.bf16.mxu0 0
        %524 = vmatpush1.bf16.msra.mxu0 0
        %525 = vmatprep.subr.bf16.mxu0 0
        %526 = vmatpush1.bf16.msra.mxu0 0
        %527 = vmatprep.subr.bf16.mxu0 0
        %528 = vmatpush1.bf16.msra.mxu0 %v511
        %529 = vmatprep.subr.bf16.mxu0 0
        %530 = vmatpush2.bf16.msra.mxu0 0
        %531 = vmatprep.subr.bf16.mxu0 0
        %532 = vmatpush2.bf16.msra.mxu0 0
        %533 = vmatprep.subr.bf16.mxu0 0
        %534 = vmatpush2.bf16.msra.mxu0 0
        %535 = vmatprep.subr.bf16.mxu0 0
        %536 = vmatpush2.bf16.msra.mxu0 0
        %537 = vmatprep.subr.bf16.mxu0 0
        %538 = vmatpush2.bf16.msra.mxu0 0
        %539 = vmatprep.subr.bf16.mxu0 0
        %540 = vmatpush2.bf16.msra.mxu0 0
        %541 = vmatprep.subr.bf16.mxu0 0
        %542 = vmatpush2.bf16.msra.mxu0 0
        %543 = vmatprep.subr.bf16.mxu0 0
        %544 = vmatpush2.bf16.msra.mxu0 0
        %545 = vmatprep.mubr.bf16.mxu0 0
        %546 = vmatmul.mubr.bf16.gmra.mxu0 %v507
        %v547 = vpop.f32.mrf.mxu0
        %v548 = vadd.f32 0.0, %v547
        %v549 = vpop.f32.mrf.mxu0
        %v550 = vpop.f32.mrf.mxu0
        %v551 = vpop.f32.mrf.mxu0
        %552 = vdwg.mxu0
        %v553 = vpack.c.bf16 %v548, %v548
        %555 = vrot.lane.b32.xlu0 %v439, 124
        %v556 = vpop.permute.xlu0 %555
        %557 = vrot.lane.b32.xlu0 %v503, 124
        %v558 = vpop.permute.xlu0 %557
        %v560 = vsel %vm441, %v556, 0
        %v563 = vsel %vm441, %v558, 0
        %565 = vmatprep.subr.bf16.mxu0 0
        %566 = vmatpush1.bf16.xpose.msra.mxu0 0
        %567 = vmatprep.subr.bf16.mxu0 0
        %568 = vmatpush1.bf16.xpose.msra.mxu0 0
        %569 = vmatprep.subr.bf16.mxu0 0
        %570 = vmatpush1.bf16.xpose.msra.mxu0 0
        %571 = vmatprep.subr.bf16.mxu0 0
        %572 = vmatpush1.bf16.xpose.msra.mxu0 0
        %573 = vmatprep.subr.bf16.mxu0 0
        %574 = vmatpush1.bf16.xpose.msra.mxu0 0
        %575 = vmatprep.subr.bf16.mxu0 0
        %576 = vmatpush1.bf16.xpose.msra.mxu0 0
        %577 = vmatprep.subr.bf16.mxu0 0
        %578 = vmatpush1.bf16.xpose.msra.mxu0 0
        %579 = vmatprep.subr.bf16.mxu0 0
        %580 = vmatpush1.bf16.xpose.msra.mxu0 %v563
        %581 = vmatprep.subr.bf16.mxu0 0
        %582 = vmatpush2.bf16.xpose.msra.mxu0 0
        %583 = vmatprep.subr.bf16.mxu0 0
        %584 = vmatpush2.bf16.xpose.msra.mxu0 0
        %585 = vmatprep.subr.bf16.mxu0 0
        %586 = vmatpush2.bf16.xpose.msra.mxu0 0
        %587 = vmatprep.subr.bf16.mxu0 0
        %588 = vmatpush2.bf16.xpose.msra.mxu0 0
        %589 = vmatprep.subr.bf16.mxu0 0
        %590 = vmatpush2.bf16.xpose.msra.mxu0 0
        %591 = vmatprep.subr.bf16.mxu0 0
        %592 = vmatpush2.bf16.xpose.msra.mxu0 0
        %593 = vmatprep.subr.bf16.mxu0 0
        %594 = vmatpush2.bf16.xpose.msra.mxu0 0
        %595 = vmatprep.subr.bf16.mxu0 0
        %596 = vmatpush2.bf16.xpose.msra.mxu0 0
        %597 = vmatprep.mubr.bf16.mxu0 0
        %598 = vmatmul.mubr.bf16.gmra.mxu0 %v560
        %v599 = vpop.f32.mrf.mxu0
        %v600 = vadd.f32 0.0, %v599
        %v601 = vpop.f32.mrf.mxu0
        %v602 = vpop.f32.mrf.mxu0
        %v603 = vpop.f32.mrf.mxu0
        %604 = vdwg.mxu0
        %v605 = vsel %vm488, %v600, -inf
        %606 = vmax.xlane.f32.xlu0 %v605
        %v607 = vpop.xlane.xlu0 %606
        %v608 = vsub.f32 %v600, %v607
        %v609 = vmul.f32 %v608, 1.442695
        %v610 = vpow.pop %v609
        %v611 = vsel %vm488, %v610, 0.0
        %612 = vadd.xlane.f32.xlu0 %v611
        %v613 = vpop.xlane.xlu0 %612
        %v614 = vrcp.pop %v613
        %v615 = vmul.f32 %v610, %v614
        %v616 = vpack.c.bf16 %v615, %v615
        %617 = vrot.lane.b32.xlu0 %v503, 92
        %v618 = vpop.permute.xlu0 %617
        %v620 = vsel %vm488, %v616, 0
        %v623 = vsel %vm509, %v618, 0
        %625 = vmatprep.subr.bf16.mxu0 0
        %626 = vmatpush1.bf16.msra.mxu0 0
        %627 = vmatprep.subr.bf16.mxu0 0
        %628 = vmatpush1.bf16.msra.mxu0 0
        %629 = vmatprep.subr.bf16.mxu0 0
        %630 = vmatpush1.bf16.msra.mxu0 0
        %631 = vmatprep.subr.bf16.mxu0 0
        %632 = vmatpush1.bf16.msra.mxu0 0
        %633 = vmatprep.subr.bf16.mxu0 0
        %634 = vmatpush1.bf16.msra.mxu0 0
        %635 = vmatprep.subr.bf16.mxu0 0
        %636 = vmatpush1.bf16.msra.mxu0 0
        %637 = vmatprep.subr.bf16.mxu0 0
        %638 = vmatpush1.bf16.msra.mxu0 0
        %639 = vmatprep.subr.bf16.mxu0 0
        %640 = vmatpush1.bf16.msra.mxu0 %v623
        %641 = vmatprep.subr.bf16.mxu0 0
        %642 = vmatpush2.bf16.msra.mxu0 0
        %643 = vmatprep.subr.bf16.mxu0 0
        %644 = vmatpush2.bf16.msra.mxu0 0
        %645 = vmatprep.subr.bf16.mxu0 0
        %646 = vmatpush2.bf16.msra.mxu0 0
        %647 = vmatprep.subr.bf16.mxu0 0
        %648 = vmatpush2.bf16.msra.mxu0 0
        %649 = vmatprep.subr.bf16.mxu0 0
        %650 = vmatpush2.bf16.msra.mxu0 0
        %651 = vmatprep.subr.bf16.mxu0 0
        %652 = vmatpush2.bf16.msra.mxu0 0
        %653 = vmatprep.subr.bf16.mxu0 0
        %654 = vmatpush2.bf16.msra.mxu0 0
        %655 = vmatprep.subr.bf16.mxu0 0
        %656 = vmatpush2.bf16.msra.mxu0 0
        %657 = vmatprep.mubr.bf16.mxu0 0
        %658 = vmatmul.mubr.bf16.gmra.mxu0 %v620
        %v659 = vpop.f32.mrf.mxu0
        %v660 = vadd.f32 0.0, %v659
        %v661 = vpop.f32.mrf.mxu0
        %v662 = vpop.f32.mrf.mxu0
        %v663 = vpop.f32.mrf.mxu0
        %664 = vdwg.mxu0
        %v665 = vpack.c.bf16 %v660, %v660
        %666 = vrot.lane.b32.xlu0 %v439, 120
        %v667 = vpop.permute.xlu0 %666
        %668 = vrot.lane.b32.xlu0 %v503, 120
        %v669 = vpop.permute.xlu0 %668
        %v671 = vsel %vm441, %v667, 0
        %v674 = vsel %vm441, %v669, 0
        %676 = vmatprep.subr.bf16.mxu0 0
        %677 = vmatpush1.bf16.xpose.msra.mxu0 0
        %678 = vmatprep.subr.bf16.mxu0 0
        %679 = vmatpush1.bf16.xpose.msra.mxu0 0
        %680 = vmatprep.subr.bf16.mxu0 0
        %681 = vmatpush1.bf16.xpose.msra.mxu0 0
        %682 = vmatprep.subr.bf16.mxu0 0
        %683 = vmatpush1.bf16.xpose.msra.mxu0 0
        %684 = vmatprep.subr.bf16.mxu0 0
        %685 = vmatpush1.bf16.xpose.msra.mxu0 0
        %686 = vmatprep.subr.bf16.mxu0 0
        %687 = vmatpush1.bf16.xpose.msra.mxu0 0
        %688 = vmatprep.subr.bf16.mxu0 0
        %689 = vmatpush1.bf16.xpose.msra.mxu0 0
        %690 = vmatprep.subr.bf16.mxu0 0
        %691 = vmatpush1.bf16.xpose.msra.mxu0 %v674
        %692 = vmatprep.subr.bf16.mxu0 0
        %693 = vmatpush2.bf16.xpose.msra.mxu0 0
        %694 = vmatprep.subr.bf16.mxu0 0
        %695 = vmatpush2.bf16.xpose.msra.mxu0 0
        %696 = vmatprep.subr.bf16.mxu0 0
        %697 = vmatpush2.bf16.xpose.msra.mxu0 0
        %698 = vmatprep.subr.bf16.mxu0 0
        %699 = vmatpush2.bf16.xpose.msra.mxu0 0
        %700 = vmatprep.subr.bf16.mxu0 0
        %701 = vmatpush2.bf16.xpose.msra.mxu0 0
        %702 = vmatprep.subr.bf16.mxu0 0
        %703 = vmatpush2.bf16.xpose.msra.mxu0 0
        %704 = vmatprep.subr.bf16.mxu0 0
        %705 = vmatpush2.bf16.xpose.msra.mxu0 0
        %706 = vmatprep.subr.bf16.mxu0 0
        %707 = vmatpush2.bf16.xpose.msra.mxu0 0
        %708 = vmatprep.mubr.bf16.mxu0 0
        %709 = vmatmul.mubr.bf16.gmra.mxu0 %v671
        %v710 = vpop.f32.mrf.mxu0
        %v711 = vadd.f32 0.0, %v710
        %v712 = vpop.f32.mrf.mxu0
        %v713 = vpop.f32.mrf.mxu0
        %v714 = vpop.f32.mrf.mxu0
        %715 = vdwg.mxu0
        %v716 = vsel %vm488, %v711, -inf
        %717 = vmax.xlane.f32.xlu0 %v716
        %v718 = vpop.xlane.xlu0 %717
        %v719 = vsub.f32 %v711, %v718
        %v720 = vmul.f32 %v719, 1.442695
        %v721 = vpow.pop %v720
        %v722 = vsel %vm488, %v721, 0.0
        %723 = vadd.xlane.f32.xlu0 %v722
        %v724 = vpop.xlane.xlu0 %723
        %v725 = vrcp.pop %v724
        %v726 = vmul.f32 %v721, %v725
        %v727 = vpack.c.bf16 %v726, %v726
        %728 = vrot.lane.b32.xlu0 %v503, 88
        %v729 = vpop.permute.xlu0 %728
        %v731 = vsel %vm488, %v727, 0
        %v734 = vsel %vm509, %v729, 0
        %736 = vmatprep.subr.bf16.mxu0 0
        %737 = vmatpush1.bf16.msra.mxu0 0
        %738 = vmatprep.subr.bf16.mxu0 0
        %739 = vmatpush1.bf16.msra.mxu0 0
        %740 = vmatprep.subr.bf16.mxu0 0
        %741 = vmatpush1.bf16.msra.mxu0 0
        %742 = vmatprep.subr.bf16.mxu0 0
        %743 = vmatpush1.bf16.msra.mxu0 0
        %744 = vmatprep.subr.bf16.mxu0 0
        %745 = vmatpush1.bf16.msra.mxu0 0
        %746 = vmatprep.subr.bf16.mxu0 0
        %747 = vmatpush1.bf16.msra.mxu0 0
        %748 = vmatprep.subr.bf16.mxu0 0
        %749 = vmatpush1.bf16.msra.mxu0 0
        %750 = vmatprep.subr.bf16.mxu0 0
        %751 = vmatpush1.bf16.msra.mxu0 %v734
        %752 = vmatprep.subr.bf16.mxu0 0
        %753 = vmatpush2.bf16.msra.mxu0 0
        %754 = vmatprep.subr.bf16.mxu0 0
        %755 = vmatpush2.bf16.msra.mxu0 0
        %756 = vmatprep.subr.bf16.mxu0 0
        %757 = vmatpush2.bf16.msra.mxu0 0
        %758 = vmatprep.subr.bf16.mxu0 0
        %759 = vmatpush2.bf16.msra.mxu0 0
        %760 = vmatprep.subr.bf16.mxu0 0
        %761 = vmatpush2.bf16.msra.mxu0 0
        %762 = vmatprep.subr.bf16.mxu0 0
        %763 = vmatpush2.bf16.msra.mxu0 0
        %764 = vmatprep.subr.bf16.mxu0 0
        %765 = vmatpush2.bf16.msra.mxu0 0
        %766 = vmatprep.subr.bf16.mxu0 0
        %767 = vmatpush2.bf16.msra.mxu0 0
        %768 = vmatprep.mubr.bf16.mxu0 0
        %769 = vmatmul.mubr.bf16.gmra.mxu0 %v731
        %v770 = vpop.f32.mrf.mxu0
        %v771 = vadd.f32 0.0, %v770
        %v772 = vpop.f32.mrf.mxu0
        %v773 = vpop.f32.mrf.mxu0
        %v774 = vpop.f32.mrf.mxu0
        %775 = vdwg.mxu0
        %v776 = vpack.c.bf16 %v771, %v771
        %777 = vrot.lane.b32.xlu0 %v439, 116
        %v778 = vpop.permute.xlu0 %777
        %779 = vrot.lane.b32.xlu0 %v503, 116
        %v780 = vpop.permute.xlu0 %779
        %v782 = vsel %vm441, %v778, 0
        %v785 = vsel %vm441, %v780, 0
        %787 = vmatprep.subr.bf16.mxu0 0
        %788 = vmatpush1.bf16.xpose.msra.mxu0 0
        %789 = vmatprep.subr.bf16.mxu0 0
        %790 = vmatpush1.bf16.xpose.msra.mxu0 0
        %791 = vmatprep.subr.bf16.mxu0 0
        %792 = vmatpush1.bf16.xpose.msra.mxu0 0
        %793 = vmatprep.subr.bf16.mxu0 0
        %794 = vmatpush1.bf16.xpose.msra.mxu0 0
        %795 = vmatprep.subr.bf16.mxu0 0
        %796 = vmatpush1.bf16.xpose.msra.mxu0 0
        %797 = vmatprep.subr.bf16.mxu0 0
        %798 = vmatpush1.bf16.xpose.msra.mxu0 0
        %799 = vmatprep.subr.bf16.mxu0 0
        %800 = vmatpush1.bf16.xpose.msra.mxu0 0
        %801 = vmatprep.subr.bf16.mxu0 0
        %802 = vmatpush1.bf16.xpose.msra.mxu0 %v785
        %803 = vmatprep.subr.bf16.mxu0 0
        %804 = vmatpush2.bf16.xpose.msra.mxu0 0
        %805 = vmatprep.subr.bf16.mxu0 0
        %806 = vmatpush2.bf16.xpose.msra.mxu0 0
        %807 = vmatprep.subr.bf16.mxu0 0
        %808 = vmatpush2.bf16.xpose.msra.mxu0 0
        %809 = vmatprep.subr.bf16.mxu0 0
        %810 = vmatpush2.bf16.xpose.msra.mxu0 0
        %811 = vmatprep.subr.bf16.mxu0 0
        %812 = vmatpush2.bf16.xpose.msra.mxu0 0
        %813 = vmatprep.subr.bf16.mxu0 0
        %814 = vmatpush2.bf16.xpose.msra.mxu0 0
        %815 = vmatprep.subr.bf16.mxu0 0
        %816 = vmatpush2.bf16.xpose.msra.mxu0 0
        %817 = vmatprep.subr.bf16.mxu0 0
        %818 = vmatpush2.bf16.xpose.msra.mxu0 0
        %819 = vmatprep.mubr.bf16.mxu0 0
        %820 = vmatmul.mubr.bf16.gmra.mxu0 %v782
        %v821 = vpop.f32.mrf.mxu0
        %v822 = vadd.f32 0.0, %v821
        %v823 = vpop.f32.mrf.mxu0
        %v824 = vpop.f32.mrf.mxu0
        %v825 = vpop.f32.mrf.mxu0
        %826 = vdwg.mxu0
        %v827 = vsel %vm488, %v822, -inf
        %828 = vmax.xlane.f32.xlu0 %v827
        %v829 = vpop.xlane.xlu0 %828
        %v830 = vsub.f32 %v822, %v829
        %v831 = vmul.f32 %v830, 1.442695
        %v832 = vpow.pop %v831
        %v833 = vsel %vm488, %v832, 0.0
        %834 = vadd.xlane.f32.xlu0 %v833
        %v835 = vpop.xlane.xlu0 %834
        %v836 = vrcp.pop %v835
        %v837 = vmul.f32 %v832, %v836
        %v838 = vpack.c.bf16 %v837, %v837
        %839 = vrot.lane.b32.xlu0 %v503, 84
        %v840 = vpop.permute.xlu0 %839
        %v842 = vsel %vm488, %v838, 0
        %v845 = vsel %vm509, %v840, 0
        %847 = vmatprep.subr.bf16.mxu0 0
        %848 = vmatpush1.bf16.msra.mxu0 0
        %849 = vmatprep.subr.bf16.mxu0 0
        %850 = vmatpush1.bf16.msra.mxu0 0
        %851 = vmatprep.subr.bf16.mxu0 0
        %852 = vmatpush1.bf16.msra.mxu0 0
        %853 = vmatprep.subr.bf16.mxu0 0
        %854 = vmatpush1.bf16.msra.mxu0 0
        %855 = vmatprep.subr.bf16.mxu0 0
        %856 = vmatpush1.bf16.msra.mxu0 0
        %857 = vmatprep.subr.bf16.mxu0 0
        %858 = vmatpush1.bf16.msra.mxu0 0
        %859 = vmatprep.subr.bf16.mxu0 0
        %860 = vmatpush1.bf16.msra.mxu0 0
        %861 = vmatprep.subr.bf16.mxu0 0
        %862 = vmatpush1.bf16.msra.mxu0 %v845
        %863 = vmatprep.subr.bf16.mxu0 0
        %864 = vmatpush2.bf16.msra.mxu0 0
        %865 = vmatprep.subr.bf16.mxu0 0
        %866 = vmatpush2.bf16.msra.mxu0 0
        %867 = vmatprep.subr.bf16.mxu0 0
        %868 = vmatpush2.bf16.msra.mxu0 0
        %869 = vmatprep.subr.bf16.mxu0 0
        %870 = vmatpush2.bf16.msra.mxu0 0
        %871 = vmatprep.subr.bf16.mxu0 0
        %872 = vmatpush2.bf16.msra.mxu0 0
        %873 = vmatprep.subr.bf16.mxu0 0
        %874 = vmatpush2.bf16.msra.mxu0 0
        %875 = vmatprep.subr.bf16.mxu0 0
        %876 = vmatpush2.bf16.msra.mxu0 0
        %877 = vmatprep.subr.bf16.mxu0 0
        %878 = vmatpush2.bf16.msra.mxu0 0
        %879 = vmatprep.mubr.bf16.mxu0 0
        %880 = vmatmul.mubr.bf16.gmra.mxu0 %v842
        %v881 = vpop.f32.mrf.mxu0
        %v882 = vadd.f32 0.0, %v881
        %v883 = vpop.f32.mrf.mxu0
        %v884 = vpop.f32.mrf.mxu0
        %v885 = vpop.f32.mrf.mxu0
        %886 = vdwg.mxu0
        %v887 = vpack.c.bf16 %v882, %v882
        %888 = vrot.lane.b32.xlu0 %v439, 112
        %v889 = vpop.permute.xlu0 %888
        %890 = vrot.lane.b32.xlu0 %v503, 112
        %v891 = vpop.permute.xlu0 %890
        %v893 = vsel %vm441, %v889, 0
        %v896 = vsel %vm441, %v891, 0
        %898 = vmatprep.subr.bf16.mxu0 0
        %899 = vmatpush1.bf16.xpose.msra.mxu0 0
        %900 = vmatprep.subr.bf16.mxu0 0
        %901 = vmatpush1.bf16.xpose.msra.mxu0 0
        %902 = vmatprep.subr.bf16.mxu0 0
        %903 = vmatpush1.bf16.xpose.msra.mxu0 0
        %904 = vmatprep.subr.bf16.mxu0 0
        %905 = vmatpush1.bf16.xpose.msra.mxu0 0
        %906 = vmatprep.subr.bf16.mxu0 0
        %907 = vmatpush1.bf16.xpose.msra.mxu0 0
        %908 = vmatprep.subr.bf16.mxu0 0
        %909 = vmatpush1.bf16.xpose.msra.mxu0 0
        %910 = vmatprep.subr.bf16.mxu0 0
        %911 = vmatpush1.bf16.xpose.msra.mxu0 0
        %912 = vmatprep.subr.bf16.mxu0 0
        %913 = vmatpush1.bf16.xpose.msra.mxu0 %v896
        %914 = vmatprep.subr.bf16.mxu0 0
        %915 = vmatpush2.bf16.xpose.msra.mxu0 0
        %916 = vmatprep.subr.bf16.mxu0 0
        %917 = vmatpush2.bf16.xpose.msra.mxu0 0
        %918 = vmatprep.subr.bf16.mxu0 0
        %919 = vmatpush2.bf16.xpose.msra.mxu0 0
        %920 = vmatprep.subr.bf16.mxu0 0
        %921 = vmatpush2.bf16.xpose.msra.mxu0 0
        %922 = vmatprep.subr.bf16.mxu0 0
        %923 = vmatpush2.bf16.xpose.msra.mxu0 0
        %924 = vmatprep.subr.bf16.mxu0 0
        %925 = vmatpush2.bf16.xpose.msra.mxu0 0
        %926 = vmatprep.subr.bf16.mxu0 0
        %927 = vmatpush2.bf16.xpose.msra.mxu0 0
        %928 = vmatprep.subr.bf16.mxu0 0
        %929 = vmatpush2.bf16.xpose.msra.mxu0 0
        %930 = vmatprep.mubr.bf16.mxu0 0
        %931 = vmatmul.mubr.bf16.gmra.mxu0 %v893
        %v932 = vpop.f32.mrf.mxu0
        %v933 = vadd.f32 0.0, %v932
        %v934 = vpop.f32.mrf.mxu0
        %v935 = vpop.f32.mrf.mxu0
        %v936 = vpop.f32.mrf.mxu0
        %937 = vdwg.mxu0
        %v938 = vsel %vm488, %v933, -inf
        %939 = vmax.xlane.f32.xlu0 %v938
        %v940 = vpop.xlane.xlu0 %939
        %v941 = vsub.f32 %v933, %v940
        %v942 = vmul.f32 %v941, 1.442695
        %v943 = vpow.pop %v942
        %v944 = vsel %vm488, %v943, 0.0
        %945 = vadd.xlane.f32.xlu0 %v944
        %v946 = vpop.xlane.xlu0 %945
        %v947 = vrcp.pop %v946
        %v948 = vmul.f32 %v943, %v947
        %v949 = vpack.c.bf16 %v948, %v948
        %950 = vrot.lane.b32.xlu0 %v503, 80
        %v951 = vpop.permute.xlu0 %950
        %v953 = vsel %vm488, %v949, 0
        %v956 = vsel %vm509, %v951, 0
        %958 = vmatprep.subr.bf16.mxu0 0
        %959 = vmatpush1.bf16.msra.mxu0 0
        %960 = vmatprep.subr.bf16.mxu0 0
        %961 = vmatpush1.bf16.msra.mxu0 0
        %962 = vmatprep.subr.bf16.mxu0 0
        %963 = vmatpush1.bf16.msra.mxu0 0
        %964 = vmatprep.subr.bf16.mxu0 0
        %965 = vmatpush1.bf16.msra.mxu0 0
        %966 = vmatprep.subr.bf16.mxu0 0
        %967 = vmatpush1.bf16.msra.mxu0 0
        %968 = vmatprep.subr.bf16.mxu0 0
        %969 = vmatpush1.bf16.msra.mxu0 0
        %970 = vmatprep.subr.bf16.mxu0 0
        %971 = vmatpush1.bf16.msra.mxu0 0
        %972 = vmatprep.subr.bf16.mxu0 0
        %973 = vmatpush1.bf16.msra.mxu0 %v956
        %974 = vmatprep.subr.bf16.mxu0 0
        %975 = vmatpush2.bf16.msra.mxu0 0
        %976 = vmatprep.subr.bf16.mxu0 0
        %977 = vmatpush2.bf16.msra.mxu0 0
        %978 = vmatprep.subr.bf16.mxu0 0
        %979 = vmatpush2.bf16.msra.mxu0 0
        %980 = vmatprep.subr.bf16.mxu0 0
        %981 = vmatpush2.bf16.msra.mxu0 0
        %982 = vmatprep.subr.bf16.mxu0 0
        %983 = vmatpush2.bf16.msra.mxu0 0
        %984 = vmatprep.subr.bf16.mxu0 0
        %985 = vmatpush2.bf16.msra.mxu0 0
        %986 = vmatprep.subr.bf16.mxu0 0
        %987 = vmatpush2.bf16.msra.mxu0 0
        %988 = vmatprep.subr.bf16.mxu0 0
        %989 = vmatpush2.bf16.msra.mxu0 0
        %990 = vmatprep.mubr.bf16.mxu0 0
        %991 = vmatmul.mubr.bf16.gmra.mxu0 %v953
        %v992 = vpop.f32.mrf.mxu0
        %v993 = vadd.f32 0.0, %v992
        %v994 = vpop.f32.mrf.mxu0
        %v995 = vpop.f32.mrf.mxu0
        %v996 = vpop.f32.mrf.mxu0
        %997 = vdwg.mxu0
        %v998 = vpack.c.bf16 %v993, %v993
        %999 = vrot.lane.b32.xlu0 %v439, 108
        %v1000 = vpop.permute.xlu0 %999
        %1001 = vrot.lane.b32.xlu0 %v503, 108
        %v1002 = vpop.permute.xlu0 %1001
        %v1004 = vsel %vm441, %v1000, 0
        %v1007 = vsel %vm441, %v1002, 0
        %1009 = vmatprep.subr.bf16.mxu0 0
        %1010 = vmatpush1.bf16.xpose.msra.mxu0 0
        %1011 = vmatprep.subr.bf16.mxu0 0
        %1012 = vmatpush1.bf16.xpose.msra.mxu0 0
        %1013 = vmatprep.subr.bf16.mxu0 0
        %1014 = vmatpush1.bf16.xpose.msra.mxu0 0
        %1015 = vmatprep.subr.bf16.mxu0 0
        %1016 = vmatpush1.bf16.xpose.msra.mxu0 0
        %1017 = vmatprep.subr.bf16.mxu0 0
        %1018 = vmatpush1.bf16.xpose.msra.mxu0 0
        %1019 = vmatprep.subr.bf16.mxu0 0
        %1020 = vmatpush1.bf16.xpose.msra.mxu0 0
        %1021 = vmatprep.subr.bf16.mxu0 0
        %1022 = vmatpush1.bf16.xpose.msra.mxu0 0
        %1023 = vmatprep.subr.bf16.mxu0 0
        %1024 = vmatpush1.bf16.xpose.msra.mxu0 %v1007
        %1025 = vmatprep.subr.bf16.mxu0 0
        %1026 = vmatpush2.bf16.xpose.msra.mxu0 0
        %1027 = vmatprep.subr.bf16.mxu0 0
        %1028 = vmatpush2.bf16.xpose.msra.mxu0 0
        %1029 = vmatprep.subr.bf16.mxu0 0
        %1030 = vmatpush2.bf16.xpose.msra.mxu0 0
        %1031 = vmatprep.subr.bf16.mxu0 0
        %1032 = vmatpush2.bf16.xpose.msra.mxu0 0
        %1033 = vmatprep.subr.bf16.mxu0 0
        %1034 = vmatpush2.bf16.xpose.msra.mxu0 0
        %1035 = vmatprep.subr.bf16.mxu0 0
        %1036 = vmatpush2.bf16.xpose.msra.mxu0 0
        %1037 = vmatprep.subr.bf16.mxu0 0
        %1038 = vmatpush2.bf16.xpose.msra.mxu0 0
        %1039 = vmatprep.subr.bf16.mxu0 0
        %1040 = vmatpush2.bf16.xpose.msra.mxu0 0
        %1041 = vmatprep.mubr.bf16.mxu0 0
        %1042 = vmatmul.mubr.bf16.gmra.mxu0 %v1004
        %v1043 = vpop.f32.mrf.mxu0
        %v1044 = vadd.f32 0.0, %v1043
        %v1045 = vpop.f32.mrf.mxu0
        %v1046 = vpop.f32.mrf.mxu0
        %v1047 = vpop.f32.mrf.mxu0
        %1048 = vdwg.mxu0
        %v1049 = vsel %vm488, %v1044, -inf
        %1050 = vmax.xlane.f32.xlu0 %v1049
        %v1051 = vpop.xlane.xlu0 %1050
        %v1052 = vsub.f32 %v1044, %v1051
        %v1053 = vmul.f32 %v1052, 1.442695
        %v1054 = vpow.pop %v1053
        %v1055 = vsel %vm488, %v1054, 0.0
        %1056 = vadd.xlane.f32.xlu0 %v1055
        %v1057 = vpop.xlane.xlu0 %1056
        %v1058 = vrcp.pop %v1057
        %v1059 = vmul.f32 %v1054, %v1058
        %v1060 = vpack.c.bf16 %v1059, %v1059
        %1061 = vrot.lane.b32.xlu0 %v503, 76
        %v1062 = vpop.permute.xlu0 %1061
        %v1064 = vsel %vm488, %v1060, 0
        %v1067 = vsel %vm509, %v1062, 0
        %1069 = vmatprep.subr.bf16.mxu0 0
        %1070 = vmatpush1.bf16.msra.mxu0 0
        %1071 = vmatprep.subr.bf16.mxu0 0
        %1072 = vmatpush1.bf16.msra.mxu0 0
        %1073 = vmatprep.subr.bf16.mxu0 0
        %1074 = vmatpush1.bf16.msra.mxu0 0
        %1075 = vmatprep.subr.bf16.mxu0 0
        %1076 = vmatpush1.bf16.msra.mxu0 0
        %1077 = vmatprep.subr.bf16.mxu0 0
        %1078 = vmatpush1.bf16.msra.mxu0 0
        %1079 = vmatprep.subr.bf16.mxu0 0
        %1080 = vmatpush1.bf16.msra.mxu0 0
        %1081 = vmatprep.subr.bf16.mxu0 0
        %1082 = vmatpush1.bf16.msra.mxu0 0
        %1083 = vmatprep.subr.bf16.mxu0 0
        %1084 = vmatpush1.bf16.msra.mxu0 %v1067
        %1085 = vmatprep.subr.bf16.mxu0 0
        %1086 = vmatpush2.bf16.msra.mxu0 0
        %1087 = vmatprep.subr.bf16.mxu0 0
        %1088 = vmatpush2.bf16.msra.mxu0 0
        %1089 = vmatprep.subr.bf16.mxu0 0
        %1090 = vmatpush2.bf16.msra.mxu0 0
        %1091 = vmatprep.subr.bf16.mxu0 0
        %1092 = vmatpush2.bf16.msra.mxu0 0
        %1093 = vmatprep.subr.bf16.mxu0 0
        %1094 = vmatpush2.bf16.msra.mxu0 0
        %1095 = vmatprep.subr.bf16.mxu0 0
        %1096 = vmatpush2.bf16.msra.mxu0 0
        %1097 = vmatprep.subr.bf16.mxu0 0
        %1098 = vmatpush2.bf16.msra.mxu0 0
        %1099 = vmatprep.subr.bf16.mxu0 0
        %1100 = vmatpush2.bf16.msra.mxu0 0
        %1101 = vmatprep.mubr.bf16.mxu0 0
        %1102 = vmatmul.mubr.bf16.gmra.mxu0 %v1064
        %v1103 = vpop.f32.mrf.mxu0
        %v1104 = vadd.f32 0.0, %v1103
        %v1105 = vpop.f32.mrf.mxu0
        %v1106 = vpop.f32.mrf.mxu0
        %v1107 = vpop.f32.mrf.mxu0
        %1108 = vdwg.mxu0
        %v1109 = vpack.c.bf16 %v1104, %v1104
        %1110 = vrot.lane.b32.xlu0 %v439, 104
        %v1111 = vpop.permute.xlu0 %1110
        %1112 = vrot.lane.b32.xlu0 %v503, 104
        %v1113 = vpop.permute.xlu0 %1112
        %v1115 = vsel %vm441, %v1111, 0
        %v1118 = vsel %vm441, %v1113, 0
        %1120 = vmatprep.subr.bf16.mxu0 0
        %1121 = vmatpush1.bf16.xpose.msra.mxu0 0
        %1122 = vmatprep.subr.bf16.mxu0 0
        %1123 = vmatpush1.bf16.xpose.msra.mxu0 0
        %1124 = vmatprep.subr.bf16.mxu0 0
        %1125 = vmatpush1.bf16.xpose.msra.mxu0 0
        %1126 = vmatprep.subr.bf16.mxu0 0
        %1127 = vmatpush1.bf16.xpose.msra.mxu0 0
        %1128 = vmatprep.subr.bf16.mxu0 0
        %1129 = vmatpush1.bf16.xpose.msra.mxu0 0
        %1130 = vmatprep.subr.bf16.mxu0 0
        %1131 = vmatpush1.bf16.xpose.msra.mxu0 0
        %1132 = vmatprep.subr.bf16.mxu0 0
        %1133 = vmatpush1.bf16.xpose.msra.mxu0 0
        %1134 = vmatprep.subr.bf16.mxu0 0
        %1135 = vmatpush1.bf16.xpose.msra.mxu0 %v1118
        %1136 = vmatprep.subr.bf16.mxu0 0
        %1137 = vmatpush2.bf16.xpose.msra.mxu0 0
        %1138 = vmatprep.subr.bf16.mxu0 0
        %1139 = vmatpush2.bf16.xpose.msra.mxu0 0
        %1140 = vmatprep.subr.bf16.mxu0 0
        %1141 = vmatpush2.bf16.xpose.msra.mxu0 0
        %1142 = vmatprep.subr.bf16.mxu0 0
        %1143 = vmatpush2.bf16.xpose.msra.mxu0 0
        %1144 = vmatprep.subr.bf16.mxu0 0
        %1145 = vmatpush2.bf16.xpose.msra.mxu0 0
        %1146 = vmatprep.subr.bf16.mxu0 0
        %1147 = vmatpush2.bf16.xpose.msra.mxu0 0
        %1148 = vmatprep.subr.bf16.mxu0 0
        %1149 = vmatpush2.bf16.xpose.msra.mxu0 0
        %1150 = vmatprep.subr.bf16.mxu0 0
        %1151 = vmatpush2.bf16.xpose.msra.mxu0 0
        %1152 = vmatprep.mubr.bf16.mxu0 0
        %1153 = vmatmul.mubr.bf16.gmra.mxu0 %v1115
        %v1154 = vpop.f32.mrf.mxu0
        %v1155 = vadd.f32 0.0, %v1154
        %v1156 = vpop.f32.mrf.mxu0
        %v1157 = vpop.f32.mrf.mxu0
        %v1158 = vpop.f32.mrf.mxu0
        %1159 = vdwg.mxu0
        %v1160 = vsel %vm488, %v1155, -inf
        %1161 = vmax.xlane.f32.xlu0 %v1160
        %v1162 = vpop.xlane.xlu0 %1161
        %v1163 = vsub.f32 %v1155, %v1162
        %v1164 = vmul.f32 %v1163, 1.442695
        %v1165 = vpow.pop %v1164
        %v1166 = vsel %vm488, %v1165, 0.0
        %1167 = vadd.xlane.f32.xlu0 %v1166
        %v1168 = vpop.xlane.xlu0 %1167
        %v1169 = vrcp.pop %v1168
        %v1170 = vmul.f32 %v1165, %v1169
        %v1171 = vpack.c.bf16 %v1170, %v1170
        %1172 = vrot.lane.b32.xlu0 %v503, 72
        %v1173 = vpop.permute.xlu0 %1172
        %v1175 = vsel %vm488, %v1171, 0
        %v1178 = vsel %vm509, %v1173, 0
        %1180 = vmatprep.subr.bf16.mxu0 0
        %1181 = vmatpush1.bf16.msra.mxu0 0
        %1182 = vmatprep.subr.bf16.mxu0 0
        %1183 = vmatpush1.bf16.msra.mxu0 0
        %1184 = vmatprep.subr.bf16.mxu0 0
        %1185 = vmatpush1.bf16.msra.mxu0 0
        %1186 = vmatprep.subr.bf16.mxu0 0
        %1187 = vmatpush1.bf16.msra.mxu0 0
        %1188 = vmatprep.subr.bf16.mxu0 0
        %1189 = vmatpush1.bf16.msra.mxu0 0
        %1190 = vmatprep.subr.bf16.mxu0 0
        %1191 = vmatpush1.bf16.msra.mxu0 0
        %1192 = vmatprep.subr.bf16.mxu0 0
        %1193 = vmatpush1.bf16.msra.mxu0 0
        %1194 = vmatprep.subr.bf16.mxu0 0
        %1195 = vmatpush1.bf16.msra.mxu0 %v1178
        %1196 = vmatprep.subr.bf16.mxu0 0
        %1197 = vmatpush2.bf16.msra.mxu0 0
        %1198 = vmatprep.subr.bf16.mxu0 0
        %1199 = vmatpush2.bf16.msra.mxu0 0
        %1200 = vmatprep.subr.bf16.mxu0 0
        %1201 = vmatpush2.bf16.msra.mxu0 0
        %1202 = vmatprep.subr.bf16.mxu0 0
        %1203 = vmatpush2.bf16.msra.mxu0 0
        %1204 = vmatprep.subr.bf16.mxu0 0
        %1205 = vmatpush2.bf16.msra.mxu0 0
        %1206 = vmatprep.subr.bf16.mxu0 0
        %1207 = vmatpush2.bf16.msra.mxu0 0
        %1208 = vmatprep.subr.bf16.mxu0 0
        %1209 = vmatpush2.bf16.msra.mxu0 0
        %1210 = vmatprep.subr.bf16.mxu0 0
        %1211 = vmatpush2.bf16.msra.mxu0 0
        %1212 = vmatprep.mubr.bf16.mxu0 0
        %1213 = vmatmul.mubr.bf16.gmra.mxu0 %v1175
        %v1214 = vpop.f32.mrf.mxu0
        %v1215 = vadd.f32 0.0, %v1214
        %v1216 = vpop.f32.mrf.mxu0
        %v1217 = vpop.f32.mrf.mxu0
        %v1218 = vpop.f32.mrf.mxu0
        %1219 = vdwg.mxu0
        %v1220 = vpack.c.bf16 %v1215, %v1215
        %1221 = vrot.lane.b32.xlu0 %v439, 100
        %v1222 = vpop.permute.xlu0 %1221
        %1223 = vrot.lane.b32.xlu0 %v503, 100
        %v1224 = vpop.permute.xlu0 %1223
        %v1226 = vsel %vm441, %v1222, 0
        %v1229 = vsel %vm441, %v1224, 0
        %1231 = vmatprep.subr.bf16.mxu0 0
        %1232 = vmatpush1.bf16.xpose.msra.mxu0 0
        %1233 = vmatprep.subr.bf16.mxu0 0
        %1234 = vmatpush1.bf16.xpose.msra.mxu0 0
        %1235 = vmatprep.subr.bf16.mxu0 0
        %1236 = vmatpush1.bf16.xpose.msra.mxu0 0
        %1237 = vmatprep.subr.bf16.mxu0 0
        %1238 = vmatpush1.bf16.xpose.msra.mxu0 0
        %1239 = vmatprep.subr.bf16.mxu0 0
        %1240 = vmatpush1.bf16.xpose.msra.mxu0 0
        %1241 = vmatprep.subr.bf16.mxu0 0
        %1242 = vmatpush1.bf16.xpose.msra.mxu0 0
        %1243 = vmatprep.subr.bf16.mxu0 0
        %1244 = vmatpush1.bf16.xpose.msra.mxu0 0
        %1245 = vmatprep.subr.bf16.mxu0 0
        %1246 = vmatpush1.bf16.xpose.msra.mxu0 %v1229
        %1247 = vmatprep.subr.bf16.mxu0 0
        %1248 = vmatpush2.bf16.xpose.msra.mxu0 0
        %1249 = vmatprep.subr.bf16.mxu0 0
        %1250 = vmatpush2.bf16.xpose.msra.mxu0 0
        %1251 = vmatprep.subr.bf16.mxu0 0
        %1252 = vmatpush2.bf16.xpose.msra.mxu0 0
        %1253 = vmatprep.subr.bf16.mxu0 0
        %1254 = vmatpush2.bf16.xpose.msra.mxu0 0
        %1255 = vmatprep.subr.bf16.mxu0 0
        %1256 = vmatpush2.bf16.xpose.msra.mxu0 0
        %1257 = vmatprep.subr.bf16.mxu0 0
        %1258 = vmatpush2.bf16.xpose.msra.mxu0 0
        %1259 = vmatprep.subr.bf16.mxu0 0
        %1260 = vmatpush2.bf16.xpose.msra.mxu0 0
        %1261 = vmatprep.subr.bf16.mxu0 0
        %1262 = vmatpush2.bf16.xpose.msra.mxu0 0
        %1263 = vmatprep.mubr.bf16.mxu0 0
        %1264 = vmatmul.mubr.bf16.gmra.mxu0 %v1226
        %v1265 = vpop.f32.mrf.mxu0
        %v1266 = vadd.f32 0.0, %v1265
        %v1267 = vpop.f32.mrf.mxu0
        %v1268 = vpop.f32.mrf.mxu0
        %v1269 = vpop.f32.mrf.mxu0
        %1270 = vdwg.mxu0
        %v1271 = vsel %vm488, %v1266, -inf
        %1272 = vmax.xlane.f32.xlu0 %v1271
        %v1273 = vpop.xlane.xlu0 %1272
        %v1274 = vsub.f32 %v1266, %v1273
        %v1275 = vmul.f32 %v1274, 1.442695
        %v1276 = vpow.pop %v1275
        %v1277 = vsel %vm488, %v1276, 0.0
        %1278 = vadd.xlane.f32.xlu0 %v1277
        %v1279 = vpop.xlane.xlu0 %1278
        %v1280 = vrcp.pop %v1279
        %v1281 = vmul.f32 %v1276, %v1280
        %v1282 = vpack.c.bf16 %v1281, %v1281
        %1283 = vrot.lane.b32.xlu0 %v503, 68
        %v1284 = vpop.permute.xlu0 %1283
        %v1286 = vsel %vm488, %v1282, 0
        %v1289 = vsel %vm509, %v1284, 0
        %1291 = vmatprep.subr.bf16.mxu0 0
        %1292 = vmatpush1.bf16.msra.mxu0 0
        %1293 = vmatprep.subr.bf16.mxu0 0
        %1294 = vmatpush1.bf16.msra.mxu0 0
        %1295 = vmatprep.subr.bf16.mxu0 0
        %1296 = vmatpush1.bf16.msra.mxu0 0
        %1297 = vmatprep.subr.bf16.mxu0 0
        %1298 = vmatpush1.bf16.msra.mxu0 0
        %1299 = vmatprep.subr.bf16.mxu0 0
        %1300 = vmatpush1.bf16.msra.mxu0 0
        %1301 = vmatprep.subr.bf16.mxu0 0
        %1302 = vmatpush1.bf16.msra.mxu0 0
        %1303 = vmatprep.subr.bf16.mxu0 0
        %1304 = vmatpush1.bf16.msra.mxu0 0
        %1305 = vmatprep.subr.bf16.mxu0 0
        %1306 = vmatpush1.bf16.msra.mxu0 %v1289
        %1307 = vmatprep.subr.bf16.mxu0 0
        %1308 = vmatpush2.bf16.msra.mxu0 0
        %1309 = vmatprep.subr.bf16.mxu0 0
        %1310 = vmatpush2.bf16.msra.mxu0 0
        %1311 = vmatprep.subr.bf16.mxu0 0
        %1312 = vmatpush2.bf16.msra.mxu0 0
        %1313 = vmatprep.subr.bf16.mxu0 0
        %1314 = vmatpush2.bf16.msra.mxu0 0
        %1315 = vmatprep.subr.bf16.mxu0 0
        %1316 = vmatpush2.bf16.msra.mxu0 0
        %1317 = vmatprep.subr.bf16.mxu0 0
        %1318 = vmatpush2.bf16.msra.mxu0 0
        %1319 = vmatprep.subr.bf16.mxu0 0
        %1320 = vmatpush2.bf16.msra.mxu0 0
        %1321 = vmatprep.subr.bf16.mxu0 0
        %1322 = vmatpush2.bf16.msra.mxu0 0
        %1323 = vmatprep.mubr.bf16.mxu0 0
        %1324 = vmatmul.mubr.bf16.gmra.mxu0 %v1286
        %v1325 = vpop.f32.mrf.mxu0
        %v1326 = vadd.f32 0.0, %v1325
        %v1327 = vpop.f32.mrf.mxu0
        %v1328 = vpop.f32.mrf.mxu0
        %v1329 = vpop.f32.mrf.mxu0
        %1330 = vdwg.mxu0
        %v1331 = vpack.c.bf16 %v1326, %v1326
        %1333 = vrot.lane.b32.xlu0 %v665, 4
        %v1334 = vpop.permute.xlu0 %1333
        %1336 = vrot.lane.b32.xlu0 %v776, 8
        %v1337 = vpop.permute.xlu0 %1336
        %1339 = vrot.lane.b32.xlu0 %v887, 12
        %v1340 = vpop.permute.xlu0 %1339
        %1342 = vrot.lane.b32.xlu0 %v998, 16
        %v1343 = vpop.permute.xlu0 %1342
        %1345 = vrot.lane.b32.xlu0 %v1109, 20
        %v1346 = vpop.permute.xlu0 %1345
        %1348 = vrot.lane.b32.xlu0 %v1220, 24
        %v1349 = vpop.permute.xlu0 %1348
        %1351 = vrot.lane.b32.xlu0 %v1331, 28
        %v1352 = vpop.permute.xlu0 %1351
        %v1355 = vsel %vm441, %v553, %v1334
        %v1357 = vsel %vm488, %v1355, %v1337
        %vm1358 = vcmask 97280
        %v1360 = vsel %vm1358, %v1357, %v1340
        %vm1361 = vcmask 130048
        %v1363 = vsel %vm1361, %v1360, %v1343
        %vm1364 = vcmask 162816
        %v1366 = vsel %vm1364, %v1363, %v1346
        %vm1367 = vcmask 195584
        %v1369 = vsel %vm1367, %v1366, %v1349
        %vm1370 = vcmask 228352
        %v1372 = vsel %vm1370, %v1369, %v1352
        %v1373 = vld [vmem:[#allocation8] sm:$0xf]
        %v1374 = vld [vmem:[#allocation8 + $0x4] sm:$0xf]
        %v1375 = vld [vmem:[#allocation8 + $0x8] sm:$0xf]
        %v1376 = vld [vmem:[#allocation8 + $0xc] sm:$0xf]
        %v1377 = vld [vmem:[%s4] sm:$0x1]
        %v1379 = vlaneseq
        %v1380 = vshrl.u32 %v1379, 7
        %v1381 = vsub.s32 0, %v1380
        %v1382 = vrot.slane %v1377, %v1381
        %v1388 = vunpack.c.l.b16 %v1373
        %v1389 = vunpack.c.l.b16 %v1374
        %v1390 = vunpack.c.l.b16 %v1375
        %v1391 = vunpack.c.l.b16 %v1376
        %v1392 = vpack.c.b16 %v1389, %v1388
        %v1393 = vpack.c.b16 %v1391, %v1390
        %v1396 = vsel %vm394, %v1372, 0
        %1398 = vmatprep.subr.bf16.mxu0 0
        %1399 = vmatpush1.bf16.msra.mxu0 0
        %1400 = vmatprep.subr.bf16.mxu0 0
        %1401 = vmatpush1.bf16.msra.mxu0 0
        %1402 = vmatprep.subr.bf16.mxu0 0
        %1403 = vmatpush1.bf16.msra.mxu0 0
        %1404 = vmatprep.subr.bf16.mxu0 0
        %1405 = vmatpush1.bf16.msra.mxu0 0
        %1406 = vmatprep.subr.bf16.mxu0 0
        %1407 = vmatpush1.bf16.msra.mxu0 0
        %1408 = vmatprep.subr.bf16.mxu0 0
        %1409 = vmatpush1.bf16.msra.mxu0 0
        %1410 = vmatprep.subr.bf16.mxu0 0
        %1411 = vmatpush1.bf16.msra.mxu0 %v1393
        %1412 = vmatprep.subr.bf16.mxu0 0
        %1413 = vmatpush1.bf16.msra.mxu0 %v1392
        %1414 = vmatprep.subr.bf16.mxu0 0
        %1415 = vmatpush2.bf16.msra.mxu0 0
        %1416 = vmatprep.subr.bf16.mxu0 0
        %1417 = vmatpush2.bf16.msra.mxu0 0
        %1418 = vmatprep.subr.bf16.mxu0 0
        %1419 = vmatpush2.bf16.msra.mxu0 0
        %1420 = vmatprep.subr.bf16.mxu0 0
        %1421 = vmatpush2.bf16.msra.mxu0 0
        %1422 = vmatprep.subr.bf16.mxu0 0
        %1423 = vmatpush2.bf16.msra.mxu0 0
        %1424 = vmatprep.subr.bf16.mxu0 0
        %1425 = vmatpush2.bf16.msra.mxu0 0
        %1426 = vmatprep.subr.bf16.mxu0 0
        %1427 = vmatpush2.bf16.msra.mxu0 0
        %1428 = vmatprep.subr.bf16.mxu0 0
        %1429 = vmatpush2.bf16.msra.mxu0 0
        %1430 = vmatprep.mubr.bf16.mxu0 0
        %1431 = vmatmul.mubr.bf16.gmra.mxu0 %v1396
        %v1432 = vpop.f32.mrf.mxu0
        %v1433 = vadd.f32 %v1382, %v1432
        %v1434 = vpop.f32.mrf.mxu0
        %v1435 = vpop.f32.mrf.mxu0
        %v1436 = vpop.f32.mrf.mxu0
        %1437 = vdwg.mxu0
        %1438 = vst.msk [vmem:[%s282] sm:$0xff] %vm394, %v1433
        %s1439 = sand.u32 %s155, 1
        %s1440 = scalar_lea.sflag [#allocation5], %s1439
        %s1441 = sand.u32 %s155, 1
        %s1442 = smul.addr %s1441, 8
        %s1443 = scalar_lea.vmem [#allocation9], %s1442
        // Predicated region
        $region57: #{tpu_custom_call.1} parent=39 // pred_check
          %p1444 = pneg %p165
        $region58: #{tpu_custom_call.1} parent=39 // pred_check_branch
          %1446 = sbr.rel (%p1444) target = $region60
        $region59: #{tpu_custom_call.1} parent=39 // pred_region
          %s1448 = ssub.s32 128, 128
          %1449 = vsyncadd %s1440, %s1448
          %s1450 = sadd.s32 %s28, %s27
          %s1451 = smul.addr %s1450, 128
          %s1452 = scalar_lea.hbm %s5, %s1451
          %s1454 = sshll.u32 %s1443, 4
          %s1455 = int_to_ptr.vmem [resolvable:$true] %s1454
          %1457 = dma.vmem_to_hbm [thread:$0]  %s1455, 128, %s1452, %s1440
        $region60: #{tpu_custom_call.1} parent=39 // pred_fallthru
          _
      $region40: #{tpu_custom_call.1} parent=5 // pred_fallthru
        _
      %p1458 = scmp.le.s32.totalorder 2, %s18
      // Predicated region
      $region61: #{tpu_custom_call.1} parent=5 // pred_check
        %p1459 = pneg %p1458
      $region62: #{tpu_custom_call.1} parent=5 // pred_check_branch
        %1461 = sbr.rel (%p1459) target = $region64
      $region63: #{tpu_custom_call.1} parent=5 // pred_region
        %s1462 = ssub.s32 %s18, 2
        // Predicated region
        $region65: #{tpu_custom_call.1} parent=63 // pred_check
          %p1463 = pneg %p171
        $region66: #{tpu_custom_call.1} parent=63 // pred_check_branch
          %1465 = sbr.rel (%p1463) target = $region68
        $region67: #{tpu_custom_call.1} parent=63 // pred_region
          %s1466 = sand.u32 %s156, 1
          %s1467 = scalar_lea.sflag [#allocation5], %s1466
          %s1468 = sand.u32 %s156, 1
          %s1469 = smul.addr %s1468, 8
          %s1470 = scalar_lea.vmem [#allocation9], %s1469
          %1471 = dma.done %s1467, 128
        $region68: #{tpu_custom_call.1} parent=63 // pred_fallthru
          _
      $region64: #{tpu_custom_call.1} parent=5 // pred_fallthru
        _
    $region6: #{tpu_custom_call.1} parent=1 // loop_footer
      %s22 = sadd.s32 1, %s18
    $region7: #{tpu_custom_call.1} parent=1 // loop_footer_branch
      %17 = sbr.rel target = $region3
    $region8: #{tpu_custom_call.1} parent=1 // loop_exit
      _
    %1472 = vsyncpa [#allocation4], 1
    %s1473 = scalar_lea.sflag [#allocation4], 1
    %1474 = vsyncpa %s1473, 1
    %1475 = vsyncpa [#allocation7], 1
    %1476 = vsyncpa [#allocation5], 1
    %s1477 = scalar_lea.sflag [#allocation5], 1
    %1478 = vsyncpa %s1477, 1

// kernel: tpu_custom_call.1
$region0: #{tpu_custom_call.1}
  #allocation0 [shape = 'u32[]', space=smem, size = 0x4, offset = 0x4, fixed_abs, tag = 'smem constant byte address 0x4 - core index']
  #allocation1 [shape = 'u32[144,128]{1,0:T(1,128)}', space=vmem, size = 0x12000, scoped, tag = 'internal scratch']
  #allocation2 [shape = 'bf16[8,64]{1,0:T(8,128)(2,1)}', space=vmem, size = 0x800, scoped, tag = 'scratch operand']
  %s0 = inlined_call_operand.hbm [shape: bf16[2,8,32], index: 0, kind: input, shape index: {}]
  %s1 = inlined_call_operand.hbm [shape: bf16[32,96], index: 1, kind: input, shape index: {}]
  %s2 = inlined_call_operand.vmem [shape: f32[1,96], index: 2, kind: input, shape index: {}]
  %s3 = inlined_call_operand.hbm [shape: bf16[32,32], index: 3, kind: input, shape index: {}]
  %s4 = inlined_call_operand.vmem [shape: f32[1,32], index: 4, kind: input, shape index: {}]
  %s5 = inlined_call_operand.hbm [shape: f32[2,8,32], index: 5, kind: output, shape index: {}]
  %s6 = sld [smem:[#allocation0]]
  $region69: #{tpu_custom_call.1} parent=0
    _
  %s8 = ssub.s32 1, %s6
  %s9 = scalar_select 0, %s8, %s6
  $region1: #{tpu_custom_call.1} parent=0
    #allocation3 [shape = 'u8[4096]{0}', space=vmem, size = 0x1000, scoped, tag = 'input window, operand 0']
    #allocation4 [shape = 's32[2]{0}', space=sflag, size = 0x8, scoped, tag = 'scoped memory for tpu_custom_call.1']
    #allocation5 [shape = 's32[2]{0}', space=sflag, size = 0x8, scoped, tag = 'scoped memory for tpu_custom_call.1']
    #allocation6 [shape = 'u8[8192]{0}', space=vmem, size = 0x2000, scoped, tag = 'input window, operand 1, single buffered']
    #allocation7 [shape = 's32[1]{0}', space=sflag, size = 0x4, scoped, tag = 'scoped memory for tpu_custom_call.1']
    #allocation8 [shape = 'u8[8192]{0}', space=vmem, size = 0x2000, scoped, tag = 'input window, operand 3, single buffered']
    #allocation9 [shape = 'u8[8192]{0}', space=vmem, size = 0x2000, scoped, tag = 'output window, operand 0']
    %10 = vsyncpa [#allocation4], 0
    %s11 = scalar_lea.sflag [#allocation4], 1
    %12 = vsyncpa %s11, 0
    %13 = vsyncpa [#allocation7], 0
    %14 = vsyncpa [#allocation5], 0
    %s15 = scalar_lea.sflag [#allocation5], 1
    %16 = vsyncpa %s15, 0
    loop: start=0, step=1, limit=4
    $region2: #{tpu_custom_call.1} parent=1 // loop_pre_header
      _
    $region3: #{tpu_custom_call.1} parent=1 // loop_header
      %s18 = sphi 0, %s22
      %p19 = scmp.ge.s32.totalorder %s18, 4
      %s25 = sphi 0, %s37
      %s26 = sphi 0, %s33
      %s27 = sphi 0, %s25
      %s28 = sphi 0, %s26
      %s29 = sphi 0, %s27
      %s30 = sphi 0, %s28
      %s40 = sphi 0, %s42
      %s43 = sphi 0, %s40
      %s44 = sphi 0, %s43
      %s60 = sphi 0, %s44
      %s64 = sphi 0, %s64
      %s66 = sphi 0, %s64
      %s67 = sphi 0, %s66
      %s81 = sphi 0, %s67
      %s85 = sphi 0, %s85
      %s87 = sphi 0, %s85
      %s88 = sphi 0, %s87
      %s102 = sphi 0, %s88
      %s106 = sphi 0, %s106
      %s108 = sphi 0, %s106
      %s109 = sphi 0, %s108
      %s123 = sphi 0, %s109
      %s127 = sphi 0, %s127
      %s129 = sphi 0, %s127
      %s130 = sphi 0, %s129
      %s144 = sphi 0, %s130
      %s152 = sphi 0, %s154
      %s155 = sphi 0, %s152
      %s156 = sphi 0, %s155
      %s172 = sphi 0, %s156
    $region4: #{tpu_custom_call.1} parent=1 // loop_header_branch
      %21 = sbr.rel (%p19) target = $region8
    $region5: #{tpu_custom_call.1} parent=1 // loop_body
      %s23 = ssub.s32 %s18, 1
      %s24 = ssub.s32 %s18, 2
      %s31 = sadd.s32 1, %s26
      %p32 = scmp.ge.s32.totalorder %s31, 1
      %s33 = scalar_select %p32, 0, %s31
      %s34 = sadd.s32 1, %s25
      %s35 = scalar_select %p32, %s34, %s25
      %p36 = scmp.ge.s32.totalorder %s35, 2
      %s37 = scalar_select %p36, 0, %s35
      %s38 = ssub.s32 %s25, %s37
      %p39 = scmp.eq.s32.totalorder %s38, 0
      %s41 = sadd.s32 %s40, 1
      %s42 = scalar_select %p39, %s40, %s41
      %p45 = pneg %p39
      %p46 = scmp.eq.s32.totalorder %s18, 1
      %p47 = por %p45, %p46
      %p48 = scmp.ne.s32.totalorder %s40, %s43
      %p49 = scmp.eq.s32.totalorder %s18, 0
      %p50 = por %p48, %p49
      %p51 = scmp.ne.s32.totalorder %s40, %s43
      %p52 = scmp.eq.s32.totalorder %s23, 1
      %p53 = por %p51, %p52
      %p54 = scmp.ne.s32.totalorder %s43, %s44
      %p55 = scmp.eq.s32.totalorder %s23, 0
      %p56 = por %p54, %p55
      %p57 = scmp.ne.s32.totalorder %s43, %s44
      %p58 = scmp.eq.s32.totalorder %s24, 1
      %p59 = por %p57, %p58
      %p61 = scmp.ne.s32.totalorder %s44, %s60
      %p62 = scmp.eq.s32.totalorder %s24, 0
      %p63 = por %p61, %p62
      %s65 = sadd.s32 %s64, 1
      %p68 = scmp.eq.s32.totalorder %s18, 1
      %p69 = scmp.ne.s32.totalorder %s64, %s66
      %p70 = scmp.eq.s32.totalorder %s18, 0
      %p71 = por %p69, %p70
      %p72 = scmp.ne.s32.totalorder %s64, %s66
      %p73 = scmp.eq.s32.totalorder %s23, 1
      %p74 = por %p72, %p73
      %p75 = scmp.ne.s32.totalorder %s66, %s67
      %p76 = scmp.eq.s32.totalorder %s23, 0
      %p77 = por %p75, %p76
      %p78 = scmp.ne.s32.totalorder %s66, %s67
      %p79 = scmp.eq.s32.totalorder %s24, 1
      %p80 = por %p78, %p79
      %p82 = scmp.ne.s32.totalorder %s67, %s81
      %p83 = scmp.eq.s32.totalorder %s24, 0
      %p84 = por %p82, %p83
      %s86 = sadd.s32 %s85, 1
      %p89 = scmp.eq.s32.totalorder %s18, 1
      %p90 = scmp.ne.s32.totalorder %s85, %s87
      %p91 = scmp.eq.s32.totalorder %s18, 0
      %p92 = por %p90, %p91
      %p93 = scmp.ne.s32.totalorder %s85, %s87
      %p94 = scmp.eq.s32.totalorder %s23, 1
      %p95 = por %p93, %p94
      %p96 = scmp.ne.s32.totalorder %s87, %s88
      %p97 = scmp.eq.s32.totalorder %s23, 0
      %p98 = por %p96, %p97
      %p99 = scmp.ne.s32.totalorder %s87, %s88
      %p100 = scmp.eq.s32.totalorder %s24, 1
      %p101 = por %p99, %p100
      %p103 = scmp.ne.s32.totalorder %s88, %s102
      %p104 = scmp.eq.s32.totalorder %s24, 0
      %p105 = por %p103, %p104
      %s107 = sadd.s32 %s106, 1
      %p110 = scmp.eq.s32.totalorder %s18, 1
      %p111 = scmp.ne.s32.totalorder %s106, %s108
      %p112 = scmp.eq.s32.totalorder %s18, 0
      %p113 = por %p111, %p112
      %p114 = scmp.ne.s32.totalorder %s106, %s108
      %p115 = scmp.eq.s32.totalorder %s23, 1
      %p116 = por %p114, %p115
      %p117 = scmp.ne.s32.totalorder %s108, %s109
      %p118 = scmp.eq.s32.totalorder %s23, 0
      %p119 = por %p117, %p118
      %p120 = scmp.ne.s32.totalorder %s108, %s109
      %p121 = scmp.eq.s32.totalorder %s24, 1
      %p122 = por %p120, %p121
      %p124 = scmp.ne.s32.totalorder %s109, %s123
      %p125 = scmp.eq.s32.totalorder %s24, 0
      %p126 = por %p124, %p125
      %s128 = sadd.s32 %s127, 1
      %p131 = scmp.eq.s32.totalorder %s18, 1
      %p132 = scmp.ne.s32.totalorder %s127, %s129
      %p133 = scmp.eq.s32.totalorder %s18, 0
      %p134 = por %p132, %p133
      %p135 = scmp.ne.s32.totalorder %s127, %s129
      %p136 = scmp.eq.s32.totalorder %s23, 1
      %p137 = por %p135, %p136
      %p138 = scmp.ne.s32.totalorder %s129, %s130
      %p139 = scmp.eq.s32.totalorder %s23, 0
      %p140 = por %p138, %p139
      %p141 = scmp.ne.s32.totalorder %s129, %s130
      %p142 = scmp.eq.s32.totalorder %s24, 1
      %p143 = por %p141, %p142
      %p145 = scmp.ne.s32.totalorder %s130, %s144
      %p146 = scmp.eq.s32.totalorder %s24, 0
      %p147 = por %p145, %p146
      %s148 = ssub.s32 %s25, %s37
      %s149 = ssub.s32 %s26, %s33
      %s150 = sor.u32 %s148, %s149
      %p151 = scmp.eq.s32.totalorder %s150, 0
      %s153 = sadd.s32 %s152, 1
      %s154 = scalar_select %p151, %s152, %s153
      %p157 = pneg %p151
      %p158 = scmp.eq.s32.totalorder %s18, 1
      %p159 = por %p157, %p158
      %p160 = scmp.ne.s32.totalorder %s152, %s155
      %p161 = scmp.eq.s32.totalorder %s18, 0
      %p162 = por %p160, %p161
      %p163 = scmp.ne.s32.totalorder %s152, %s155
      %p164 = scmp.eq.s32.totalorder %s23, 1
      %p165 = por %p163, %p164
      %p166 = scmp.ne.s32.totalorder %s155, %s156
      %p167 = scmp.eq.s32.totalorder %s23, 0
      %p168 = por %p166, %p167
      %p169 = scmp.ne.s32.totalorder %s155, %s156
      %p170 = scmp.eq.s32.totalorder %s24, 1
      %p171 = por %p169, %p170
      %p173 = scmp.ne.s32.totalorder %s156, %s172
      %p174 = scmp.eq.s32.totalorder %s24, 0
      %p175 = por %p173, %p174
      %p176 = scmp.le.s32.totalorder 1, %s18
      %p177 = scmp.lt.s32.totalorder %s18, 3
      %p178 = pnand %p176, %p177
      %p179 = pneg %p178
      // Predicated region
      $region9: #{tpu_custom_call.1} parent=5 // pred_check
        _
      $region10: #{tpu_custom_call.1} parent=5 // pred_check_branch
        %181 = sbr.rel (%p178) target = $region12
      $region11: #{tpu_custom_call.1} parent=5 // pred_region
        %s182 = ssub.s32 %s18, 1
        // Predicated region
        $region13: #{tpu_custom_call.1} parent=11 // pred_check
          %p183 = pneg %p77
        $region14: #{tpu_custom_call.1} parent=11 // pred_check_branch
          %185 = sbr.rel (%p183) target = $region16
        $region15: #{tpu_custom_call.1} parent=11 // pred_region
          %s187 = ssub.s32 256, 256
          %188 = vsyncadd [#allocation7], %s187
          %s189 = sshll.u32 [#allocation6], 4
          %s190 = int_to_ptr.vmem [resolvable:$true] %s189
          %195 = dma.hbm_to_vmem [thread:$0]  %s1, 256, %s190, [#allocation7], 64, 64, 4
        $region16: #{tpu_custom_call.1} parent=11 // pred_fallthru
          _
        // Predicated region
        $region17: #{tpu_custom_call.1} parent=11 // pred_check
          %p196 = pneg %p98
        $region18: #{tpu_custom_call.1} parent=11 // pred_check_branch
          %198 = sbr.rel (%p196) target = $region20
        $region19: #{tpu_custom_call.1} parent=11 // pred_region
          _
        $region20: #{tpu_custom_call.1} parent=11 // pred_fallthru
          _
        // Predicated region
        $region21: #{tpu_custom_call.1} parent=11 // pred_check
          %p199 = pneg %p119
        $region22: #{tpu_custom_call.1} parent=11 // pred_check_branch
          %201 = sbr.rel (%p199) target = $region24
        $region23: #{tpu_custom_call.1} parent=11 // pred_region
          %s203 = ssub.s32 256, 256
          %204 = vsyncadd [#allocation7], %s203
          %s205 = sshll.u32 [#allocation8], 4
          %s206 = int_to_ptr.vmem [resolvable:$true] %s205
          %211 = dma.hbm_to_vmem [thread:$0]  %s3, 256, %s206, [#allocation7], 64, 64, 4
        $region24: #{tpu_custom_call.1} parent=11 // pred_fallthru
          _
        // Predicated region
        $region25: #{tpu_custom_call.1} parent=11 // pred_check
          %p212 = pneg %p140
        $region26: #{tpu_custom_call.1} parent=11 // pred_check_branch
          %214 = sbr.rel (%p212) target = $region28
        $region27: #{tpu_custom_call.1} parent=11 // pred_region
          _
        $region28: #{tpu_custom_call.1} parent=11 // pred_fallthru
          _
      $region12: #{tpu_custom_call.1} parent=5 // pred_fallthru
        _
      %p215 = scmp.lt.s32.totalorder %s18, 2
      // Predicated region
      $region29: #{tpu_custom_call.1} parent=5 // pred_check
        %p216 = pneg %p215
      $region30: #{tpu_custom_call.1} parent=5 // pred_check_branch
        %218 = sbr.rel (%p216) target = $region32
      $region31: #{tpu_custom_call.1} parent=5 // pred_region
        // Predicated region
        $region33: #{tpu_custom_call.1} parent=31 // pred_check
          %p219 = pneg %p50
        $region34: #{tpu_custom_call.1} parent=31 // pred_check_branch
          %221 = sbr.rel (%p219) target = $region36
        $region35: #{tpu_custom_call.1} parent=31 // pred_region
          %s222 = sand.u32 %s40, 1
          %s223 = scalar_lea.sflag [#allocation4], %s222
          %s224 = sand.u32 %s40, 1
          %s225 = smul.addr %s224, 4
          %s226 = scalar_lea.vmem [#allocation3], %s225
          %s228 = ssub.s32 64, 64
          %229 = vsyncadd %s223, %s228
          %s230 = smul.addr %s25, 64
          %s231 = scalar_lea.hbm %s0, %s230
          %s233 = sshll.u32 %s226, 4
          %s234 = int_to_ptr.vmem [resolvable:$true] %s233
          %236 = dma.hbm_to_vmem [thread:$0]  %s231, 64, %s234, %s223
        $region36: #{tpu_custom_call.1} parent=31 // pred_fallthru
          _
      $region32: #{tpu_custom_call.1} parent=5 // pred_fallthru
        _
      %p237 = scmp.le.s32.totalorder 1, %s18
      %p238 = scmp.lt.s32.totalorder %s18, 3
      %p239 = pnand %p237, %p238
      %p240 = pneg %p239
      // Predicated region
      $region37: #{tpu_custom_call.1} parent=5 // pred_check
        _
      $region38: #{tpu_custom_call.1} parent=5 // pred_check_branch
        %242 = sbr.rel (%p239) target = $region40
      $region39: #{tpu_custom_call.1} parent=5 // pred_region
        %s243 = ssub.s32 %s18, 1
        %s244 = sand.u32 %s43, 1
        %s245 = scalar_lea.sflag [#allocation4], %s244
        %s246 = sand.u32 %s43, 1
        %s247 = smul.addr %s246, 4
        %s248 = scalar_lea.vmem [#allocation3], %s247
        // Predicated region
        $region41: #{tpu_custom_call.1} parent=39 // pred_check
          %p249 = pneg %p56
        $region42: #{tpu_custom_call.1} parent=39 // pred_check_branch
          %251 = sbr.rel (%p249) target = $region44
        $region43: #{tpu_custom_call.1} parent=39 // pred_region
          %252 = dma.done %s245, 64
        $region44: #{tpu_custom_call.1} parent=39 // pred_fallthru
          _
        // Predicated region
        $region45: #{tpu_custom_call.1} parent=39 // pred_check
          %p253 = pneg %p77
        $region46: #{tpu_custom_call.1} parent=39 // pred_check_branch
          %255 = sbr.rel (%p253) target = $region48
        $region47: #{tpu_custom_call.1} parent=39 // pred_region
          %256 = dma.done [#allocation7], 256
        $region48: #{tpu_custom_call.1} parent=39 // pred_fallthru
          _
        // Predicated region
        $region49: #{tpu_custom_call.1} parent=39 // pred_check
          %p257 = pneg %p119
        $region50: #{tpu_custom_call.1} parent=39 // pred_check_branch
          %259 = sbr.rel (%p257) target = $region52
        $region51: #{tpu_custom_call.1} parent=39 // pred_region
          %260 = dma.done [#allocation7], 256
        $region52: #{tpu_custom_call.1} parent=39 // pred_fallthru
          _
        %s261 = sand.u32 %s43, 1
        %s262 = scalar_lea.sflag [#allocation4], %s261
        %s263 = sand.u32 %s43, 1
        %s264 = smul.addr %s263, 4
        %s265 = scalar_lea.vmem [#allocation3], %s264
        %p266 = pneg %p56
        %p267 = pneg %p53
        %p268 = pneg %p77
        %p269 = pneg %p74
        %p270 = pneg %p98
        %p271 = pneg %p95
        %p272 = pneg %p119
        %p273 = pneg %p116
        %p274 = pneg %p140
        %p275 = pneg %p137
        %p276 = pneg %p168
        %p277 = pneg %p165
        %s278 = sand.u32 %s155, 1
        %s279 = scalar_lea.sflag [#allocation5], %s278
        %s280 = sand.u32 %s155, 1
        %s281 = smul.addr %s280, 8
        %s282 = scalar_lea.vmem [#allocation9], %s281
        %p284 = scmp.eq.s32.totalorder %s28, 0
        // Predicated region
        $region53: #{tpu_custom_call.1} parent=39 // pred_check
          %p285 = pneg %p284
        $region54: #{tpu_custom_call.1} parent=39 // pred_check_branch
          %287 = sbr.rel (%p285) target = $region56
        $region55: #{tpu_custom_call.1} parent=39 // pred_region
          %v288 = vld [vmem:[%s248] sm:$0xf]
          %v289 = vld [vmem:[#allocation6] sm:$0xf]
          %v290 = vld [vmem:[#allocation6 + $0x4] sm:$0xf]
          %v291 = vld [vmem:[#allocation6 + $0x8] sm:$0xf]
          %v292 = vld [vmem:[#allocation6 + $0xc] sm:$0xf]
          %v293 = vld [vmem:[%s2] sm:$0x1]
          %v295 = vlaneseq
          %v296 = vshrl.u32 %v295, 7
          %v297 = vsub.s32 0, %v296
          %v298 = vrot.slane %v293, %v297
          %v303 = vunpack.c.l.b16 %v289
          %v304 = vunpack.c.l.b16 %v290
          %v305 = vunpack.c.l.b16 %v291
          %v306 = vunpack.c.l.b16 %v292
          %v307 = vpack.c.b16 %v304, %v303
          %v308 = vpack.c.b16 %v306, %v305
          %309 = vrot.lane.b32.xlu0 %v307, 96
          %v310 = vpop.permute.xlu0 %309
          %311 = vrot.lane.b32.xlu0 %v308, 96
          %v312 = vpop.permute.xlu0 %311
          %315 = vrot.lane.b32.xlu0 %v298, 96
          %v316 = vpop.permute.xlu0 %315
          %vm318 = vcmask 261120
          %v320 = vsel %vm318, %v288, 0
          %322 = vmatprep.subr.bf16.mxu0 0
          %323 = vmatpush1.bf16.msra.mxu0 0
          %324 = vmatprep.subr.bf16.mxu0 0
          %325 = vmatpush1.bf16.msra.mxu0 0
          %326 = vmatprep.subr.bf16.mxu0 0
          %327 = vmatpush1.bf16.msra.mxu0 0
          %328 = vmatprep.subr.bf16.mxu0 0
          %329 = vmatpush1.bf16.msra.mxu0 0
          %330 = vmatprep.subr.bf16.mxu0 0
          %331 = vmatpush1.bf16.msra.mxu0 0
          %332 = vmatprep.subr.bf16.mxu0 0
          %333 = vmatpush1.bf16.msra.mxu0 0
          %334 = vmatprep.subr.bf16.mxu0 0
          %335 = vmatpush1.bf16.msra.mxu0 %v312
          %336 = vmatprep.subr.bf16.mxu0 0
          %337 = vmatpush1.bf16.msra.mxu0 %v310
          %338 = vmatprep.subr.bf16.mxu0 0
          %339 = vmatpush2.bf16.msra.mxu0 0
          %340 = vmatprep.subr.bf16.mxu0 0
          %341 = vmatpush2.bf16.msra.mxu0 0
          %342 = vmatprep.subr.bf16.mxu0 0
          %343 = vmatpush2.bf16.msra.mxu0 0
          %344 = vmatprep.subr.bf16.mxu0 0
          %345 = vmatpush2.bf16.msra.mxu0 0
          %346 = vmatprep.subr.bf16.mxu0 0
          %347 = vmatpush2.bf16.msra.mxu0 0
          %348 = vmatprep.subr.bf16.mxu0 0
          %349 = vmatpush2.bf16.msra.mxu0 0
          %350 = vmatprep.subr.bf16.mxu0 0
          %351 = vmatpush2.bf16.msra.mxu0 0
          %352 = vmatprep.subr.bf16.mxu0 0
          %353 = vmatpush2.bf16.msra.mxu0 0
          %354 = vmatprep.mubr.bf16.mxu0 0
          %355 = vmatmul.mubr.bf16.gmra.mxu0 %v320
          %v356 = vpop.f32.mrf.mxu0
          %v357 = vadd.f32 %v316, %v356
          %v358 = vpop.f32.mrf.mxu0
          %v359 = vpop.f32.mrf.mxu0
          %v360 = vpop.f32.mrf.mxu0
          %361 = vdwg.mxu0
          %v362 = vpack.c.bf16 %v357, %v357
          %vm363 = vcmask 519168
          %364 = vst.msk [vmem:[#allocation2] sm:$0xf] %vm363, %v362
        $region56: #{tpu_custom_call.1} parent=39 // pred_fallthru
          _
        %s365 = smul.u32 %s28, 8
        %s366 = sshra.s32 %s365, 3
        %s367 = sand.u32 %s365, 7
        %s368 = smul.addr %s366, 4
        %s369 = scalar_lea.vmem %s248, %s368 [#allocation3]
        %v370 = vld [vmem:[%s369] sm:$0xf]
        %v371 = vld [vmem:[#allocation6] sm:$0xf]
        %v372 = vld [vmem:[#allocation6 + $0x4] sm:$0xf]
        %v373 = vld [vmem:[#allocation6 + $0x8] sm:$0xf]
        %v374 = vld [vmem:[#allocation6 + $0xc] sm:$0xf]
        %v375 = vld [vmem:[%s2] sm:$0x1]
        %v377 = vlaneseq
        %v378 = vshrl.u32 %v377, 7
        %v379 = vsub.s32 0, %v378
        %v380 = vrot.slane %v375, %v379
        %v386 = vunpack.c.l.b16 %v371
        %v387 = vunpack.c.l.b16 %v372
        %v388 = vunpack.c.l.b16 %v373
        %v389 = vunpack.c.l.b16 %v374
        %v390 = vpack.c.b16 %v387, %v386
        %v391 = vpack.c.b16 %v389, %v388
        %vm394 = vcmask 261120
        %v396 = vsel %vm394, %v370, 0
        %398 = vmatprep.subr.bf16.mxu0 0
        %399 = vmatpush1.bf16.msra.mxu0 0
        %400 = vmatprep.subr.bf16.mxu0 0
        %401 = vmatpush1.bf16.msra.mxu0 0
        %402 = vmatprep.subr.bf16.mxu0 0
        %403 = vmatpush1.bf16.msra.mxu0 0
        %404 = vmatprep.subr.bf16.mxu0 0
        %405 = vmatpush1.bf16.msra.mxu0 0
        %406 = vmatprep.subr.bf16.mxu0 0
        %407 = vmatpush1.bf16.msra.mxu0 0
        %408 = vmatprep.subr.bf16.mxu0 0
        %409 = vmatpush1.bf16.msra.mxu0 0
        %410 = vmatprep.subr.bf16.mxu0 0
        %411 = vmatpush1.bf16.msra.mxu0 %v391
        %412 = vmatprep.subr.bf16.mxu0 0
        %413 = vmatpush1.bf16.msra.mxu0 %v390
        %414 = vmatprep.subr.bf16.mxu0 0
        %415 = vmatpush2.bf16.msra.mxu0 0
        %416 = vmatprep.subr.bf16.mxu0 0
        %417 = vmatpush2.bf16.msra.mxu0 0
        %418 = vmatprep.subr.bf16.mxu0 0
        %419 = vmatpush2.bf16.msra.mxu0 0
        %420 = vmatprep.subr.bf16.mxu0 0
        %421 = vmatpush2.bf16.msra.mxu0 0
        %422 = vmatprep.subr.bf16.mxu0 0
        %423 = vmatpush2.bf16.msra.mxu0 0
        %424 = vmatprep.subr.bf16.mxu0 0
        %425 = vmatpush2.bf16.msra.mxu0 0
        %426 = vmatprep.subr.bf16.mxu0 0
        %427 = vmatpush2.bf16.msra.mxu0 0
        %428 = vmatprep.subr.bf16.mxu0 0
        %429 = vmatpush2.bf16.msra.mxu0 0
        %430 = vmatprep.mubr.bf16.mxu0 0
        %431 = vmatmul.mubr.bf16.gmra.mxu0 %v396
        %v432 = vpop.f32.mrf.mxu0
        %v433 = vadd.f32 %v380, %v432
        %v434 = vpop.f32.mrf.mxu0
        %v435 = vpop.f32.mrf.mxu0
        %v436 = vpop.f32.mrf.mxu0
        %437 = vdwg.mxu0
        %v438 = vmul.f32 %v433, 0.5
        %v439 = vpack.c.bf16 %v438, %v438
        %v440 = vld [vmem:[#allocation2] sm:$0xf]
        %vm441 = vcmask 31744
        %v443 = vsel %vm441, %v439, 0
        %v446 = vsel %vm441, %v440, 0
        %448 = vmatprep.subr.bf16.mxu0 0
        %449 = vmatpush1.bf16.xpose.msra.mxu0 0
        %450 = vmatprep.subr.bf16.mxu0 0
        %451 = vmatpush1.bf16.xpose.msra.mxu0 0
        %452 = vmatprep.subr.bf16.mxu0 0
        %453 = vmatpush1.bf16.xpose.msra.mxu0 0
        %454 = vmatprep.subr.bf16.mxu0 0
        %455 = vmatpush1.bf16.xpose.msra.mxu0 0
        %456 = vmatprep.subr.bf16.mxu0 0
        %457 = vmatpush1.bf16.xpose.msra.mxu0 0
        %458 = vmatprep.subr.bf16.mxu0 0
        %459 = vmatpush1.bf16.xpose.msra.mxu0 0
        %460 = vmatprep.subr.bf16.mxu0 0
        %461 = vmatpush1.bf16.xpose.msra.mxu0 0
        %462 = vmatprep.subr.bf16.mxu0 0
        %463 = vmatpush1.bf16.xpose.msra.mxu0 %v446
        %464 = vmatprep.subr.bf16.mxu0 0
        %465 = vmatpush2.bf16.xpose.msra.mxu0 0
        %466 = vmatprep.subr.bf16.mxu0 0
        %467 = vmatpush2.bf16.xpose.msra.mxu0 0
        %468 = vmatprep.subr.bf16.mxu0 0
        %469 = vmatpush2.bf16.xpose.msra.mxu0 0
        %470 = vmatprep.subr.bf16.mxu0 0
        %471 = vmatpush2.bf16.xpose.msra.mxu0 0
        %472 = vmatprep.subr.bf16.mxu0 0
        %473 = vmatpush2.bf16.xpose.msra.mxu0 0
        %474 = vmatprep.subr.bf16.mxu0 0
        %475 = vmatpush2.bf16.xpose.msra.mxu0 0
        %476 = vmatprep.subr.bf16.mxu0 0
        %477 = vmatpush2.bf16.xpose.msra.mxu0 0
        %478 = vmatprep.subr.bf16.mxu0 0
        %479 = vmatpush2.bf16.xpose.msra.mxu0 0
        %480 = vmatprep.mubr.bf16.mxu0 0
        %481 = vmatmul.mubr.bf16.gmra.mxu0 %v443
        %v482 = vpop.f32.mrf.mxu0
        %v483 = vadd.f32 0.0, %v482
        %v484 = vpop.f32.mrf.mxu0
        %v485 = vpop.f32.mrf.mxu0
        %v486 = vpop.f32.mrf.mxu0
        %487 = vdwg.mxu0
        %vm488 = vcmask 64512
        %v489 = vsel %vm488, %v483, -inf
        %490 = vmax.xlane.f32.xlu0 %v489
        %v491 = vpop.xlane.xlu0 %490
        %v492 = vsub.f32 %v483, %v491
        %v493 = vmul.f32 %v492, 1.442695
        %v494 = vpow.pop %v493
        %v495 = vsel %vm488, %v494, 0.0
        %496 = vadd.xlane.f32.xlu0 %v495
        %v497 = vpop.xlane.xlu0 %496
        %v498 = vrcp.pop %v497
        %v499 = vmul.f32 %v494, %v498
        %v500 = vpack.c.bf16 %v499, %v499
        %v502 = vunpack.c.l.b16 %v440
        %v503 = vpack.c.b16 %v502, %v502
        %504 = vrot.lane.b32.xlu0 %v503, 96
        %v505 = vpop.permute.xlu0 %504
        %v507 = vsel %vm488, %v500, 0
        %vm509 = vcmask 1043456
        %v511 = vsel %vm509, %v505, 0
        %513 = vmatprep.subr.bf16.mxu0 0
        %514 = vmatpush1.bf16.msra.mxu0 0
        %515 = vmatprep.subr.bf16.mxu0 0
        %516 = vmatpush1.bf16.msra.mxu0 0
        %517 = vmatprep.subr.bf16.mxu0 0
        %518 = vmatpush1.bf16.msra.mxu0 0
        %519 = vmatprep.subr.bf16.mxu0 0
        %520 = vmatpush1.bf16.msra.mxu0 0
        %521 = vmatprep.subr.bf16.mxu0 0
        %522 = vmatpush1.bf16.msra.mxu0 0
        %523 = vmatprep.subr.bf16.mxu0 0
        %524 = vmatpush1.bf16.msra.mxu0 0
        %525 = vmatprep.subr.bf16.mxu0 0
        %526 = vmatpush1.bf16.msra.mxu0 0
        %527 = vmatprep.subr.bf16.mxu0 0
        %528 = vmatpush1.bf16.msra.mxu0 %v511
        %529 = vmatprep.subr.bf16.mxu0 0
        %530 = vmatpush2.bf16.msra.mxu0 0
        %531 = vmatprep.subr.bf16.mxu0 0
        %532 = vmatpush2.bf16.msra.mxu0 0
        %533 = vmatprep.subr.bf16.mxu0 0
        %534 = vmatpush2.bf16.msra.mxu0 0
        %535 = vmatprep.subr.bf16.mxu0 0
        %536 = vmatpush2.bf16.msra.mxu0 0
        %537 = vmatprep.subr.bf16.mxu0 0
        %538 = vmatpush2.bf16.msra.mxu0 0
        %539 = vmatprep.subr.bf16.mxu0 0
        %540 = vmatpush2.bf16.msra.mxu0 0
        %541 = vmatprep.subr.bf16.mxu0 0
        %542 = vmatpush2.bf16.msra.mxu0 0
        %543 = vmatprep.subr.bf16.mxu0 0
        %544 = vmatpush2.bf16.msra.mxu0 0
        %545 = vmatprep.mubr.bf16.mxu0 0
        %546 = vmatmul.mubr.bf16.gmra.mxu0 %v507
        %v547 = vpop.f32.mrf.mxu0
        %v548 = vadd.f32 0.0, %v547
        %v549 = vpop.f32.mrf.mxu0
        %v550 = vpop.f32.mrf.mxu0
        %v551 = vpop.f32.mrf.mxu0
        %552 = vdwg.mxu0
        %v553 = vpack.c.bf16 %v548, %v548
        %555 = vrot.lane.b32.xlu0 %v439, 124
        %v556 = vpop.permute.xlu0 %555
        %557 = vrot.lane.b32.xlu0 %v503, 124
        %v558 = vpop.permute.xlu0 %557
        %v560 = vsel %vm441, %v556, 0
        %v563 = vsel %vm441, %v558, 0
        %565 = vmatprep.subr.bf16.mxu0 0
        %566 = vmatpush1.bf16.xpose.msra.mxu0 0
        %567 = vmatprep.subr.bf16.mxu0 0
        %568 = vmatpush1.bf16.xpose.msra.mxu0 0
        %569 = vmatprep.subr.bf16.mxu0 0
        %570 = vmatpush1.bf16.xpose.msra.mxu0 0
        %571 = vmatprep.subr.bf16.mxu0 0
        %572 = vmatpush1.bf16.xpose.msra.mxu0 0
        %573 = vmatprep.subr.bf16.mxu0 0
        %574 = vmatpush1.bf16.xpose.msra.mxu0 0
        %575 = vmatprep.subr.bf16.mxu0 0
        %576 = vmatpush1.bf16.xpose.msra.mxu0 0
        %577 = vmatprep.subr.bf16.mxu0 0
        %578 = vmatpush1.bf16.xpose.msra.mxu0 0
        %579 = vmatprep.subr.bf16.mxu0 0
        %580 = vmatpush1.bf16.xpose.msra.mxu0 %v563
        %581 = vmatprep.subr.bf16.mxu0 0
        %582 = vmatpush2.bf16.xpose.msra.mxu0 0
        %583 = vmatprep.subr.bf16.mxu0 0
        %584 = vmatpush2.bf16.xpose.msra.mxu0 0
        %585 = vmatprep.subr.bf16.mxu0 0
        %586 = vmatpush2.bf16.xpose.msra.mxu0 0
        %587 = vmatprep.subr.bf16.mxu0 0
        %588 = vmatpush2.bf16.xpose.msra.mxu0 0
        %589 = vmatprep.subr.bf16.mxu0 0
        %590 = vmatpush2.bf16.xpose.msra.mxu0 0
        %591 = vmatprep.subr.bf16.mxu0 0
        %592 = vmatpush2.bf16.xpose.msra.mxu0 0
        %593 = vmatprep.subr.bf16.mxu0 0
        %594 = vmatpush2.bf16.xpose.msra.mxu0 0
        %595 = vmatprep.subr.bf16.mxu0 0
        %596 = vmatpush2.bf16.xpose.msra.mxu0 0
        %597 = vmatprep.mubr.bf16.mxu0 0
        %598 = vmatmul.mubr.bf16.gmra.mxu0 %v560
        %v599 = vpop.f32.mrf.mxu0
        %v600 = vadd.f32 0.0, %v599
        %v601 = vpop.f32.mrf.mxu0
        %v602 = vpop.f32.mrf.mxu0
        %v603 = vpop.f32.mrf.mxu0
        %604 = vdwg.mxu0
        %v605 = vsel %vm488, %v600, -inf
        %606 = vmax.xlane.f32.xlu0 %v605
        %v607 = vpop.xlane.xlu0 %606
        %v608 = vsub.f32 %v600, %v607
        %v609 = vmul.f32 %v608, 1.442695
        %v610 = vpow.pop %v609
        %v611 = vsel %vm488, %v610, 0.0
        %612 = vadd.xlane.f32.xlu0 %v611
        %v613 = vpop.xlane.xlu0 %612
        %v614 = vrcp.pop %v613
        %v615 = vmul.f32 %v610, %v614
        %v616 = vpack.c.bf16 %v615, %v615
        %617 = vrot.lane.b32.xlu0 %v503, 92
        %v618 = vpop.permute.xlu0 %617
        %v620 = vsel %vm488, %v616, 0
        %v623 = vsel %vm509, %v618, 0
        %625 = vmatprep.subr.bf16.mxu0 0
        %626 = vmatpush1.bf16.msra.mxu0 0
        %627 = vmatprep.subr.bf16.mxu0 0
        %628 = vmatpush1.bf16.msra.mxu0 0
        %629 = vmatprep.subr.bf16.mxu0 0
        %630 = vmatpush1.bf16.msra.mxu0 0
        %631 = vmatprep.subr.bf16.mxu0 0
        %632 = vmatpush1.bf16.msra.mxu0 0
        %633 = vmatprep.subr.bf16.mxu0 0
        %634 = vmatpush1.bf16.msra.mxu0 0
        %635 = vmatprep.subr.bf16.mxu0 0
        %636 = vmatpush1.bf16.msra.mxu0 0
        %637 = vmatprep.subr.bf16.mxu0 0
        %638 = vmatpush1.bf16.msra.mxu0 0
        %639 = vmatprep.subr.bf16.mxu0 0
        %640 = vmatpush1.bf16.msra.mxu0 %v623
        %641 = vmatprep.subr.bf16.mxu0 0
        %642 = vmatpush2.bf16.msra.mxu0 0
        %643 = vmatprep.subr.bf16.mxu0 0
        %644 = vmatpush2.bf16.msra.mxu0 0
        %645 = vmatprep.subr.bf16.mxu0 0
        %646 = vmatpush2.bf16.msra.mxu0 0
        %647 = vmatprep.subr.bf16.mxu0 0
        %648 = vmatpush2.bf16.msra.mxu0 0
        %649 = vmatprep.subr.bf16.mxu0 0
        %650 = vmatpush2.bf16.msra.mxu0 0
        %651 = vmatprep.subr.bf16.mxu0 0
        %652 = vmatpush2.bf16.msra.mxu0 0
        %653 = vmatprep.subr.bf16.mxu0 0
        %654 = vmatpush2.bf16.msra.mxu0 0
        %655 = vmatprep.subr.bf16.mxu0 0
        %656 = vmatpush2.bf16.msra.mxu0 0
        %657 = vmatprep.mubr.bf16.mxu0 0
        %658 = vmatmul.mubr.bf16.gmra.mxu0 %v620
        %v659 = vpop.f32.mrf.mxu0
        %v660 = vadd.f32 0.0, %v659
        %v661 = vpop.f32.mrf.mxu0
        %v662 = vpop.f32.mrf.mxu0
        %v663 = vpop.f32.mrf.mxu0
        %664 = vdwg.mxu0
        %v665 = vpack.c.bf16 %v660, %v660
        %666 = vrot.lane.b32.xlu0 %v439, 120
        %v667 = vpop.permute.xlu0 %666
        %668 = vrot.lane.b32.xlu0 %v503, 120
        %v669 = vpop.permute.xlu0 %668
        %v671 = vsel %vm441, %v667, 0
        %v674 = vsel %vm441, %v669, 0
        %676 = vmatprep.subr.bf16.mxu0 0
        %677 = vmatpush1.bf16.xpose.msra.mxu0 0
        %678 = vmatprep.subr.bf16.mxu0 0
        %679 = vmatpush1.bf16.xpose.msra.mxu0 0
        %680 = vmatprep.subr.bf16.mxu0 0
        %681 = vmatpush1.bf16.xpose.msra.mxu0 0
        %682 = vmatprep.subr.bf16.mxu0 0
        %683 = vmatpush1.bf16.xpose.msra.mxu0 0
        %684 = vmatprep.subr.bf16.mxu0 0
        %685 = vmatpush1.bf16.xpose.msra.mxu0 0
        %686 = vmatprep.subr.bf16.mxu0 0
        %687 = vmatpush1.bf16.xpose.msra.mxu0 0
        %688 = vmatprep.subr.bf16.mxu0 0
        %689 = vmatpush1.bf16.xpose.msra.mxu0 0
        %690 = vmatprep.subr.bf16.mxu0 0
        %691 = vmatpush1.bf16.xpose.msra.mxu0 %v674
        %692 = vmatprep.subr.bf16.mxu0 0
        %693 = vmatpush2.bf16.xpose.msra.mxu0 0
        %694 = vmatprep.subr.bf16.mxu0 0
        %695 = vmatpush2.bf16.xpose.msra.mxu0 0
        %696 = vmatprep.subr.bf16.mxu0 0
        %697 = vmatpush2.bf16.xpose.msra.mxu0 0
        %698 = vmatprep.subr.bf16.mxu0 0
        %699 = vmatpush2.bf16.xpose.msra.mxu0 0
        %700 = vmatprep.subr.bf16.mxu0 0
        %701 = vmatpush2.bf16.xpose.msra.mxu0 0
        %702 = vmatprep.subr.bf16.mxu0 0
        %703 = vmatpush2.bf16.xpose.msra.mxu0 0
        %704 = vmatprep.subr.bf16.mxu0 0
        %705 = vmatpush2.bf16.xpose.msra.mxu0 0
        %706 = vmatprep.subr.bf16.mxu0 0
        %707 = vmatpush2.bf16.xpose.msra.mxu0 0
        %708 = vmatprep.mubr.bf16.mxu0 0
        %709 = vmatmul.mubr.bf16.gmra.mxu0 %v671
        %v710 = vpop.f32.mrf.mxu0
        %v711 = vadd.f32 0.0, %v710
        %v712 = vpop.f32.mrf.mxu0
        %v713 = vpop.f32.mrf.mxu0
        %v714 = vpop.f32.mrf.mxu0
        %715 = vdwg.mxu0
        %v716 = vsel %vm488, %v711, -inf
        %717 = vmax.xlane.f32.xlu0 %v716
        %v718 = vpop.xlane.xlu0 %717
        %v719 = vsub.f32 %v711, %v718
        %v720 = vmul.f32 %v719, 1.442695
        %v721 = vpow.pop %v720
        %v722 = vsel %vm488, %v721, 0.0
        %723 = vadd.xlane.f32.xlu0 %v722
        %v724 = vpop.xlane.xlu0 %723
        %v725 = vrcp.pop %v724
        %v726 = vmul.f32 %v721, %v725
        %v727 = vpack.c.bf16 %v726, %v726
        %728 = vrot.lane.b32.xlu0 %v503, 88
        %v729 = vpop.permute.xlu0 %728
        %v731 = vsel %vm488, %v727, 0
        %v734 = vsel %vm509, %v729, 0
        %736 = vmatprep.subr.bf16.mxu0 0
        %737 = vmatpush1.bf16.msra.mxu0 0
        %738 = vmatprep.subr.bf16.mxu0 0
        %739 = vmatpush1.bf16.msra.mxu0 0
        %740 = vmatprep.subr.bf16.mxu0 0
        %741 = vmatpush1.bf16.msra.mxu0 0
        %742 = vmatprep.subr.bf16.mxu0 0
        %743 = vmatpush1.bf16.msra.mxu0 0
        %744 = vmatprep.subr.bf16.mxu0 0
        %745 = vmatpush1.bf16.msra.mxu0 0
        %746 = vmatprep.subr.bf16.mxu0 0
        %747 = vmatpush1.bf16.msra.mxu0 0
        %748 = vmatprep.subr.bf16.mxu0 0
        %749 = vmatpush1.bf16.msra.mxu0 0
        %750 = vmatprep.subr.bf16.mxu0 0
        %751 = vmatpush1.bf16.msra.mxu0 %v734
        %752 = vmatprep.subr.bf16.mxu0 0
        %753 = vmatpush2.bf16.msra.mxu0 0
        %754 = vmatprep.subr.bf16.mxu0 0
        %755 = vmatpush2.bf16.msra.mxu0 0
        %756 = vmatprep.subr.bf16.mxu0 0
        %757 = vmatpush2.bf16.msra.mxu0 0
        %758 = vmatprep.subr.bf16.mxu0 0
        %759 = vmatpush2.bf16.msra.mxu0 0
        %760 = vmatprep.subr.bf16.mxu0 0
        %761 = vmatpush2.bf16.msra.mxu0 0
        %762 = vmatprep.subr.bf16.mxu0 0
        %763 = vmatpush2.bf16.msra.mxu0 0
        %764 = vmatprep.subr.bf16.mxu0 0
        %765 = vmatpush2.bf16.msra.mxu0 0
        %766 = vmatprep.subr.bf16.mxu0 0
        %767 = vmatpush2.bf16.msra.mxu0 0
        %768 = vmatprep.mubr.bf16.mxu0 0
        %769 = vmatmul.mubr.bf16.gmra.mxu0 %v731
        %v770 = vpop.f32.mrf.mxu0
        %v771 = vadd.f32 0.0, %v770
        %v772 = vpop.f32.mrf.mxu0
        %v773 = vpop.f32.mrf.mxu0
        %v774 = vpop.f32.mrf.mxu0
        %775 = vdwg.mxu0
        %v776 = vpack.c.bf16 %v771, %v771
        %777 = vrot.lane.b32.xlu0 %v439, 116
        %v778 = vpop.permute.xlu0 %777
        %779 = vrot.lane.b32.xlu0 %v503, 116
        %v780 = vpop.permute.xlu0 %779
        %v782 = vsel %vm441, %v778, 0
        %v785 = vsel %vm441, %v780, 0
        %787 = vmatprep.subr.bf16.mxu0 0
        %788 = vmatpush1.bf16.xpose.msra.mxu0 0
        %789 = vmatprep.subr.bf16.mxu0 0
        %790 = vmatpush1.bf16.xpose.msra.mxu0 0
        %791 = vmatprep.subr.bf16.mxu0 0
        %792 = vmatpush1.bf16.xpose.msra.mxu0 0
        %793 = vmatprep.subr.bf16.mxu0 0
        %794 = vmatpush1.bf16.xpose.msra.mxu0 0
        %795 = vmatprep.subr.bf16.mxu0 0
        %796 = vmatpush1.bf16.xpose.msra.mxu0 0
        %797 = vmatprep.subr.bf16.mxu0 0
        %798 = vmatpush1.bf16.xpose.msra.mxu0 0
        %799 = vmatprep.subr.bf16.mxu0 0
        %800 = vmatpush1.bf16.xpose.msra.mxu0 0
        %801 = vmatprep.subr.bf16.mxu0 0
        %802 = vmatpush1.bf16.xpose.msra.mxu0 %v785
        %803 = vmatprep.subr.bf16.mxu0 0
        %804 = vmatpush2.bf16.xpose.msra.mxu0 0
        %805 = vmatprep.subr.bf16.mxu0 0
        %806 = vmatpush2.bf16.xpose.msra.mxu0 0
        %807 = vmatprep.subr.bf16.mxu0 0
        %808 = vmatpush2.bf16.xpose.msra.mxu0 0
        %809 = vmatprep.subr.bf16.mxu0 0
        %810 = vmatpush2.bf16.xpose.msra.mxu0 0
        %811 = vmatprep.subr.bf16.mxu0 0
        %812 = vmatpush2.bf16.xpose.msra.mxu0 0
        %813 = vmatprep.subr.bf16.mxu0 0
        %814 = vmatpush2.bf16.xpose.msra.mxu0 0
        %815 = vmatprep.subr.bf16.mxu0 0
        %816 = vmatpush2.bf16.xpose.msra.mxu0 0
        %817 = vmatprep.subr.bf16.mxu0 0
        %818 = vmatpush2.bf16.xpose.msra.mxu0 0
        %819 = vmatprep.mubr.bf16.mxu0 0
        %820 = vmatmul.mubr.bf16.gmra.mxu0 %v782
        %v821 = vpop.f32.mrf.mxu0
        %v822 = vadd.f32 0.0, %v821
        %v823 = vpop.f32.mrf.mxu0
        %v824 = vpop.f32.mrf.mxu0
        %v825 = vpop.f32.mrf.mxu0
        %826 = vdwg.mxu0
        %v827 = vsel %vm488, %v822, -inf
        %828 = vmax.xlane.f32.xlu0 %v827
        %v829 = vpop.xlane.xlu0 %828
        %v830 = vsub.f32 %v822, %v829
        %v831 = vmul.f32 %v830, 1.442695
        %v832 = vpow.pop %v831
        %v833 = vsel %vm488, %v832, 0.0
        %834 = vadd.xlane.f32.xlu0 %v833
        %v835 = vpop.xlane.xlu0 %834
        %v836 = vrcp.pop %v835
        %v837 = vmul.f32 %v832, %v836
        %v838 = vpack.c.bf16 %v837, %v837
        %839 = vrot.lane.b32.xlu0 %v503, 84
        %v840 = vpop.permute.xlu0 %839
        %v842 = vsel %vm488, %v838, 0
        %v845 = vsel %vm509, %v840, 0
        %847 = vmatprep.subr.bf16.mxu0 0
        %848 = vmatpush1.bf16.msra.mxu0 0
        %849 = vmatprep.subr.bf16.mxu0 0
        %850 = vmatpush1.bf16.msra.mxu0 0
        %851 = vmatprep.subr.bf16.mxu0 0
        %852 = vmatpush1.bf16.msra.mxu0 0
        %853 = vmatprep.subr.bf16.mxu0 0
        %854 = vmatpush1.bf16.msra.mxu0 0
        %855 = vmatprep.subr.bf16.mxu0 0
        %856 = vmatpush1.bf16.msra.mxu0 0
        %857 = vmatprep.subr.bf16.mxu0 0
        %858 = vmatpush1.bf16.msra.mxu0 0
        %859 = vmatprep.subr.bf16.mxu0 0
        %860 = vmatpush1.bf16.msra.mxu0 0
        %861 = vmatprep.subr.bf16.mxu0 0
        %862 = vmatpush1.bf16.msra.mxu0 %v845
        %863 = vmatprep.subr.bf16.mxu0 0
        %864 = vmatpush2.bf16.msra.mxu0 0
        %865 = vmatprep.subr.bf16.mxu0 0
        %866 = vmatpush2.bf16.msra.mxu0 0
        %867 = vmatprep.subr.bf16.mxu0 0
        %868 = vmatpush2.bf16.msra.mxu0 0
        %869 = vmatprep.subr.bf16.mxu0 0
        %870 = vmatpush2.bf16.msra.mxu0 0
        %871 = vmatprep.subr.bf16.mxu0 0
        %872 = vmatpush2.bf16.msra.mxu0 0
        %873 = vmatprep.subr.bf16.mxu0 0
        %874 = vmatpush2.bf16.msra.mxu0 0
        %875 = vmatprep.subr.bf16.mxu0 0
        %876 = vmatpush2.bf16.msra.mxu0 0
        %877 = vmatprep.subr.bf16.mxu0 0
        %878 = vmatpush2.bf16.msra.mxu0 0
        %879 = vmatprep.mubr.bf16.mxu0 0
        %880 = vmatmul.mubr.bf16.gmra.mxu0 %v842
        %v881 = vpop.f32.mrf.mxu0
        %v882 = vadd.f32 0.0, %v881
        %v883 = vpop.f32.mrf.mxu0
        %v884 = vpop.f32.mrf.mxu0
        %v885 = vpop.f32.mrf.mxu0
        %886 = vdwg.mxu0
        %v887 = vpack.c.bf16 %v882, %v882
        %888 = vrot.lane.b32.xlu0 %v439, 112
        %v889 = vpop.permute.xlu0 %888
        %890 = vrot.lane.b32.xlu0 %v503, 112
        %v891 = vpop.permute.xlu0 %890
        %v893 = vsel %vm441, %v889, 0
        %v896 = vsel %vm441, %v891, 0
        %898 = vmatprep.subr.bf16.mxu0 0
        %899 = vmatpush1.bf16.xpose.msra.mxu0 0
        %900 = vmatprep.subr.bf16.mxu0 0
        %901 = vmatpush1.bf16.xpose.msra.mxu0 0
        %902 = vmatprep.subr.bf16.mxu0 0
        %903 = vmatpush1.bf16.xpose.msra.mxu0 0
        %904 = vmatprep.subr.bf16.mxu0 0
        %905 = vmatpush1.bf16.xpose.msra.mxu0 0
        %906 = vmatprep.subr.bf16.mxu0 0
        %907 = vmatpush1.bf16.xpose.msra.mxu0 0
        %908 = vmatprep.subr.bf16.mxu0 0
        %909 = vmatpush1.bf16.xpose.msra.mxu0 0
        %910 = vmatprep.subr.bf16.mxu0 0
        %911 = vmatpush1.bf16.xpose.msra.mxu0 0
        %912 = vmatprep.subr.bf16.mxu0 0
        %913 = vmatpush1.bf16.xpose.msra.mxu0 %v896
        %914 = vmatprep.subr.bf16.mxu0 0
        %915 = vmatpush2.bf16.xpose.msra.mxu0 0
        %916 = vmatprep.subr.bf16.mxu0 0
        %917 = vmatpush2.bf16.xpose.msra.mxu0 0
        %918 = vmatprep.subr.bf16.mxu0 0
        %919 = vmatpush2.bf16.xpose.msra.mxu0 0
        %920 = vmatprep.subr.bf16.mxu0 0
        %921 = vmatpush2.bf16.xpose.msra.mxu0 0
        %922 = vmatprep.subr.bf16.mxu0 0
        %923 = vmatpush2.bf16.xpose.msra.mxu0 0
        %924 = vmatprep.subr.bf16.mxu0 0
        %925 = vmatpush2.bf16.xpose.msra.mxu0 0
        %926 = vmatprep.subr.bf16.mxu0 0
        %927 = vmatpush2.bf16.xpose.msra.mxu0 0
        %928 = vmatprep.subr.bf16.mxu0 0
        %929 = vmatpush2.bf16.xpose.msra.mxu0 0
        %930 = vmatprep.mubr.bf16.mxu0 0
        %931 = vmatmul.mubr.bf16.gmra.mxu0 %v893
        %v932 = vpop.f32.mrf.mxu0
        %v933 = vadd.f32 0.0, %v932
        %v934 = vpop.f32.mrf.mxu0
        %v935 = vpop.f32.mrf.mxu0
        %v936 = vpop.f32.mrf.mxu0
        %937 = vdwg.mxu0
        %v938 = vsel %vm488, %v933, -inf
        %939 = vmax.xlane.f32.xlu0 %v938
        %v940 = vpop.xlane.xlu0 %939
        %v941 = vsub.f32 %v933, %v940
        %v942 = vmul.f32 %v941, 1.442695
        %v943 = vpow.pop %v942
        %v944 = vsel %vm488, %v943, 0.0
        %945 = vadd.xlane.f32.xlu0 %v944
        %v946 = vpop.xlane.xlu0 %945
        %v947 = vrcp.pop %v946
        %v948 = vmul.f32 %v943, %v947
        %v949 = vpack.c.bf16 %v948, %v948
        %950 = vrot.lane.b32.xlu0 %v503, 80
        %v951 = vpop.permute.xlu0 %950
        %v953 = vsel %vm488, %v949, 0
        %v956 = vsel %vm509, %v951, 0
        %958 = vmatprep.subr.bf16.mxu0 0
        %959 = vmatpush1.bf16.msra.mxu0 0
        %960 = vmatprep.subr.bf16.mxu0 0
        %961 = vmatpush1.bf16.msra.mxu0 0
        %962 = vmatprep.subr.bf16.mxu0 0
        %963 = vmatpush1.bf16.msra.mxu0 0
        %964 = vmatprep.subr.bf16.mxu0 0
        %965 = vmatpush1.bf16.msra.mxu0 0
        %966 = vmatprep.subr.bf16.mxu0 0
        %967 = vmatpush1.bf16.msra.mxu0 0
        %968 = vmatprep.subr.bf16.mxu0 0
        %969 = vmatpush1.bf16.msra.mxu0 0
        %970 = vmatprep.subr.bf16.mxu0 0
        %971 = vmatpush1.bf16.msra.mxu0 0
        %972 = vmatprep.subr.bf16.mxu0 0
        %973 = vmatpush1.bf16.msra.mxu0 %v956
        %974 = vmatprep.subr.bf16.mxu0 0
        %975 = vmatpush2.bf16.msra.mxu0 0
        %976 = vmatprep.subr.bf16.mxu0 0
        %977 = vmatpush2.bf16.msra.mxu0 0
        %978 = vmatprep.subr.bf16.mxu0 0
        %979 = vmatpush2.bf16.msra.mxu0 0
        %980 = vmatprep.subr.bf16.mxu0 0
        %981 = vmatpush2.bf16.msra.mxu0 0
        %982 = vmatprep.subr.bf16.mxu0 0
        %983 = vmatpush2.bf16.msra.mxu0 0
        %984 = vmatprep.subr.bf16.mxu0 0
        %985 = vmatpush2.bf16.msra.mxu0 0
        %986 = vmatprep.subr.bf16.mxu0 0
        %987 = vmatpush2.bf16.msra.mxu0 0
        %988 = vmatprep.subr.bf16.mxu0 0
        %989 = vmatpush2.bf16.msra.mxu0 0
        %990 = vmatprep.mubr.bf16.mxu0 0
        %991 = vmatmul.mubr.bf16.gmra.mxu0 %v953
        %v992 = vpop.f32.mrf.mxu0
        %v993 = vadd.f32 0.0, %v992
        %v994 = vpop.f32.mrf.mxu0
        %v995 = vpop.f32.mrf.mxu0
        %v996 = vpop.f32.mrf.mxu0
        %997 = vdwg.mxu0
        %v998 = vpack.c.bf16 %v993, %v993
        %999 = vrot.lane.b32.xlu0 %v439, 108
        %v1000 = vpop.permute.xlu0 %999
        %1001 = vrot.lane.b32.xlu0 %v503, 108
        %v1002 = vpop.permute.xlu0 %1001
        %v1004 = vsel %vm441, %v1000, 0
        %v1007 = vsel %vm441, %v1002, 0
        %1009 = vmatprep.subr.bf16.mxu0 0
        %1010 = vmatpush1.bf16.xpose.msra.mxu0 0
        %1011 = vmatprep.subr.bf16.mxu0 0
        %1012 = vmatpush1.bf16.xpose.msra.mxu0 0
        %1013 = vmatprep.subr.bf16.mxu0 0
        %1014 = vmatpush1.bf16.xpose.msra.mxu0 0
        %1015 = vmatprep.subr.bf16.mxu0 0
        %1016 = vmatpush1.bf16.xpose.msra.mxu0 0
        %1017 = vmatprep.subr.bf16.mxu0 0
        %1018 = vmatpush1.bf16.xpose.msra.mxu0 0
        %1019 = vmatprep.subr.bf16.mxu0 0
        %1020 = vmatpush1.bf16.xpose.msra.mxu0 0
        %1021 = vmatprep.subr.bf16.mxu0 0
        %1022 = vmatpush1.bf16.xpose.msra.mxu0 0
        %1023 = vmatprep.subr.bf16.mxu0 0
        %1024 = vmatpush1.bf16.xpose.msra.mxu0 %v1007
        %1025 = vmatprep.subr.bf16.mxu0 0
        %1026 = vmatpush2.bf16.xpose.msra.mxu0 0
        %1027 = vmatprep.subr.bf16.mxu0 0
        %1028 = vmatpush2.bf16.xpose.msra.mxu0 0
        %1029 = vmatprep.subr.bf16.mxu0 0
        %1030 = vmatpush2.bf16.xpose.msra.mxu0 0
        %1031 = vmatprep.subr.bf16.mxu0 0
        %1032 = vmatpush2.bf16.xpose.msra.mxu0 0
        %1033 = vmatprep.subr.bf16.mxu0 0
        %1034 = vmatpush2.bf16.xpose.msra.mxu0 0
        %1035 = vmatprep.subr.bf16.mxu0 0
        %1036 = vmatpush2.bf16.xpose.msra.mxu0 0
        %1037 = vmatprep.subr.bf16.mxu0 0
        %1038 = vmatpush2.bf16.xpose.msra.mxu0 0
        %1039 = vmatprep.subr.bf16.mxu0 0
        %1040 = vmatpush2.bf16.xpose.msra.mxu0 0
        %1041 = vmatprep.mubr.bf16.mxu0 0
        %1042 = vmatmul.mubr.bf16.gmra.mxu0 %v1004
        %v1043 = vpop.f32.mrf.mxu0
        %v1044 = vadd.f32 0.0, %v1043
        %v1045 = vpop.f32.mrf.mxu0
        %v1046 = vpop.f32.mrf.mxu0
        %v1047 = vpop.f32.mrf.mxu0
        %1048 = vdwg.mxu0
        %v1049 = vsel %vm488, %v1044, -inf
        %1050 = vmax.xlane.f32.xlu0 %v1049
        %v1051 = vpop.xlane.xlu0 %1050
        %v1052 = vsub.f32 %v1044, %v1051
        %v1053 = vmul.f32 %v1052, 1.442695
        %v1054 = vpow.pop %v1053
        %v1055 = vsel %vm488, %v1054, 0.0
        %1056 = vadd.xlane.f32.xlu0 %v1055
        %v1057 = vpop.xlane.xlu0 %1056
        %v1058 = vrcp.pop %v1057
        %v1059 = vmul.f32 %v1054, %v1058
        %v1060 = vpack.c.bf16 %v1059, %v1059
        %1061 = vrot.lane.b32.xlu0 %v503, 76
        %v1062 = vpop.permute.xlu0 %1061
        %v1064 = vsel %vm488, %v1060, 0
        %v1067 = vsel %vm509, %v1062, 0
        %1069 = vmatprep.subr.bf16.mxu0 0
        %1070 = vmatpush1.bf16.msra.mxu0 0
        %1071 = vmatprep.subr.bf16.mxu0 0
        %1072 = vmatpush1.bf16.msra.mxu0 0
        %1073 = vmatprep.subr.bf16.mxu0 0
        %1074 = vmatpush1.bf16.msra.mxu0 0
        %1075 = vmatprep.subr.bf16.mxu0 0
        %1076 = vmatpush1.bf16.msra.mxu0 0
        %1077 = vmatprep.subr.bf16.mxu0 0
        %1078 = vmatpush1.bf16.msra.mxu0 0
        %1079 = vmatprep.subr.bf16.mxu0 0
        %1080 = vmatpush1.bf16.msra.mxu0 0
        %1081 = vmatprep.subr.bf16.mxu0 0
        %1082 = vmatpush1.bf16.msra.mxu0 0
        %1083 = vmatprep.subr.bf16.mxu0 0
        %1084 = vmatpush1.bf16.msra.mxu0 %v1067
        %1085 = vmatprep.subr.bf16.mxu0 0
        %1086 = vmatpush2.bf16.msra.mxu0 0
        %1087 = vmatprep.subr.bf16.mxu0 0
        %1088 = vmatpush2.bf16.msra.mxu0 0
        %1089 = vmatprep.subr.bf16.mxu0 0
        %1090 = vmatpush2.bf16.msra.mxu0 0
        %1091 = vmatprep.subr.bf16.mxu0 0
        %1092 = vmatpush2.bf16.msra.mxu0 0
        %1093 = vmatprep.subr.bf16.mxu0 0
        %1094 = vmatpush2.bf16.msra.mxu0 0
        %1095 = vmatprep.subr.bf16.mxu0 0
        %1096 = vmatpush2.bf16.msra.mxu0 0
        %1097 = vmatprep.subr.bf16.mxu0 0
        %1098 = vmatpush2.bf16.msra.mxu0 0
        %1099 = vmatprep.subr.bf16.mxu0 0
        %1100 = vmatpush2.bf16.msra.mxu0 0
        %1101 = vmatprep.mubr.bf16.mxu0 0
        %1102 = vmatmul.mubr.bf16.gmra.mxu0 %v1064
        %v1103 = vpop.f32.mrf.mxu0
        %v1104 = vadd.f32 0.0, %v1103
        %v1105 = vpop.f32.mrf.mxu0
        %v1106 = vpop.f32.mrf.mxu0
        %v1107 = vpop.f32.mrf.mxu0
        %1108 = vdwg.mxu0
        %v1109 = vpack.c.bf16 %v1104, %v1104
        %1110 = vrot.lane.b32.xlu0 %v439, 104
        %v1111 = vpop.permute.xlu0 %1110
        %1112 = vrot.lane.b32.xlu0 %v503, 104
        %v1113 = vpop.permute.xlu0 %1112
        %v1115 = vsel %vm441, %v1111, 0
        %v1118 = vsel %vm441, %v1113, 0
        %1120 = vmatprep.subr.bf16.mxu0 0
        %1121 = vmatpush1.bf16.xpose.msra.mxu0 0
        %1122 = vmatprep.subr.bf16.mxu0 0
        %1123 = vmatpush1.bf16.xpose.msra.mxu0 0
        %1124 = vmatprep.subr.bf16.mxu0 0
        %1125 = vmatpush1.bf16.xpose.msra.mxu0 0
        %1126 = vmatprep.subr.bf16.mxu0 0
        %1127 = vmatpush1.bf16.xpose.msra.mxu0 0
        %1128 = vmatprep.subr.bf16.mxu0 0
        %1129 = vmatpush1.bf16.xpose.msra.mxu0 0
        %1130 = vmatprep.subr.bf16.mxu0 0
        %1131 = vmatpush1.bf16.xpose.msra.mxu0 0
        %1132 = vmatprep.subr.bf16.mxu0 0
        %1133 = vmatpush1.bf16.xpose.msra.mxu0 0
        %1134 = vmatprep.subr.bf16.mxu0 0
        %1135 = vmatpush1.bf16.xpose.msra.mxu0 %v1118
        %1136 = vmatprep.subr.bf16.mxu0 0
        %1137 = vmatpush2.bf16.xpose.msra.mxu0 0
        %1138 = vmatprep.subr.bf16.mxu0 0
        %1139 = vmatpush2.bf16.xpose.msra.mxu0 0
        %1140 = vmatprep.subr.bf16.mxu0 0
        %1141 = vmatpush2.bf16.xpose.msra.mxu0 0
        %1142 = vmatprep.subr.bf16.mxu0 0
        %1143 = vmatpush2.bf16.xpose.msra.mxu0 0
        %1144 = vmatprep.subr.bf16.mxu0 0
        %1145 = vmatpush2.bf16.xpose.msra.mxu0 0
        %1146 = vmatprep.subr.bf16.mxu0 0
        %1147 = vmatpush2.bf16.xpose.msra.mxu0 0
        %1148 = vmatprep.subr.bf16.mxu0 0
        %1149 = vmatpush2.bf16.xpose.msra.mxu0 0
        %1150 = vmatprep.subr.bf16.mxu0 0
        %1151 = vmatpush2.bf16.xpose.msra.mxu0 0
        %1152 = vmatprep.mubr.bf16.mxu0 0
        %1153 = vmatmul.mubr.bf16.gmra.mxu0 %v1115
        %v1154 = vpop.f32.mrf.mxu0
        %v1155 = vadd.f32 0.0, %v1154
        %v1156 = vpop.f32.mrf.mxu0
        %v1157 = vpop.f32.mrf.mxu0
        %v1158 = vpop.f32.mrf.mxu0
        %1159 = vdwg.mxu0
        %v1160 = vsel %vm488, %v1155, -inf
        %1161 = vmax.xlane.f32.xlu0 %v1160
        %v1162 = vpop.xlane.xlu0 %1161
        %v1163 = vsub.f32 %v1155, %v1162
        %v1164 = vmul.f32 %v1163, 1.442695
        %v1165 = vpow.pop %v1164
        %v1166 = vsel %vm488, %v1165, 0.0
        %1167 = vadd.xlane.f32.xlu0 %v1166
        %v1168 = vpop.xlane.xlu0 %1167
        %v1169 = vrcp.pop %v1168
        %v1170 = vmul.f32 %v1165, %v1169
        %v1171 = vpack.c.bf16 %v1170, %v1170
        %1172 = vrot.lane.b32.xlu0 %v503, 72
        %v1173 = vpop.permute.xlu0 %1172
        %v1175 = vsel %vm488, %v1171, 0
        %v1178 = vsel %vm509, %v1173, 0
        %1180 = vmatprep.subr.bf16.mxu0 0
        %1181 = vmatpush1.bf16.msra.mxu0 0
        %1182 = vmatprep.subr.bf16.mxu0 0
        %1183 = vmatpush1.bf16.msra.mxu0 0
        %1184 = vmatprep.subr.bf16.mxu0 0
        %1185 = vmatpush1.bf16.msra.mxu0 0
        %1186 = vmatprep.subr.bf16.mxu0 0
        %1187 = vmatpush1.bf16.msra.mxu0 0
        %1188 = vmatprep.subr.bf16.mxu0 0
        %1189 = vmatpush1.bf16.msra.mxu0 0
        %1190 = vmatprep.subr.bf16.mxu0 0
        %1191 = vmatpush1.bf16.msra.mxu0 0
        %1192 = vmatprep.subr.bf16.mxu0 0
        %1193 = vmatpush1.bf16.msra.mxu0 0
        %1194 = vmatprep.subr.bf16.mxu0 0
        %1195 = vmatpush1.bf16.msra.mxu0 %v1178
        %1196 = vmatprep.subr.bf16.mxu0 0
        %1197 = vmatpush2.bf16.msra.mxu0 0
        %1198 = vmatprep.subr.bf16.mxu0 0
        %1199 = vmatpush2.bf16.msra.mxu0 0
        %1200 = vmatprep.subr.bf16.mxu0 0
        %1201 = vmatpush2.bf16.msra.mxu0 0
        %1202 = vmatprep.subr.bf16.mxu0 0
        %1203 = vmatpush2.bf16.msra.mxu0 0
        %1204 = vmatprep.subr.bf16.mxu0 0
        %1205 = vmatpush2.bf16.msra.mxu0 0
        %1206 = vmatprep.subr.bf16.mxu0 0
        %1207 = vmatpush2.bf16.msra.mxu0 0
        %1208 = vmatprep.subr.bf16.mxu0 0
        %1209 = vmatpush2.bf16.msra.mxu0 0
        %1210 = vmatprep.subr.bf16.mxu0 0
        %1211 = vmatpush2.bf16.msra.mxu0 0
        %1212 = vmatprep.mubr.bf16.mxu0 0
        %1213 = vmatmul.mubr.bf16.gmra.mxu0 %v1175
        %v1214 = vpop.f32.mrf.mxu0
        %v1215 = vadd.f32 0.0, %v1214
        %v1216 = vpop.f32.mrf.mxu0
        %v1217 = vpop.f32.mrf.mxu0
        %v1218 = vpop.f32.mrf.mxu0
        %1219 = vdwg.mxu0
        %v1220 = vpack.c.bf16 %v1215, %v1215
        %1221 = vrot.lane.b32.xlu0 %v439, 100
        %v1222 = vpop.permute.xlu0 %1221
        %1223 = vrot.lane.b32.xlu0 %v503, 100
        %v1224 = vpop.permute.xlu0 %1223
        %v1226 = vsel %vm441, %v1222, 0
        %v1229 = vsel %vm441, %v1224, 0
        %1231 = vmatprep.subr.bf16.mxu0 0
        %1232 = vmatpush1.bf16.xpose.msra.mxu0 0
        %1233 = vmatprep.subr.bf16.mxu0 0
        %1234 = vmatpush1.bf16.xpose.msra.mxu0 0
        %1235 = vmatprep.subr.bf16.mxu0 0
        %1236 = vmatpush1.bf16.xpose.msra.mxu0 0
        %1237 = vmatprep.subr.bf16.mxu0 0
        %1238 = vmatpush1.bf16.xpose.msra.mxu0 0
        %1239 = vmatprep.subr.bf16.mxu0 0
        %1240 = vmatpush1.bf16.xpose.msra.mxu0 0
        %1241 = vmatprep.subr.bf16.mxu0 0
        %1242 = vmatpush1.bf16.xpose.msra.mxu0 0
        %1243 = vmatprep.subr.bf16.mxu0 0
        %1244 = vmatpush1.bf16.xpose.msra.mxu0 0
        %1245 = vmatprep.subr.bf16.mxu0 0
        %1246 = vmatpush1.bf16.xpose.msra.mxu0 %v1229
        %1247 = vmatprep.subr.bf16.mxu0 0
        %1248 = vmatpush2.bf16.xpose.msra.mxu0 0
        %1249 = vmatprep.subr.bf16.mxu0 0
        %1250 = vmatpush2.bf16.xpose.msra.mxu0 0
        %1251 = vmatprep.subr.bf16.mxu0 0
        %1252 = vmatpush2.bf16.xpose.msra.mxu0 0
        %1253 = vmatprep.subr.bf16.mxu0 0
        %1254 = vmatpush2.bf16.xpose.msra.mxu0 0
        %1255 = vmatprep.subr.bf16.mxu0 0
        %1256 = vmatpush2.bf16.xpose.msra.mxu0 0
        %1257 = vmatprep.subr.bf16.mxu0 0
        %1258 = vmatpush2.bf16.xpose.msra.mxu0 0
        %1259 = vmatprep.subr.bf16.mxu0 0
        %1260 = vmatpush2.bf16.xpose.msra.mxu0 0
        %1261 = vmatprep.subr.bf16.mxu0 0
        %1262 = vmatpush2.bf16.xpose.msra.mxu0 0
        %1263 = vmatprep.mubr.bf16.mxu0 0
        %1264 = vmatmul.mubr.bf16.gmra.mxu0 %v1226
        %v1265 = vpop.f32.mrf.mxu0
        %v1266 = vadd.f32 0.0, %v1265
        %v1267 = vpop.f32.mrf.mxu0
        %v1268 = vpop.f32.mrf.mxu0
        %v1269 = vpop.f32.mrf.mxu0
        %1270 = vdwg.mxu0
        %v1271 = vsel %vm488, %v1266, -inf
        %1272 = vmax.xlane.f32.xlu0 %v1271
        %v1273 = vpop.xlane.xlu0 %1272
        %v1274 = vsub.f32 %v1266, %v1273
        %v1275 = vmul.f32 %v1274, 1.442695
        %v1276 = vpow.pop %v1275
        %v1277 = vsel %vm488, %v1276, 0.0
        %1278 = vadd.xlane.f32.xlu0 %v1277
        %v1279 = vpop.xlane.xlu0 %1278
        %v1280 = vrcp.pop %v1279
        %v1281 = vmul.f32 %v1276, %v1280
        %v1282 = vpack.c.bf16 %v1281, %v1281
        %1283 = vrot.lane.b32.xlu0 %v503, 68
        %v1284 = vpop.permute.xlu0 %1283
        %v1286 = vsel %vm488, %v1282, 0
        %v1289 = vsel %vm509, %v1284, 0
        %1291 = vmatprep.subr.bf16.mxu0 0
        %1292 = vmatpush1.bf16.msra.mxu0 0
        %1293 = vmatprep.subr.bf16.mxu0 0
        %1294 = vmatpush1.bf16.msra.mxu0 0
        %1295 = vmatprep.subr.bf16.mxu0 0
        %1296 = vmatpush1.bf16.msra.mxu0 0
        %1297 = vmatprep.subr.bf16.mxu0 0
        %1298 = vmatpush1.bf16.msra.mxu0 0
        %1299 = vmatprep.subr.bf16.mxu0 0
        %1300 = vmatpush1.bf16.msra.mxu0 0
        %1301 = vmatprep.subr.bf16.mxu0 0
        %1302 = vmatpush1.bf16.msra.mxu0 0
        %1303 = vmatprep.subr.bf16.mxu0 0
        %1304 = vmatpush1.bf16.msra.mxu0 0
        %1305 = vmatprep.subr.bf16.mxu0 0
        %1306 = vmatpush1.bf16.msra.mxu0 %v1289
        %1307 = vmatprep.subr.bf16.mxu0 0
        %1308 = vmatpush2.bf16.msra.mxu0 0
        %1309 = vmatprep.subr.bf16.mxu0 0
        %1310 = vmatpush2.bf16.msra.mxu0 0
        %1311 = vmatprep.subr.bf16.mxu0 0
        %1312 = vmatpush2.bf16.msra.mxu0 0
        %1313 = vmatprep.subr.bf16.mxu0 0
        %1314 = vmatpush2.bf16.msra.mxu0 0
        %1315 = vmatprep.subr.bf16.mxu0 0
        %1316 = vmatpush2.bf16.msra.mxu0 0
        %1317 = vmatprep.subr.bf16.mxu0 0
        %1318 = vmatpush2.bf16.msra.mxu0 0
        %1319 = vmatprep.subr.bf16.mxu0 0
        %1320 = vmatpush2.bf16.msra.mxu0 0
        %1321 = vmatprep.subr.bf16.mxu0 0
        %1322 = vmatpush2.bf16.msra.mxu0 0
        %1323 = vmatprep.mubr.bf16.mxu0 0
        %1324 = vmatmul.mubr.bf16.gmra.mxu0 %v1286
        %v1325 = vpop.f32.mrf.mxu0
        %v1326 = vadd.f32 0.0, %v1325
        %v1327 = vpop.f32.mrf.mxu0
        %v1328 = vpop.f32.mrf.mxu0
        %v1329 = vpop.f32.mrf.mxu0
        %1330 = vdwg.mxu0
        %v1331 = vpack.c.bf16 %v1326, %v1326
        %1333 = vrot.lane.b32.xlu0 %v665, 4
        %v1334 = vpop.permute.xlu0 %1333
        %1336 = vrot.lane.b32.xlu0 %v776, 8
        %v1337 = vpop.permute.xlu0 %1336
        %1339 = vrot.lane.b32.xlu0 %v887, 12
        %v1340 = vpop.permute.xlu0 %1339
        %1342 = vrot.lane.b32.xlu0 %v998, 16
        %v1343 = vpop.permute.xlu0 %1342
        %1345 = vrot.lane.b32.xlu0 %v1109, 20
        %v1346 = vpop.permute.xlu0 %1345
        %1348 = vrot.lane.b32.xlu0 %v1220, 24
        %v1349 = vpop.permute.xlu0 %1348
        %1351 = vrot.lane.b32.xlu0 %v1331, 28
        %v1352 = vpop.permute.xlu0 %1351
        %v1355 = vsel %vm441, %v553, %v1334
        %v1357 = vsel %vm488, %v1355, %v1337
        %vm1358 = vcmask 97280
        %v1360 = vsel %vm1358, %v1357, %v1340
        %vm1361 = vcmask 130048
        %v1363 = vsel %vm1361, %v1360, %v1343
        %vm1364 = vcmask 162816
        %v1366 = vsel %vm1364, %v1363, %v1346
        %vm1367 = vcmask 195584
        %v1369 = vsel %vm1367, %v1366, %v1349
        %vm1370 = vcmask 228352
        %v1372 = vsel %vm1370, %v1369, %v1352
        %v1373 = vld [vmem:[#allocation8] sm:$0xf]
        %v1374 = vld [vmem:[#allocation8 + $0x4] sm:$0xf]
        %v1375 = vld [vmem:[#allocation8 + $0x8] sm:$0xf]
        %v1376 = vld [vmem:[#allocation8 + $0xc] sm:$0xf]
        %v1377 = vld [vmem:[%s4] sm:$0x1]
        %v1379 = vlaneseq
        %v1380 = vshrl.u32 %v1379, 7
        %v1381 = vsub.s32 0, %v1380
        %v1382 = vrot.slane %v1377, %v1381
        %v1388 = vunpack.c.l.b16 %v1373
        %v1389 = vunpack.c.l.b16 %v1374
        %v1390 = vunpack.c.l.b16 %v1375
        %v1391 = vunpack.c.l.b16 %v1376
        %v1392 = vpack.c.b16 %v1389, %v1388
        %v1393 = vpack.c.b16 %v1391, %v1390
        %v1396 = vsel %vm394, %v1372, 0
        %1398 = vmatprep.subr.bf16.mxu0 0
        %1399 = vmatpush1.bf16.msra.mxu0 0
        %1400 = vmatprep.subr.bf16.mxu0 0
        %1401 = vmatpush1.bf16.msra.mxu0 0
        %1402 = vmatprep.subr.bf16.mxu0 0
        %1403 = vmatpush1.bf16.msra.mxu0 0
        %1404 = vmatprep.subr.bf16.mxu0 0
        %1405 = vmatpush1.bf16.msra.mxu0 0
        %1406 = vmatprep.subr.bf16.mxu0 0
        %1407 = vmatpush1.bf16.msra.mxu0 0
        %1408 = vmatprep.subr.bf16.mxu0 0
        %1409 = vmatpush1.bf16.msra.mxu0 0
        %1410 = vmatprep.subr.bf16.mxu0 0
        %1411 = vmatpush1.bf16.msra.mxu0 %v1393
        %1412 = vmatprep.subr.bf16.mxu0 0
        %1413 = vmatpush1.bf16.msra.mxu0 %v1392
        %1414 = vmatprep.subr.bf16.mxu0 0
        %1415 = vmatpush2.bf16.msra.mxu0 0
        %1416 = vmatprep.subr.bf16.mxu0 0
        %1417 = vmatpush2.bf16.msra.mxu0 0
        %1418 = vmatprep.subr.bf16.mxu0 0
        %1419 = vmatpush2.bf16.msra.mxu0 0
        %1420 = vmatprep.subr.bf16.mxu0 0
        %1421 = vmatpush2.bf16.msra.mxu0 0
        %1422 = vmatprep.subr.bf16.mxu0 0
        %1423 = vmatpush2.bf16.msra.mxu0 0
        %1424 = vmatprep.subr.bf16.mxu0 0
        %1425 = vmatpush2.bf16.msra.mxu0 0
        %1426 = vmatprep.subr.bf16.mxu0 0
        %1427 = vmatpush2.bf16.msra.mxu0 0
        %1428 = vmatprep.subr.bf16.mxu0 0
        %1429 = vmatpush2.bf16.msra.mxu0 0
        %1430 = vmatprep.mubr.bf16.mxu0 0
        %1431 = vmatmul.mubr.bf16.gmra.mxu0 %v1396
        %v1432 = vpop.f32.mrf.mxu0
        %v1433 = vadd.f32 %v1382, %v1432
        %v1434 = vpop.f32.mrf.mxu0
        %v1435 = vpop.f32.mrf.mxu0
        %v1436 = vpop.f32.mrf.mxu0
        %1437 = vdwg.mxu0
        %1438 = vst.msk [vmem:[%s282] sm:$0xff] %vm394, %v1433
        %s1439 = sand.u32 %s155, 1
        %s1440 = scalar_lea.sflag [#allocation5], %s1439
        %s1441 = sand.u32 %s155, 1
        %s1442 = smul.addr %s1441, 8
        %s1443 = scalar_lea.vmem [#allocation9], %s1442
        // Predicated region
        $region57: #{tpu_custom_call.1} parent=39 // pred_check
          %p1444 = pneg %p165
        $region58: #{tpu_custom_call.1} parent=39 // pred_check_branch
          %1446 = sbr.rel (%p1444) target = $region60
        $region59: #{tpu_custom_call.1} parent=39 // pred_region
          %s1448 = ssub.s32 128, 128
          %1449 = vsyncadd %s1440, %s1448
          %s1450 = sadd.s32 %s28, %s27
          %s1451 = smul.addr %s1450, 128
          %s1452 = scalar_lea.hbm %s5, %s1451
          %s1454 = sshll.u32 %s1443, 4
          %s1455 = int_to_ptr.vmem [resolvable:$true] %s1454
          %1457 = dma.vmem_to_hbm [thread:$0]  %s1455, 128, %s1452, %s1440
        $region60: #{tpu_custom_call.1} parent=39 // pred_fallthru
          _
      $region40: #{tpu_custom_call.1} parent=5 // pred_fallthru
        _
      %p1458 = scmp.le.s32.totalorder 2, %s18
      // Predicated region
      $region61: #{tpu_custom_call.1} parent=5 // pred_check
        %p1459 = pneg %p1458
      $region62: #{tpu_custom_call.1} parent=5 // pred_check_branch
        %1461 = sbr.rel (%p1459) target = $region64
      $region63: #{tpu_custom_call.1} parent=5 // pred_region
        %s1462 = ssub.s32 %s18, 2
        // Predicated region
        $region65: #{tpu_custom_call.1} parent=63 // pred_check
          %p1463 = pneg %p171
        $region66: #{tpu_custom_call.1} parent=63 // pred_check_branch
          %1465 = sbr.rel (%p1463) target = $region68
        $region67: #{tpu_custom_call.1} parent=63 // pred_region
          %s1466 = sand.u32 %s156, 1
          %s1467 = scalar_lea.sflag [#allocation5], %s1466
          %s1468 = sand.u32 %s156, 1
          %s1469 = smul.addr %s1468, 8
          %s1470 = scalar_lea.vmem [#allocation9], %s1469
          %1471 = dma.done %s1467, 128
        $region68: #{tpu_custom_call.1} parent=63 // pred_fallthru
          _
      $region64: #{tpu_custom_call.1} parent=5 // pred_fallthru
        _
    $region6: #{tpu_custom_call.1} parent=1 // loop_footer
      %s22 = sadd.s32 1, %s18
    $region7: #{tpu_custom_call.1} parent=1 // loop_footer_branch
      %17 = sbr.rel target = $region3
    $region8: #{tpu_custom_call.1} parent=1 // loop_exit
      _
    %1472 = vsyncpa [#allocation4], 1
    %s1473 = scalar_lea.sflag [#allocation4], 1
    %1474 = vsyncpa %s1473, 1
    %1475 = vsyncpa [#allocation7], 1
    %1476 = vsyncpa [#allocation5], 1
    %s1477 = scalar_lea.sflag [#allocation5], 1
    %1478 = vsyncpa %s1477, 1

</llo_original>
